<compile_context>
chip_gen: v6e
topology: v6e:2x2x1
jax: 0.10.0
libtpu: 0.0.40
codegen_flags: <defaults>
</compile_context>

<pallas_src>
import functools

import jax
import jax.numpy as jnp
from jax.experimental import pallas as pl
from jax.experimental.pallas import tpu as pltpu

_CPAD = 128  # lane-dense output channel padding


# ----------------------------------------------------------------------------
# Pallas kernel: fused (im2col-matmul) conv + bias + PReLU
# ----------------------------------------------------------------------------
def _conv_mm_prelu_kernel(x_ref, w_ref, b_ref, a_ref, o_ref):
    # x_ref: [tm, K]    bf16 (im2col patches tile)
    # w_ref: [K, 128]   bf16 (flattened conv weights, tap-major then Cin, Cout padded to 128)
    # b_ref: [1, 128]   f32  (bias, zero-padded)
    # a_ref: [1, 128]   f32  (PReLU per-channel slope, zero-padded)
    # o_ref: [tm, 128]  bf16
    y = jnp.dot(x_ref[...], w_ref[...], preferred_element_type=jnp.float32)
    y = y + b_ref[...]
    o_ref[...] = jnp.where(y >= 0.0, y, a_ref[...] * y).astype(o_ref.dtype)


def _conv_mm_prelu(patches, w_mat, bias2d, alpha2d, *, tm=512):
    """patches: [M, K] bf16, w_mat: [K, 128] bf16, bias2d/alpha2d: [1, 128] f32 -> [M, 128] bf16."""
    M, K = patches.shape
    CP = w_mat.shape[1]
    # Full-array block when M is small (block == full dim is always legal); otherwise 512-row
    # tiles (multiple of 128 and 256) with a ragged last block handled by Pallas.
    bm = min(tm, M)
    grid = (pl.cdiv(M, bm),)

    return pl.pallas_call(
        _conv_mm_prelu_kernel,
        out_shape=jax.ShapeDtypeStruct((M, CP), jnp.bfloat16),
        grid=grid,
        in_specs=[
            pl.BlockSpec((bm, K), lambda i: (i, 0)),
            pl.BlockSpec((K, CP), lambda i: (0, 0)),   # weights resident across the grid
            pl.BlockSpec((1, CP), lambda i: (0, 0)),
            pl.BlockSpec((1, CP), lambda i: (0, 0)),
        ],
        out_specs=pl.BlockSpec((bm, CP), lambda i: (i, 0)),
        compiler_params=pltpu.CompilerParams(
            dimension_semantics=("parallel",),       # v7x: shards M tiles across both TCs
            vmem_limit_bytes=32 * 1024 * 1024,       # explicit budget; ~3 MiB actually used
        ),
    )(patches, w_mat, bias2d, alpha2d)


# ----------------------------------------------------------------------------
# JAX glue: im2col patch extraction (data rearrangement only, bf16)
# ----------------------------------------------------------------------------
def _conv_prelu_layer(x_nhwc, params, cin, stride):
    """One convrelu(Cin, Cout, 3, stride, 1) layer.

    x_nhwc: [N, H, W, C>=cin] (only the first `cin` channels are real data).
    Returns [N, Ho, Wo, 128] bf16 with channels >= Cout equal to zero.
    """
    weight, bias, alpha = params  # weight: [Cout, Cin, 3, 3] (PyTorch convention)
    N, H, W, _ = x_nhwc.shape
    Cout = weight.shape[0]
    Ho = (H - 1) // stride + 1
    Wo = (W - 1) // stride + 1
    K = 9 * cin
    Kp = ((K + 7) // 8) * 8  # sublane-align the contraction dim (only matters for Cin=1 -> 16)

    xp = jnp.pad(x_nhwc.astype(jnp.bfloat16), ((0, 0), (1, 1), (1, 1), (0, 0)))
    taps = []
    for kh in range(3):
        for kw in range(3):
            taps.append(
                jax.lax.slice(
                    xp,
                    (0, kh, kw, 0),
                    (N, kh + stride * (Ho - 1) + 1, kw + stride * (Wo - 1) + 1, cin),
                    (1, stride, stride, 1),
                )
            )
    if Kp > K:
        taps.append(jnp.zeros((N, Ho, Wo, Kp - K), jnp.bfloat16))
    # tap-major then channel ordering, matching the weight reshape below
    patches = jnp.concatenate(taps, axis=-1).reshape(N * Ho * Wo, Kp)

    # [Cout, Cin, 3, 3] -> [3, 3, Cin, Cout] -> [9*Cin, Cout] -> pad to [Kp, 128], bf16
    w = jnp.transpose(weight, (2, 3, 1, 0)).reshape(K, Cout)
    w = jnp.pad(w, ((0, Kp - K), (0, _CPAD - Cout))).astype(jnp.bfloat16)
    b = jnp.pad(bias, (0, _CPAD - Cout)).reshape(1, _CPAD).astype(jnp.float32)
    a = jnp.pad(alpha, (0, _CPAD - Cout)).reshape(1, _CPAD).astype(jnp.float32)

    y = _conv_mm_prelu(patches, w, b, a)
    return y.reshape(N, Ho, Wo, _CPAD)


# ----------------------------------------------------------------------------
# Encoder: parameter init + forward
# ----------------------------------------------------------------------------
# (Cin, Cout, stride) for the 8 conv+PReLU layers, grouped 2 per pyramid level.
_LAYER_CFG = [
    (1, 32, 2), (32, 32, 1),     # pyramid1
    (32, 48, 2), (48, 48, 1),    # pyramid2
    (48, 72, 2), (72, 72, 1),    # pyramid3
    (72, 96, 2), (96, 96, 1),    # pyramid4
]


def init_encoder_params(key):
    params = []
    for (cin, cout, _) in _LAYER_CFG:
        key, kw, kb = jax.random.split(key, 3)
        fan_in = cin * 9
        w = jax.random.normal(kw, (cout, cin, 3, 3), jnp.float32) / jnp.sqrt(fan_in)
        b = 0.01 * jax.random.normal(kb, (cout,), jnp.float32)
        a = jnp.full((cout,), 0.25, jnp.float32)  # PReLU default init
        params.append((w, b, a))
    return params


@jax.jit
def encoder_forward(img_nchw, params):
    """img_nchw: [N, 1, H, W] f32 -> (f1, f2, f3, f4) in NCHW f32, like the PyTorch module."""
    x = jnp.transpose(img_nchw, (0, 2, 3, 1))  # NCHW -> NHWC, 1 channel
    feats = []
    for lvl in range(4):
        cin0, _, s0 = _LAYER_CFG[2 * lvl]
        cin1, cout1, s1 = _LAYER_CFG[2 * lvl + 1]
        x = _conv_prelu_layer(x, params[2 * lvl], cin0, s0)
        x = _conv_prelu_layer(x, params[2 * lvl + 1], cin1, s1)
        # trim the lane padding and convert to PyTorch-facing NCHW f32 only for returned features
        feats.append(jnp.transpose(x[..., :cout1], (0, 3, 1, 2)).astype(jnp.float32))
    return tuple(feats)


if __name__ == "__main__":
    key = jax.random.PRNGKey(0)
    key, kimg = jax.random.split(key)
    img = jax.random.normal(kimg, (2, 1, 16, 16), jnp.float32)  # N=2, C=1, 16x16

    params = init_encoder_params(key)
    f1, f2, f3, f4 = encoder_forward(img, params)
    jax.block_until_ready((f1, f2, f3, f4))

    assert f1.shape == (2, 32, 8, 8), f1.shape
    assert f2.shape == (2, 48, 4, 4), f2.shape
    assert f3.shape == (2, 72, 2, 2), f3.shape
    assert f4.shape == (2, 96, 1, 1), f4.shape
    assert f1.dtype == jnp.float32
    print("KERNEL_OK")
</pallas_src>

<mosaic_0001>
module attributes {stable_mosaic.version = 11 : i64} {
  func.func @_conv_mm_prelu_kernel(%arg0: i32, %arg1: memref<128x16xbf16, #tpu.memory_space<vmem>>, %arg2: memref<16x128xbf16, #tpu.memory_space<vmem>>, %arg3: memref<1x128xf32, #tpu.memory_space<vmem>>, %arg4: memref<1x128xf32, #tpu.memory_space<vmem>>, %arg5: memref<128x128xbf16, #tpu.memory_space<vmem>>) attributes {dimension_semantics = [#tpu.dimension_semantics<parallel>], iteration_bounds = array<i64: 1>, scalar_prefetch = 0 : i64, scratch_operands = 0 : i64, tpu.core_type = #tpu.core_type<tc>, window_params = [{transform_indices = @transform_0, window_bounds = array<i64: 128, 16>}, {pipeline_mode = #tpu.pipeline_mode<synchronous>, transform_indices = @transform_1, window_bounds = array<i64: 16, 128>}, {pipeline_mode = #tpu.pipeline_mode<synchronous>, transform_indices = @transform_2, window_bounds = array<i64: 1, 128>}, {pipeline_mode = #tpu.pipeline_mode<synchronous>, transform_indices = @transform_3, window_bounds = array<i64: 1, 128>}, {transform_indices = @transform_4, window_bounds = array<i64: 128, 128>}]} {
    %c0 = arith.constant 0 : index
    %c0_0 = arith.constant 0 : index
    %0 = vector.load %arg1[%c0, %c0_0] : memref<128x16xbf16, #tpu.memory_space<vmem>>, vector<128x16xbf16>
    %c0_1 = arith.constant 0 : index
    %c0_2 = arith.constant 0 : index
    %1 = vector.load %arg2[%c0_1, %c0_2] : memref<16x128xbf16, #tpu.memory_space<vmem>>, vector<16x128xbf16>
    %cst = arith.constant dense<0.000000e+00> : vector<128x128xf32>
    %2 = tpu.matmul %0, %1, %cst {dimension_numbers = #tpu.dot_dimension_numbers<[1], [0], [0], [1], [0, 0, 1, 1], [], []>} : vector<128x16xbf16>, vector<16x128xbf16>, vector<128x128xf32> -> vector<128x128xf32>
    %c0_3 = arith.constant 0 : index
    %c0_4 = arith.constant 0 : index
    %3 = vector.load %arg3[%c0_3, %c0_4] : memref<1x128xf32, #tpu.memory_space<vmem>>, vector<1x128xf32>
    %4 = vector.broadcast %3 : vector<1x128xf32> to vector<128x128xf32>
    %5 = arith.addf %2, %4 : vector<128x128xf32>
    %cst_5 = arith.constant 0.000000e+00 : f32
    %6 = vector.broadcast %cst_5 : f32 to vector<128x128xf32>
    %7 = arith.cmpf oge, %5, %6 : vector<128x128xf32>
    %c0_6 = arith.constant 0 : index
    %c0_7 = arith.constant 0 : index
    %8 = vector.load %arg4[%c0_6, %c0_7] : memref<1x128xf32, #tpu.memory_space<vmem>>, vector<1x128xf32>
    %9 = vector.broadcast %8 : vector<1x128xf32> to vector<128x128xf32>
    %10 = arith.mulf %9, %5 : vector<128x128xf32>
    %11 = arith.select %7, %5, %10 : vector<128x128xi1>, vector<128x128xf32>
    %12 = arith.truncf %11 : vector<128x128xf32> to vector<128x128xbf16>
    %c0_8 = arith.constant 0 : index
    %c0_9 = arith.constant 0 : index
    %13 = vector.load %arg5[%c0_8, %c0_9] : memref<128x128xbf16, #tpu.memory_space<vmem>>, vector<128x128xbf16>
    tpu.vector_store %arg5[%c0_8, %c0_9], %12 {strides = array<i32>} : memref<128x128xbf16, #tpu.memory_space<vmem>>, vector<128x128xbf16>,
    return
  }
  func.func @transform_0(%arg0: i32) -> (i32, i32) {
    %c0_i32 = arith.constant 0 : i32
    %c0_i32_0 = arith.constant 0 : i32
    return %arg0, %c0_i32 : i32, i32
  }
  func.func @transform_1(%arg0: i32) -> (i32, i32) {
    %c0_i32 = arith.constant 0 : i32
    %c0_i32_0 = arith.constant 0 : i32
    %c0_i32_1 = arith.constant 0 : i32
    return %c0_i32, %c0_i32_0 : i32, i32
  }
  func.func @transform_2(%arg0: i32) -> (i32, i32) {
    %c0_i32 = arith.constant 0 : i32
    %c0_i32_0 = arith.constant 0 : i32
    %c0_i32_1 = arith.constant 0 : i32
    return %c0_i32, %c0_i32_0 : i32, i32
  }
  func.func @transform_3(%arg0: i32) -> (i32, i32) {
    %c0_i32 = arith.constant 0 : i32
    %c0_i32_0 = arith.constant 0 : i32
    %c0_i32_1 = arith.constant 0 : i32
    return %c0_i32, %c0_i32_0 : i32, i32
  }
  func.func @transform_4(%arg0: i32) -> (i32, i32) {
    %c0_i32 = arith.constant 0 : i32
    %c0_i32_0 = arith.constant 0 : i32
    return %arg0, %c0_i32 : i32, i32
  }
}

module attributes {stable_mosaic.version = 11 : i64} {
  func.func @_conv_mm_prelu_kernel(%arg0: i32, %arg1: memref<128x288xbf16, #tpu.memory_space<vmem>>, %arg2: memref<288x128xbf16, #tpu.memory_space<vmem>>, %arg3: memref<1x128xf32, #tpu.memory_space<vmem>>, %arg4: memref<1x128xf32, #tpu.memory_space<vmem>>, %arg5: memref<128x128xbf16, #tpu.memory_space<vmem>>) attributes {dimension_semantics = [#tpu.dimension_semantics<parallel>], iteration_bounds = array<i64: 1>, scalar_prefetch = 0 : i64, scratch_operands = 0 : i64, tpu.core_type = #tpu.core_type<tc>, window_params = [{transform_indices = @transform_0, window_bounds = array<i64: 128, 288>}, {pipeline_mode = #tpu.pipeline_mode<synchronous>, transform_indices = @transform_1, window_bounds = array<i64: 288, 128>}, {pipeline_mode = #tpu.pipeline_mode<synchronous>, transform_indices = @transform_2, window_bounds = array<i64: 1, 128>}, {pipeline_mode = #tpu.pipeline_mode<synchronous>, transform_indices = @transform_3, window_bounds = array<i64: 1, 128>}, {transform_indices = @transform_4, window_bounds = array<i64: 128, 128>}]} {
    %c0 = arith.constant 0 : index
    %c0_0 = arith.constant 0 : index
    %0 = vector.load %arg1[%c0, %c0_0] : memref<128x288xbf16, #tpu.memory_space<vmem>>, vector<128x288xbf16>
    %c0_1 = arith.constant 0 : index
    %c0_2 = arith.constant 0 : index
    %1 = vector.load %arg2[%c0_1, %c0_2] : memref<288x128xbf16, #tpu.memory_space<vmem>>, vector<288x128xbf16>
    %cst = arith.constant dense<0.000000e+00> : vector<128x128xf32>
    %2 = tpu.matmul %0, %1, %cst {dimension_numbers = #tpu.dot_dimension_numbers<[1], [0], [0], [1], [0, 0, 1, 1], [], []>} : vector<128x288xbf16>, vector<288x128xbf16>, vector<128x128xf32> -> vector<128x128xf32>
    %c0_3 = arith.constant 0 : index
    %c0_4 = arith.constant 0 : index
    %3 = vector.load %arg3[%c0_3, %c0_4] : memref<1x128xf32, #tpu.memory_space<vmem>>, vector<1x128xf32>
    %4 = vector.broadcast %3 : vector<1x128xf32> to vector<128x128xf32>
    %5 = arith.addf %2, %4 : vector<128x128xf32>
    %cst_5 = arith.constant 0.000000e+00 : f32
    %6 = vector.broadcast %cst_5 : f32 to vector<128x128xf32>
    %7 = arith.cmpf oge, %5, %6 : vector<128x128xf32>
    %c0_6 = arith.constant 0 : index
    %c0_7 = arith.constant 0 : index
    %8 = vector.load %arg4[%c0_6, %c0_7] : memref<1x128xf32, #tpu.memory_space<vmem>>, vector<1x128xf32>
    %9 = vector.broadcast %8 : vector<1x128xf32> to vector<128x128xf32>
    %10 = arith.mulf %9, %5 : vector<128x128xf32>
    %11 = arith.select %7, %5, %10 : vector<128x128xi1>, vector<128x128xf32>
    %12 = arith.truncf %11 : vector<128x128xf32> to vector<128x128xbf16>
    %c0_8 = arith.constant 0 : index
    %c0_9 = arith.constant 0 : index
    %13 = vector.load %arg5[%c0_8, %c0_9] : memref<128x128xbf16, #tpu.memory_space<vmem>>, vector<128x128xbf16>
    tpu.vector_store %arg5[%c0_8, %c0_9], %12 {strides = array<i32>} : memref<128x128xbf16, #tpu.memory_space<vmem>>, vector<128x128xbf16>,
    return
  }
  func.func @transform_0(%arg0: i32) -> (i32, i32) {
    %c0_i32 = arith.constant 0 : i32
    %c0_i32_0 = arith.constant 0 : i32
    return %arg0, %c0_i32 : i32, i32
  }
  func.func @transform_1(%arg0: i32) -> (i32, i32) {
    %c0_i32 = arith.constant 0 : i32
    %c0_i32_0 = arith.constant 0 : i32
    %c0_i32_1 = arith.constant 0 : i32
    return %c0_i32, %c0_i32_0 : i32, i32
  }
  func.func @transform_2(%arg0: i32) -> (i32, i32) {
    %c0_i32 = arith.constant 0 : i32
    %c0_i32_0 = arith.constant 0 : i32
    %c0_i32_1 = arith.constant 0 : i32
    return %c0_i32, %c0_i32_0 : i32, i32
  }
  func.func @transform_3(%arg0: i32) -> (i32, i32) {
    %c0_i32 = arith.constant 0 : i32
    %c0_i32_0 = arith.constant 0 : i32
    %c0_i32_1 = arith.constant 0 : i32
    return %c0_i32, %c0_i32_0 : i32, i32
  }
  func.func @transform_4(%arg0: i32) -> (i32, i32) {
    %c0_i32 = arith.constant 0 : i32
    %c0_i32_0 = arith.constant 0 : i32
    return %arg0, %c0_i32 : i32, i32
  }
}

module attributes {stable_mosaic.version = 11 : i64} {
  func.func @_conv_mm_prelu_kernel(%arg0: i32, %arg1: memref<32x288xbf16, #tpu.memory_space<vmem>>, %arg2: memref<288x128xbf16, #tpu.memory_space<vmem>>, %arg3: memref<1x128xf32, #tpu.memory_space<vmem>>, %arg4: memref<1x128xf32, #tpu.memory_space<vmem>>, %arg5: memref<32x128xbf16, #tpu.memory_space<vmem>>) attributes {dimension_semantics = [#tpu.dimension_semantics<parallel>], iteration_bounds = array<i64: 1>, scalar_prefetch = 0 : i64, scratch_operands = 0 : i64, tpu.core_type = #tpu.core_type<tc>, window_params = [{transform_indices = @transform_0, window_bounds = array<i64: 32, 288>}, {pipeline_mode = #tpu.pipeline_mode<synchronous>, transform_indices = @transform_1, window_bounds = array<i64: 288, 128>}, {pipeline_mode = #tpu.pipeline_mode<synchronous>, transform_indices = @transform_2, window_bounds = array<i64: 1, 128>}, {pipeline_mode = #tpu.pipeline_mode<synchronous>, transform_indices = @transform_3, window_bounds = array<i64: 1, 128>}, {transform_indices = @transform_4, window_bounds = array<i64: 32, 128>}]} {
    %c0 = arith.constant 0 : index
    %c0_0 = arith.constant 0 : index
    %0 = vector.load %arg1[%c0, %c0_0] : memref<32x288xbf16, #tpu.memory_space<vmem>>, vector<32x288xbf16>
    %c0_1 = arith.constant 0 : index
    %c0_2 = arith.constant 0 : index
    %1 = vector.load %arg2[%c0_1, %c0_2] : memref<288x128xbf16, #tpu.memory_space<vmem>>, vector<288x128xbf16>
    %cst = arith.constant dense<0.000000e+00> : vector<32x128xf32>
    %2 = tpu.matmul %0, %1, %cst {dimension_numbers = #tpu.dot_dimension_numbers<[1], [0], [0], [1], [0, 0, 1, 1], [], []>} : vector<32x288xbf16>, vector<288x128xbf16>, vector<32x128xf32> -> vector<32x128xf32>
    %c0_3 = arith.constant 0 : index
    %c0_4 = arith.constant 0 : index
    %3 = vector.load %arg3[%c0_3, %c0_4] : memref<1x128xf32, #tpu.memory_space<vmem>>, vector<1x128xf32>
    %4 = vector.broadcast %3 : vector<1x128xf32> to vector<32x128xf32>
    %5 = arith.addf %2, %4 : vector<32x128xf32>
    %cst_5 = arith.constant 0.000000e+00 : f32
    %6 = vector.broadcast %cst_5 : f32 to vector<32x128xf32>
    %7 = arith.cmpf oge, %5, %6 : vector<32x128xf32>
    %c0_6 = arith.constant 0 : index
    %c0_7 = arith.constant 0 : index
    %8 = vector.load %arg4[%c0_6, %c0_7] : memref<1x128xf32, #tpu.memory_space<vmem>>, vector<1x128xf32>
    %9 = vector.broadcast %8 : vector<1x128xf32> to vector<32x128xf32>
    %10 = arith.mulf %9, %5 : vector<32x128xf32>
    %11 = arith.select %7, %5, %10 : vector<32x128xi1>, vector<32x128xf32>
    %12 = arith.truncf %11 : vector<32x128xf32> to vector<32x128xbf16>
    %c0_8 = arith.constant 0 : index
    %c0_9 = arith.constant 0 : index
    %13 = vector.load %arg5[%c0_8, %c0_9] : memref<32x128xbf16, #tpu.memory_space<vmem>>, vector<32x128xbf16>
    tpu.vector_store %arg5[%c0_8, %c0_9], %12 {strides = array<i32>} : memref<32x128xbf16, #tpu.memory_space<vmem>>, vector<32x128xbf16>,
    return
  }
  func.func @transform_0(%arg0: i32) -> (i32, i32) {
    %c0_i32 = arith.constant 0 : i32
    %c0_i32_0 = arith.constant 0 : i32
    return %arg0, %c0_i32 : i32, i32
  }
  func.func @transform_1(%arg0: i32) -> (i32, i32) {
    %c0_i32 = arith.constant 0 : i32
    %c0_i32_0 = arith.constant 0 : i32
    %c0_i32_1 = arith.constant 0 : i32
    return %c0_i32, %c0_i32_0 : i32, i32
  }
  func.func @transform_2(%arg0: i32) -> (i32, i32) {
    %c0_i32 = arith.constant 0 : i32
    %c0_i32_0 = arith.constant 0 : i32
    %c0_i32_1 = arith.constant 0 : i32
    return %c0_i32, %c0_i32_0 : i32, i32
  }
  func.func @transform_3(%arg0: i32) -> (i32, i32) {
    %c0_i32 = arith.constant 0 : i32
    %c0_i32_0 = arith.constant 0 : i32
    %c0_i32_1 = arith.constant 0 : i32
    return %c0_i32, %c0_i32_0 : i32, i32
  }
  func.func @transform_4(%arg0: i32) -> (i32, i32) {
    %c0_i32 = arith.constant 0 : i32
    %c0_i32_0 = arith.constant 0 : i32
    return %arg0, %c0_i32 : i32, i32
  }
}

module attributes {stable_mosaic.version = 11 : i64} {
  func.func @_conv_mm_prelu_kernel(%arg0: i32, %arg1: memref<32x432xbf16, #tpu.memory_space<vmem>>, %arg2: memref<432x128xbf16, #tpu.memory_space<vmem>>, %arg3: memref<1x128xf32, #tpu.memory_space<vmem>>, %arg4: memref<1x128xf32, #tpu.memory_space<vmem>>, %arg5: memref<32x128xbf16, #tpu.memory_space<vmem>>) attributes {dimension_semantics = [#tpu.dimension_semantics<parallel>], iteration_bounds = array<i64: 1>, scalar_prefetch = 0 : i64, scratch_operands = 0 : i64, tpu.core_type = #tpu.core_type<tc>, window_params = [{transform_indices = @transform_0, window_bounds = array<i64: 32, 432>}, {pipeline_mode = #tpu.pipeline_mode<synchronous>, transform_indices = @transform_1, window_bounds = array<i64: 432, 128>}, {pipeline_mode = #tpu.pipeline_mode<synchronous>, transform_indices = @transform_2, window_bounds = array<i64: 1, 128>}, {pipeline_mode = #tpu.pipeline_mode<synchronous>, transform_indices = @transform_3, window_bounds = array<i64: 1, 128>}, {transform_indices = @transform_4, window_bounds = array<i64: 32, 128>}]} {
    %c0 = arith.constant 0 : index
    %c0_0 = arith.constant 0 : index
    %0 = vector.load %arg1[%c0, %c0_0] : memref<32x432xbf16, #tpu.memory_space<vmem>>, vector<32x432xbf16>
    %c0_1 = arith.constant 0 : index
    %c0_2 = arith.constant 0 : index
    %1 = vector.load %arg2[%c0_1, %c0_2] : memref<432x128xbf16, #tpu.memory_space<vmem>>, vector<432x128xbf16>
    %cst = arith.constant dense<0.000000e+00> : vector<32x128xf32>
    %2 = tpu.matmul %0, %1, %cst {dimension_numbers = #tpu.dot_dimension_numbers<[1], [0], [0], [1], [0, 0, 1, 1], [], []>} : vector<32x432xbf16>, vector<432x128xbf16>, vector<32x128xf32> -> vector<32x128xf32>
    %c0_3 = arith.constant 0 : index
    %c0_4 = arith.constant 0 : index
    %3 = vector.load %arg3[%c0_3, %c0_4] : memref<1x128xf32, #tpu.memory_space<vmem>>, vector<1x128xf32>
    %4 = vector.broadcast %3 : vector<1x128xf32> to vector<32x128xf32>
    %5 = arith.addf %2, %4 : vector<32x128xf32>
    %cst_5 = arith.constant 0.000000e+00 : f32
    %6 = vector.broadcast %cst_5 : f32 to vector<32x128xf32>
    %7 = arith.cmpf oge, %5, %6 : vector<32x128xf32>
    %c0_6 = arith.constant 0 : index
    %c0_7 = arith.constant 0 : index
    %8 = vector.load %arg4[%c0_6, %c0_7] : memref<1x128xf32, #tpu.memory_space<vmem>>, vector<1x128xf32>
    %9 = vector.broadcast %8 : vector<1x128xf32> to vector<32x128xf32>
    %10 = arith.mulf %9, %5 : vector<32x128xf32>
    %11 = arith.select %7, %5, %10 : vector<32x128xi1>, vector<32x128xf32>
    %12 = arith.truncf %11 : vector<32x128xf32> to vector<32x128xbf16>
    %c0_8 = arith.constant 0 : index
    %c0_9 = arith.constant 0 : index
    %13 = vector.load %arg5[%c0_8, %c0_9] : memref<32x128xbf16, #tpu.memory_space<vmem>>, vector<32x128xbf16>
    tpu.vector_store %arg5[%c0_8, %c0_9], %12 {strides = array<i32>} : memref<32x128xbf16, #tpu.memory_space<vmem>>, vector<32x128xbf16>,
    return
  }
  func.func @transform_0(%arg0: i32) -> (i32, i32) {
    %c0_i32 = arith.constant 0 : i32
    %c0_i32_0 = arith.constant 0 : i32
    return %arg0, %c0_i32 : i32, i32
  }
  func.func @transform_1(%arg0: i32) -> (i32, i32) {
    %c0_i32 = arith.constant 0 : i32
    %c0_i32_0 = arith.constant 0 : i32
    %c0_i32_1 = arith.constant 0 : i32
    return %c0_i32, %c0_i32_0 : i32, i32
  }
  func.func @transform_2(%arg0: i32) -> (i32, i32) {
    %c0_i32 = arith.constant 0 : i32
    %c0_i32_0 = arith.constant 0 : i32
    %c0_i32_1 = arith.constant 0 : i32
    return %c0_i32, %c0_i32_0 : i32, i32
  }
  func.func @transform_3(%arg0: i32) -> (i32, i32) {
    %c0_i32 = arith.constant 0 : i32
    %c0_i32_0 = arith.constant 0 : i32
    %c0_i32_1 = arith.constant 0 : i32
    return %c0_i32, %c0_i32_0 : i32, i32
  }
  func.func @transform_4(%arg0: i32) -> (i32, i32) {
    %c0_i32 = arith.constant 0 : i32
    %c0_i32_0 = arith.constant 0 : i32
    return %arg0, %c0_i32 : i32, i32
  }
}

module attributes {stable_mosaic.version = 11 : i64} {
  func.func @_conv_mm_prelu_kernel(%arg0: i32, %arg1: memref<8x432xbf16, #tpu.memory_space<vmem>>, %arg2: memref<432x128xbf16, #tpu.memory_space<vmem>>, %arg3: memref<1x128xf32, #tpu.memory_space<vmem>>, %arg4: memref<1x128xf32, #tpu.memory_space<vmem>>, %arg5: memref<8x128xbf16, #tpu.memory_space<vmem>>) attributes {dimension_semantics = [#tpu.dimension_semantics<parallel>], iteration_bounds = array<i64: 1>, scalar_prefetch = 0 : i64, scratch_operands = 0 : i64, tpu.core_type = #tpu.core_type<tc>, window_params = [{transform_indices = @transform_0, window_bounds = array<i64: 8, 432>}, {pipeline_mode = #tpu.pipeline_mode<synchronous>, transform_indices = @transform_1, window_bounds = array<i64: 432, 128>}, {pipeline_mode = #tpu.pipeline_mode<synchronous>, transform_indices = @transform_2, window_bounds = array<i64: 1, 128>}, {pipeline_mode = #tpu.pipeline_mode<synchronous>, transform_indices = @transform_3, window_bounds = array<i64: 1, 128>}, {transform_indices = @transform_4, window_bounds = array<i64: 8, 128>}]} {
    %c0 = arith.constant 0 : index
    %c0_0 = arith.constant 0 : index
    %0 = vector.load %arg1[%c0, %c0_0] : memref<8x432xbf16, #tpu.memory_space<vmem>>, vector<8x432xbf16>
    %c0_1 = arith.constant 0 : index
    %c0_2 = arith.constant 0 : index
    %1 = vector.load %arg2[%c0_1, %c0_2] : memref<432x128xbf16, #tpu.memory_space<vmem>>, vector<432x128xbf16>
    %cst = arith.constant dense<0.000000e+00> : vector<8x128xf32>
    %2 = tpu.matmul %0, %1, %cst {dimension_numbers = #tpu.dot_dimension_numbers<[1], [0], [0], [1], [0, 0, 1, 1], [], []>} : vector<8x432xbf16>, vector<432x128xbf16>, vector<8x128xf32> -> vector<8x128xf32>
    %c0_3 = arith.constant 0 : index
    %c0_4 = arith.constant 0 : index
    %3 = vector.load %arg3[%c0_3, %c0_4] : memref<1x128xf32, #tpu.memory_space<vmem>>, vector<1x128xf32>
    %4 = vector.broadcast %3 : vector<1x128xf32> to vector<8x128xf32>
    %5 = arith.addf %2, %4 : vector<8x128xf32>
    %cst_5 = arith.constant 0.000000e+00 : f32
    %6 = vector.broadcast %cst_5 : f32 to vector<8x128xf32>
    %7 = arith.cmpf oge, %5, %6 : vector<8x128xf32>
    %c0_6 = arith.constant 0 : index
    %c0_7 = arith.constant 0 : index
    %8 = vector.load %arg4[%c0_6, %c0_7] : memref<1x128xf32, #tpu.memory_space<vmem>>, vector<1x128xf32>
    %9 = vector.broadcast %8 : vector<1x128xf32> to vector<8x128xf32>
    %10 = arith.mulf %9, %5 : vector<8x128xf32>
    %11 = arith.select %7, %5, %10 : vector<8x128xi1>, vector<8x128xf32>
    %12 = arith.truncf %11 : vector<8x128xf32> to vector<8x128xbf16>
    %c0_8 = arith.constant 0 : index
    %c0_9 = arith.constant 0 : index
    %13 = vector.load %arg5[%c0_8, %c0_9] : memref<8x128xbf16, #tpu.memory_space<vmem>>, vector<8x128xbf16>
    tpu.vector_store %arg5[%c0_8, %c0_9], %12 {strides = array<i32>} : memref<8x128xbf16, #tpu.memory_space<vmem>>, vector<8x128xbf16>,
    return
  }
  func.func @transform_0(%arg0: i32) -> (i32, i32) {
    %c0_i32 = arith.constant 0 : i32
    %c0_i32_0 = arith.constant 0 : i32
    return %arg0, %c0_i32 : i32, i32
  }
  func.func @transform_1(%arg0: i32) -> (i32, i32) {
    %c0_i32 = arith.constant 0 : i32
    %c0_i32_0 = arith.constant 0 : i32
    %c0_i32_1 = arith.constant 0 : i32
    return %c0_i32, %c0_i32_0 : i32, i32
  }
  func.func @transform_2(%arg0: i32) -> (i32, i32) {
    %c0_i32 = arith.constant 0 : i32
    %c0_i32_0 = arith.constant 0 : i32
    %c0_i32_1 = arith.constant 0 : i32
    return %c0_i32, %c0_i32_0 : i32, i32
  }
  func.func @transform_3(%arg0: i32) -> (i32, i32) {
    %c0_i32 = arith.constant 0 : i32
    %c0_i32_0 = arith.constant 0 : i32
    %c0_i32_1 = arith.constant 0 : i32
    return %c0_i32, %c0_i32_0 : i32, i32
  }
  func.func @transform_4(%arg0: i32) -> (i32, i32) {
    %c0_i32 = arith.constant 0 : i32
    %c0_i32_0 = arith.constant 0 : i32
    return %arg0, %c0_i32 : i32, i32
  }
}

module attributes {stable_mosaic.version = 11 : i64} {
  func.func @_conv_mm_prelu_kernel(%arg0: i32, %arg1: memref<8x648xbf16, #tpu.memory_space<vmem>>, %arg2: memref<648x128xbf16, #tpu.memory_space<vmem>>, %arg3: memref<1x128xf32, #tpu.memory_space<vmem>>, %arg4: memref<1x128xf32, #tpu.memory_space<vmem>>, %arg5: memref<8x128xbf16, #tpu.memory_space<vmem>>) attributes {dimension_semantics = [#tpu.dimension_semantics<parallel>], iteration_bounds = array<i64: 1>, scalar_prefetch = 0 : i64, scratch_operands = 0 : i64, tpu.core_type = #tpu.core_type<tc>, window_params = [{transform_indices = @transform_0, window_bounds = array<i64: 8, 648>}, {pipeline_mode = #tpu.pipeline_mode<synchronous>, transform_indices = @transform_1, window_bounds = array<i64: 648, 128>}, {pipeline_mode = #tpu.pipeline_mode<synchronous>, transform_indices = @transform_2, window_bounds = array<i64: 1, 128>}, {pipeline_mode = #tpu.pipeline_mode<synchronous>, transform_indices = @transform_3, window_bounds = array<i64: 1, 128>}, {transform_indices = @transform_4, window_bounds = array<i64: 8, 128>}]} {
    %c0 = arith.constant 0 : index
    %c0_0 = arith.constant 0 : index
    %0 = vector.load %arg1[%c0, %c0_0] : memref<8x648xbf16, #tpu.memory_space<vmem>>, vector<8x648xbf16>
    %c0_1 = arith.constant 0 : index
    %c0_2 = arith.constant 0 : index
    %1 = vector.load %arg2[%c0_1, %c0_2] : memref<648x128xbf16, #tpu.memory_space<vmem>>, vector<648x128xbf16>
    %cst = arith.constant dense<0.000000e+00> : vector<8x128xf32>
    %2 = tpu.matmul %0, %1, %cst {dimension_numbers = #tpu.dot_dimension_numbers<[1], [0], [0], [1], [0, 0, 1, 1], [], []>} : vector<8x648xbf16>, vector<648x128xbf16>, vector<8x128xf32> -> vector<8x128xf32>
    %c0_3 = arith.constant 0 : index
    %c0_4 = arith.constant 0 : index
    %3 = vector.load %arg3[%c0_3, %c0_4] : memref<1x128xf32, #tpu.memory_space<vmem>>, vector<1x128xf32>
    %4 = vector.broadcast %3 : vector<1x128xf32> to vector<8x128xf32>
    %5 = arith.addf %2, %4 : vector<8x128xf32>
    %cst_5 = arith.constant 0.000000e+00 : f32
    %6 = vector.broadcast %cst_5 : f32 to vector<8x128xf32>
    %7 = arith.cmpf oge, %5, %6 : vector<8x128xf32>
    %c0_6 = arith.constant 0 : index
    %c0_7 = arith.constant 0 : index
    %8 = vector.load %arg4[%c0_6, %c0_7] : memref<1x128xf32, #tpu.memory_space<vmem>>, vector<1x128xf32>
    %9 = vector.broadcast %8 : vector<1x128xf32> to vector<8x128xf32>
    %10 = arith.mulf %9, %5 : vector<8x128xf32>
    %11 = arith.select %7, %5, %10 : vector<8x128xi1>, vector<8x128xf32>
    %12 = arith.truncf %11 : vector<8x128xf32> to vector<8x128xbf16>
    %c0_8 = arith.constant 0 : index
    %c0_9 = arith.constant 0 : index
    %13 = vector.load %arg5[%c0_8, %c0_9] : memref<8x128xbf16, #tpu.memory_space<vmem>>, vector<8x128xbf16>
    tpu.vector_store %arg5[%c0_8, %c0_9], %12 {strides = array<i32>} : memref<8x128xbf16, #tpu.memory_space<vmem>>, vector<8x128xbf16>,
    return
  }
  func.func @transform_0(%arg0: i32) -> (i32, i32) {
    %c0_i32 = arith.constant 0 : i32
    %c0_i32_0 = arith.constant 0 : i32
    return %arg0, %c0_i32 : i32, i32
  }
  func.func @transform_1(%arg0: i32) -> (i32, i32) {
    %c0_i32 = arith.constant 0 : i32
    %c0_i32_0 = arith.constant 0 : i32
    %c0_i32_1 = arith.constant 0 : i32
    return %c0_i32, %c0_i32_0 : i32, i32
  }
  func.func @transform_2(%arg0: i32) -> (i32, i32) {
    %c0_i32 = arith.constant 0 : i32
    %c0_i32_0 = arith.constant 0 : i32
    %c0_i32_1 = arith.constant 0 : i32
    return %c0_i32, %c0_i32_0 : i32, i32
  }
  func.func @transform_3(%arg0: i32) -> (i32, i32) {
    %c0_i32 = arith.constant 0 : i32
    %c0_i32_0 = arith.constant 0 : i32
    %c0_i32_1 = arith.constant 0 : i32
    return %c0_i32, %c0_i32_0 : i32, i32
  }
  func.func @transform_4(%arg0: i32) -> (i32, i32) {
    %c0_i32 = arith.constant 0 : i32
    %c0_i32_0 = arith.constant 0 : i32
    return %arg0, %c0_i32 : i32, i32
  }
}

module attributes {stable_mosaic.version = 11 : i64} {
  func.func @_conv_mm_prelu_kernel(%arg0: i32, %arg1: memref<2x648xbf16, #tpu.memory_space<vmem>>, %arg2: memref<648x128xbf16, #tpu.memory_space<vmem>>, %arg3: memref<1x128xf32, #tpu.memory_space<vmem>>, %arg4: memref<1x128xf32, #tpu.memory_space<vmem>>, %arg5: memref<2x128xbf16, #tpu.memory_space<vmem>>) attributes {dimension_semantics = [#tpu.dimension_semantics<parallel>], iteration_bounds = array<i64: 1>, scalar_prefetch = 0 : i64, scratch_operands = 0 : i64, tpu.core_type = #tpu.core_type<tc>, window_params = [{transform_indices = @transform_0, window_bounds = array<i64: 2, 648>}, {pipeline_mode = #tpu.pipeline_mode<synchronous>, transform_indices = @transform_1, window_bounds = array<i64: 648, 128>}, {pipeline_mode = #tpu.pipeline_mode<synchronous>, transform_indices = @transform_2, window_bounds = array<i64: 1, 128>}, {pipeline_mode = #tpu.pipeline_mode<synchronous>, transform_indices = @transform_3, window_bounds = array<i64: 1, 128>}, {transform_indices = @transform_4, window_bounds = array<i64: 2, 128>}]} {
    %c0 = arith.constant 0 : index
    %c0_0 = arith.constant 0 : index
    %0 = vector.load %arg1[%c0, %c0_0] : memref<2x648xbf16, #tpu.memory_space<vmem>>, vector<2x648xbf16>
    %c0_1 = arith.constant 0 : index
    %c0_2 = arith.constant 0 : index
    %1 = vector.load %arg2[%c0_1, %c0_2] : memref<648x128xbf16, #tpu.memory_space<vmem>>, vector<648x128xbf16>
    %cst = arith.constant dense<0.000000e+00> : vector<2x128xf32>
    %2 = tpu.matmul %0, %1, %cst {dimension_numbers = #tpu.dot_dimension_numbers<[1], [0], [0], [1], [0, 0, 1, 1], [], []>} : vector<2x648xbf16>, vector<648x128xbf16>, vector<2x128xf32> -> vector<2x128xf32>
    %c0_3 = arith.constant 0 : index
    %c0_4 = arith.constant 0 : index
    %3 = vector.load %arg3[%c0_3, %c0_4] : memref<1x128xf32, #tpu.memory_space<vmem>>, vector<1x128xf32>
    %4 = vector.broadcast %3 : vector<1x128xf32> to vector<2x128xf32>
    %5 = arith.addf %2, %4 : vector<2x128xf32>
    %cst_5 = arith.constant 0.000000e+00 : f32
    %6 = vector.broadcast %cst_5 : f32 to vector<2x128xf32>
    %7 = arith.cmpf oge, %5, %6 : vector<2x128xf32>
    %c0_6 = arith.constant 0 : index
    %c0_7 = arith.constant 0 : index
    %8 = vector.load %arg4[%c0_6, %c0_7] : memref<1x128xf32, #tpu.memory_space<vmem>>, vector<1x128xf32>
    %9 = vector.broadcast %8 : vector<1x128xf32> to vector<2x128xf32>
    %10 = arith.mulf %9, %5 : vector<2x128xf32>
    %11 = arith.select %7, %5, %10 : vector<2x128xi1>, vector<2x128xf32>
    %12 = arith.truncf %11 : vector<2x128xf32> to vector<2x128xbf16>
    %c0_8 = arith.constant 0 : index
    %c0_9 = arith.constant 0 : index
    %13 = vector.load %arg5[%c0_8, %c0_9] : memref<2x128xbf16, #tpu.memory_space<vmem>>, vector<2x128xbf16>
    tpu.vector_store %arg5[%c0_8, %c0_9], %12 {strides = array<i32>} : memref<2x128xbf16, #tpu.memory_space<vmem>>, vector<2x128xbf16>,
    return
  }
  func.func @transform_0(%arg0: i32) -> (i32, i32) {
    %c0_i32 = arith.constant 0 : i32
    %c0_i32_0 = arith.constant 0 : i32
    return %arg0, %c0_i32 : i32, i32
  }
  func.func @transform_1(%arg0: i32) -> (i32, i32) {
    %c0_i32 = arith.constant 0 : i32
    %c0_i32_0 = arith.constant 0 : i32
    %c0_i32_1 = arith.constant 0 : i32
    return %c0_i32, %c0_i32_0 : i32, i32
  }
  func.func @transform_2(%arg0: i32) -> (i32, i32) {
    %c0_i32 = arith.constant 0 : i32
    %c0_i32_0 = arith.constant 0 : i32
    %c0_i32_1 = arith.constant 0 : i32
    return %c0_i32, %c0_i32_0 : i32, i32
  }
  func.func @transform_3(%arg0: i32) -> (i32, i32) {
    %c0_i32 = arith.constant 0 : i32
    %c0_i32_0 = arith.constant 0 : i32
    %c0_i32_1 = arith.constant 0 : i32
    return %c0_i32, %c0_i32_0 : i32, i32
  }
  func.func @transform_4(%arg0: i32) -> (i32, i32) {
    %c0_i32 = arith.constant 0 : i32
    %c0_i32_0 = arith.constant 0 : i32
    return %arg0, %c0_i32 : i32, i32
  }
}

module attributes {stable_mosaic.version = 11 : i64} {
  func.func @_conv_mm_prelu_kernel(%arg0: i32, %arg1: memref<2x864xbf16, #tpu.memory_space<vmem>>, %arg2: memref<864x128xbf16, #tpu.memory_space<vmem>>, %arg3: memref<1x128xf32, #tpu.memory_space<vmem>>, %arg4: memref<1x128xf32, #tpu.memory_space<vmem>>, %arg5: memref<2x128xbf16, #tpu.memory_space<vmem>>) attributes {dimension_semantics = [#tpu.dimension_semantics<parallel>], iteration_bounds = array<i64: 1>, scalar_prefetch = 0 : i64, scratch_operands = 0 : i64, tpu.core_type = #tpu.core_type<tc>, window_params = [{transform_indices = @transform_0, window_bounds = array<i64: 2, 864>}, {pipeline_mode = #tpu.pipeline_mode<synchronous>, transform_indices = @transform_1, window_bounds = array<i64: 864, 128>}, {pipeline_mode = #tpu.pipeline_mode<synchronous>, transform_indices = @transform_2, window_bounds = array<i64: 1, 128>}, {pipeline_mode = #tpu.pipeline_mode<synchronous>, transform_indices = @transform_3, window_bounds = array<i64: 1, 128>}, {transform_indices = @transform_4, window_bounds = array<i64: 2, 128>}]} {
    %c0 = arith.constant 0 : index
    %c0_0 = arith.constant 0 : index
    %0 = vector.load %arg1[%c0, %c0_0] : memref<2x864xbf16, #tpu.memory_space<vmem>>, vector<2x864xbf16>
    %c0_1 = arith.constant 0 : index
    %c0_2 = arith.constant 0 : index
    %1 = vector.load %arg2[%c0_1, %c0_2] : memref<864x128xbf16, #tpu.memory_space<vmem>>, vector<864x128xbf16>
    %cst = arith.constant dense<0.000000e+00> : vector<2x128xf32>
    %2 = tpu.matmul %0, %1, %cst {dimension_numbers = #tpu.dot_dimension_numbers<[1], [0], [0], [1], [0, 0, 1, 1], [], []>} : vector<2x864xbf16>, vector<864x128xbf16>, vector<2x128xf32> -> vector<2x128xf32>
    %c0_3 = arith.constant 0 : index
    %c0_4 = arith.constant 0 : index
    %3 = vector.load %arg3[%c0_3, %c0_4] : memref<1x128xf32, #tpu.memory_space<vmem>>, vector<1x128xf32>
    %4 = vector.broadcast %3 : vector<1x128xf32> to vector<2x128xf32>
    %5 = arith.addf %2, %4 : vector<2x128xf32>
    %cst_5 = arith.constant 0.000000e+00 : f32
    %6 = vector.broadcast %cst_5 : f32 to vector<2x128xf32>
    %7 = arith.cmpf oge, %5, %6 : vector<2x128xf32>
    %c0_6 = arith.constant 0 : index
    %c0_7 = arith.constant 0 : index
    %8 = vector.load %arg4[%c0_6, %c0_7] : memref<1x128xf32, #tpu.memory_space<vmem>>, vector<1x128xf32>
    %9 = vector.broadcast %8 : vector<1x128xf32> to vector<2x128xf32>
    %10 = arith.mulf %9, %5 : vector<2x128xf32>
    %11 = arith.select %7, %5, %10 : vector<2x128xi1>, vector<2x128xf32>
    %12 = arith.truncf %11 : vector<2x128xf32> to vector<2x128xbf16>
    %c0_8 = arith.constant 0 : index
    %c0_9 = arith.constant 0 : index
    %13 = vector.load %arg5[%c0_8, %c0_9] : memref<2x128xbf16, #tpu.memory_space<vmem>>, vector<2x128xbf16>
    tpu.vector_store %arg5[%c0_8, %c0_9], %12 {strides = array<i32>} : memref<2x128xbf16, #tpu.memory_space<vmem>>, vector<2x128xbf16>,
    return
  }
  func.func @transform_0(%arg0: i32) -> (i32, i32) {
    %c0_i32 = arith.constant 0 : i32
    %c0_i32_0 = arith.constant 0 : i32
    return %arg0, %c0_i32 : i32, i32
  }
  func.func @transform_1(%arg0: i32) -> (i32, i32) {
    %c0_i32 = arith.constant 0 : i32
    %c0_i32_0 = arith.constant 0 : i32
    %c0_i32_1 = arith.constant 0 : i32
    return %c0_i32, %c0_i32_0 : i32, i32
  }
  func.func @transform_2(%arg0: i32) -> (i32, i32) {
    %c0_i32 = arith.constant 0 : i32
    %c0_i32_0 = arith.constant 0 : i32
    %c0_i32_1 = arith.constant 0 : i32
    return %c0_i32, %c0_i32_0 : i32, i32
  }
  func.func @transform_3(%arg0: i32) -> (i32, i32) {
    %c0_i32 = arith.constant 0 : i32
    %c0_i32_0 = arith.constant 0 : i32
    %c0_i32_1 = arith.constant 0 : i32
    return %c0_i32, %c0_i32_0 : i32, i32
  }
  func.func @transform_4(%arg0: i32) -> (i32, i32) {
    %c0_i32 = arith.constant 0 : i32
    %c0_i32_0 = arith.constant 0 : i32
    return %arg0, %c0_i32 : i32, i32
  }
}

</mosaic_0001>

<llo_original>
// kernel: encoder_forward.8
$region0: #{encoder_forward.8}
  #allocation0 [shape = 'u32[]', space=smem, size = 0x4, offset = 0x4, fixed_abs, tag = 'smem constant byte address 0x4 - core index']
  #allocation1 [shape = 'u32[144,128]{1,0:T(1,128)}', space=vmem, size = 0x12000, scoped, tag = 'internal scratch']
  %s0 = inlined_call_operand.vmem [shape: bf16[128,16], index: 0, kind: input, shape index: {}]
  %s1 = inlined_call_operand.vmem [shape: bf16[16,128], index: 1, kind: input, shape index: {}]
  %s2 = inlined_call_operand.vmem [shape: f32[1,128], index: 2, kind: input, shape index: {}]
  %s3 = inlined_call_operand.vmem [shape: f32[1,128], index: 3, kind: input, shape index: {}]
  %s4 = inlined_call_operand.vmem [shape: bf16[128,128], index: 4, kind: output, shape index: {}]
  %s5 = sld [smem:[#allocation0]]
  $region26: #{encoder_forward.8} parent=0
    _
  %s7 = ssub.s32 1, %s5
  %s8 = scalar_select 0, %s7, %s5
  // Predicated region
  $region2: #{encoder_forward.8} parent=0 // pred_check
    _
  $region3: #{encoder_forward.8} parent=0 // pred_check_branch
    %10 = sbr.rel (0) target = $region5
  $region4: #{encoder_forward.8} parent=0 // pred_region
    _
  $region5: #{encoder_forward.8} parent=0 // pred_fallthru
    _
  // Predicated region
  $region6: #{encoder_forward.8} parent=0 // pred_check
    _
  $region7: #{encoder_forward.8} parent=0 // pred_check_branch
    %12 = sbr.rel (0) target = $region9
  $region8: #{encoder_forward.8} parent=0 // pred_region
    _
  $region9: #{encoder_forward.8} parent=0 // pred_fallthru
    _
  // Predicated region
  $region10: #{encoder_forward.8} parent=0 // pred_check
    _
  $region11: #{encoder_forward.8} parent=0 // pred_check_branch
    %14 = sbr.rel (0) target = $region13
  $region12: #{encoder_forward.8} parent=0 // pred_region
    _
  $region13: #{encoder_forward.8} parent=0 // pred_fallthru
    _
  // Predicated region
  $region14: #{encoder_forward.8} parent=0 // pred_check
    _
  $region15: #{encoder_forward.8} parent=0 // pred_check_branch
    %16 = sbr.rel (0) target = $region17
  $region16: #{encoder_forward.8} parent=0 // pred_region
    _
  $region17: #{encoder_forward.8} parent=0 // pred_fallthru
    _
  %v18 = vld [vmem:[%s0] sm:$0xf]
  %v19 = vld [vmem:[%s0 + $0x4] sm:$0xf]
  %v20 = vld [vmem:[%s0 + $0x8] sm:$0xf]
  %v21 = vld [vmem:[%s0 + $0xc] sm:$0xf]
  %v22 = vld [vmem:[%s0 + $0x10] sm:$0xf]
  %v23 = vld [vmem:[%s0 + $0x14] sm:$0xf]
  %v24 = vld [vmem:[%s0 + $0x18] sm:$0xf]
  %v25 = vld [vmem:[%s0 + $0x1c] sm:$0xf]
  %v26 = vld [vmem:[%s0 + $0x20] sm:$0xf]
  %v27 = vld [vmem:[%s0 + $0x24] sm:$0xf]
  %v28 = vld [vmem:[%s0 + $0x28] sm:$0xf]
  %v29 = vld [vmem:[%s0 + $0x2c] sm:$0xf]
  %v30 = vld [vmem:[%s0 + $0x30] sm:$0xf]
  %v31 = vld [vmem:[%s0 + $0x34] sm:$0xf]
  %v32 = vld [vmem:[%s0 + $0x38] sm:$0xf]
  %v33 = vld [vmem:[%s0 + $0x3c] sm:$0xf]
  %v34 = vld [vmem:[%s1] sm:$0xf]
  %v35 = vld [vmem:[%s1 + $0x4] sm:$0xf]
  %v36 = vld [vmem:[%s2] sm:$0x1]
  %v38 = vlaneseq
  %v39 = vshrl.u32 %v38, 7
  %v40 = vsub.s32 0, %v39
  %v41 = vrot.slane %v36, %v40
  %v59 = vunpack.c.l.b16 %v18
  %v60 = vunpack.c.l.b16 %v19
  %v61 = vunpack.c.l.b16 %v20
  %v62 = vunpack.c.l.b16 %v21
  %v63 = vunpack.c.l.b16 %v22
  %v64 = vunpack.c.l.b16 %v23
  %v65 = vunpack.c.l.b16 %v24
  %v66 = vunpack.c.l.b16 %v25
  %v67 = vunpack.c.l.b16 %v26
  %v68 = vunpack.c.l.b16 %v27
  %v69 = vunpack.c.l.b16 %v28
  %v70 = vunpack.c.l.b16 %v29
  %v71 = vunpack.c.l.b16 %v30
  %v72 = vunpack.c.l.b16 %v31
  %v73 = vunpack.c.l.b16 %v32
  %v74 = vunpack.c.l.b16 %v33
  %v75 = vpack.c.b16 %v60, %v59
  %v76 = vpack.c.b16 %v62, %v61
  %v77 = vpack.c.b16 %v64, %v63
  %v78 = vpack.c.b16 %v66, %v65
  %v79 = vpack.c.b16 %v68, %v67
  %v80 = vpack.c.b16 %v70, %v69
  %v81 = vpack.c.b16 %v72, %v71
  %v82 = vpack.c.b16 %v74, %v73
  %v85 = vunpack.c.l.b16 %v34
  %v86 = vunpack.c.l.b16 %v35
  %v87 = vpack.c.b16 %v86, %v85
  %vm89 = vcmask 130048
  %v91 = vsel %vm89, %v75, 0
  %v94 = vsel %vm89, %v76, 0
  %v97 = vsel %vm89, %v77, 0
  %v100 = vsel %vm89, %v78, 0
  %v103 = vsel %vm89, %v79, 0
  %v106 = vsel %vm89, %v80, 0
  %v109 = vsel %vm89, %v81, 0
  %v112 = vsel %vm89, %v82, 0
  %114 = vmatprep.subr.bf16.mxu0 0
  %115 = vmatpush1.bf16.msra.mxu0 0
  %116 = vmatprep.subr.bf16.mxu0 0
  %117 = vmatpush1.bf16.msra.mxu0 0
  %118 = vmatprep.subr.bf16.mxu0 0
  %119 = vmatpush1.bf16.msra.mxu0 0
  %120 = vmatprep.subr.bf16.mxu0 0
  %121 = vmatpush1.bf16.msra.mxu0 0
  %122 = vmatprep.subr.bf16.mxu0 0
  %123 = vmatpush1.bf16.msra.mxu0 0
  %124 = vmatprep.subr.bf16.mxu0 0
  %125 = vmatpush1.bf16.msra.mxu0 0
  %126 = vmatprep.subr.bf16.mxu0 0
  %127 = vmatpush1.bf16.msra.mxu0 0
  %128 = vmatprep.subr.bf16.mxu0 0
  %129 = vmatpush1.bf16.msra.mxu0 %v87
  %130 = vmatprep.subr.bf16.mxu0 0
  %131 = vmatpush2.bf16.msra.mxu0 0
  %132 = vmatprep.subr.bf16.mxu0 0
  %133 = vmatpush2.bf16.msra.mxu0 0
  %134 = vmatprep.subr.bf16.mxu0 0
  %135 = vmatpush2.bf16.msra.mxu0 0
  %136 = vmatprep.subr.bf16.mxu0 0
  %137 = vmatpush2.bf16.msra.mxu0 0
  %138 = vmatprep.subr.bf16.mxu0 0
  %139 = vmatpush2.bf16.msra.mxu0 0
  %140 = vmatprep.subr.bf16.mxu0 0
  %141 = vmatpush2.bf16.msra.mxu0 0
  %142 = vmatprep.subr.bf16.mxu0 0
  %143 = vmatpush2.bf16.msra.mxu0 0
  %144 = vmatprep.subr.bf16.mxu0 0
  %145 = vmatpush2.bf16.msra.mxu0 0
  %146 = vmatprep.mubr.bf16.mxu0 0
  %147 = vmatmul.mubr.bf16.gmra.mxu0 %v91
  %v148 = vpop.f32.mrf.mxu0
  %v149 = vadd.f32 %v41, %v148
  %v150 = vpop.f32.mrf.mxu0
  %v151 = vpop.f32.mrf.mxu0
  %v152 = vadd.f32 %v41, %v151
  %v153 = vpop.f32.mrf.mxu0
  %154 = vmatprep.mubr.bf16.mxu0 0
  %155 = vmatmul.mubr.bf16.gmra.mxu0 %v94
  %v156 = vpop.f32.mrf.mxu0
  %v157 = vadd.f32 %v41, %v156
  %v158 = vpop.f32.mrf.mxu0
  %v159 = vpop.f32.mrf.mxu0
  %v160 = vadd.f32 %v41, %v159
  %v161 = vpop.f32.mrf.mxu0
  %162 = vmatprep.mubr.bf16.mxu0 0
  %163 = vmatmul.mubr.bf16.gmra.mxu0 %v97
  %v164 = vpop.f32.mrf.mxu0
  %v165 = vadd.f32 %v41, %v164
  %v166 = vpop.f32.mrf.mxu0
  %v167 = vpop.f32.mrf.mxu0
  %v168 = vadd.f32 %v41, %v167
  %v169 = vpop.f32.mrf.mxu0
  %170 = vmatprep.mubr.bf16.mxu0 0
  %171 = vmatmul.mubr.bf16.gmra.mxu0 %v100
  %v172 = vpop.f32.mrf.mxu0
  %v173 = vadd.f32 %v41, %v172
  %v174 = vpop.f32.mrf.mxu0
  %v175 = vpop.f32.mrf.mxu0
  %v176 = vadd.f32 %v41, %v175
  %v177 = vpop.f32.mrf.mxu0
  %178 = vmatprep.mubr.bf16.mxu0 0
  %179 = vmatmul.mubr.bf16.gmra.mxu0 %v103
  %v180 = vpop.f32.mrf.mxu0
  %v181 = vadd.f32 %v41, %v180
  %v182 = vpop.f32.mrf.mxu0
  %v183 = vpop.f32.mrf.mxu0
  %v184 = vadd.f32 %v41, %v183
  %v185 = vpop.f32.mrf.mxu0
  %186 = vmatprep.mubr.bf16.mxu0 0
  %187 = vmatmul.mubr.bf16.gmra.mxu0 %v106
  %v188 = vpop.f32.mrf.mxu0
  %v189 = vadd.f32 %v41, %v188
  %v190 = vpop.f32.mrf.mxu0
  %v191 = vpop.f32.mrf.mxu0
  %v192 = vadd.f32 %v41, %v191
  %v193 = vpop.f32.mrf.mxu0
  %194 = vmatprep.mubr.bf16.mxu0 0
  %195 = vmatmul.mubr.bf16.gmra.mxu0 %v109
  %v196 = vpop.f32.mrf.mxu0
  %v197 = vadd.f32 %v41, %v196
  %v198 = vpop.f32.mrf.mxu0
  %v199 = vpop.f32.mrf.mxu0
  %v200 = vadd.f32 %v41, %v199
  %v201 = vpop.f32.mrf.mxu0
  %202 = vmatprep.mubr.bf16.mxu0 0
  %203 = vmatmul.mubr.bf16.gmra.mxu0 %v112
  %v204 = vpop.f32.mrf.mxu0
  %v205 = vadd.f32 %v41, %v204
  %v206 = vpop.f32.mrf.mxu0
  %v207 = vpop.f32.mrf.mxu0
  %v208 = vadd.f32 %v41, %v207
  %v209 = vpop.f32.mrf.mxu0
  %210 = vdwg.mxu0
  %vm211 = vcmp.ge.f32.partialorder %v149, 0.0
  %vm212 = vcmp.ge.f32.partialorder %v152, 0.0
  %vm213 = vcmp.ge.f32.partialorder %v157, 0.0
  %vm214 = vcmp.ge.f32.partialorder %v160, 0.0
  %vm215 = vcmp.ge.f32.partialorder %v165, 0.0
  %vm216 = vcmp.ge.f32.partialorder %v168, 0.0
  %vm217 = vcmp.ge.f32.partialorder %v173, 0.0
  %vm218 = vcmp.ge.f32.partialorder %v176, 0.0
  %vm219 = vcmp.ge.f32.partialorder %v181, 0.0
  %vm220 = vcmp.ge.f32.partialorder %v184, 0.0
  %vm221 = vcmp.ge.f32.partialorder %v189, 0.0
  %vm222 = vcmp.ge.f32.partialorder %v192, 0.0
  %vm223 = vcmp.ge.f32.partialorder %v197, 0.0
  %vm224 = vcmp.ge.f32.partialorder %v200, 0.0
  %vm225 = vcmp.ge.f32.partialorder %v205, 0.0
  %vm226 = vcmp.ge.f32.partialorder %v208, 0.0
  %v227 = vld [vmem:[%s3] sm:$0x1]
  %v229 = vlaneseq
  %v230 = vshrl.u32 %v229, 7
  %v231 = vsub.s32 0, %v230
  %v232 = vrot.slane %v227, %v231
  %v234 = vmul.f32 %v232, %v149
  %v235 = vmul.f32 %v232, %v152
  %v236 = vmul.f32 %v232, %v157
  %v237 = vmul.f32 %v232, %v160
  %v238 = vmul.f32 %v232, %v165
  %v239 = vmul.f32 %v232, %v168
  %v240 = vmul.f32 %v232, %v173
  %v241 = vmul.f32 %v232, %v176
  %v242 = vmul.f32 %v232, %v181
  %v243 = vmul.f32 %v232, %v184
  %v244 = vmul.f32 %v232, %v189
  %v245 = vmul.f32 %v232, %v192
  %v246 = vmul.f32 %v232, %v197
  %v247 = vmul.f32 %v232, %v200
  %v248 = vmul.f32 %v232, %v205
  %v249 = vmul.f32 %v232, %v208
  %v250 = vsel %vm211, %v149, %v234
  %v251 = vsel %vm212, %v152, %v235
  %v252 = vsel %vm213, %v157, %v236
  %v253 = vsel %vm214, %v160, %v237
  %v254 = vsel %vm215, %v165, %v238
  %v255 = vsel %vm216, %v168, %v239
  %v256 = vsel %vm217, %v173, %v240
  %v257 = vsel %vm218, %v176, %v241
  %v258 = vsel %vm219, %v181, %v242
  %v259 = vsel %vm220, %v184, %v243
  %v260 = vsel %vm221, %v189, %v244
  %v261 = vsel %vm222, %v192, %v245
  %v262 = vsel %vm223, %v197, %v246
  %v263 = vsel %vm224, %v200, %v247
  %v264 = vsel %vm225, %v205, %v248
  %v265 = vsel %vm226, %v208, %v249
  %v266 = vpack.c.bf16 %v251, %v250
  %v267 = vpack.c.bf16 %v253, %v252
  %v268 = vpack.c.bf16 %v255, %v254
  %v269 = vpack.c.bf16 %v257, %v256
  %v270 = vpack.c.bf16 %v259, %v258
  %v271 = vpack.c.bf16 %v261, %v260
  %v272 = vpack.c.bf16 %v263, %v262
  %v273 = vpack.c.bf16 %v265, %v264
  %v282 = vunpack.c.l.b16 %v266
  %v283 = vunpack.c.h.b16 %v266
  %v284 = vunpack.c.l.b16 %v267
  %v285 = vunpack.c.h.b16 %v267
  %v286 = vunpack.c.l.b16 %v268
  %v287 = vunpack.c.h.b16 %v268
  %v288 = vunpack.c.l.b16 %v269
  %v289 = vunpack.c.h.b16 %v269
  %v290 = vunpack.c.l.b16 %v270
  %v291 = vunpack.c.h.b16 %v270
  %v292 = vunpack.c.l.b16 %v271
  %v293 = vunpack.c.h.b16 %v271
  %v294 = vunpack.c.l.b16 %v272
  %v295 = vunpack.c.h.b16 %v272
  %v296 = vunpack.c.l.b16 %v273
  %v297 = vunpack.c.h.b16 %v273
  %v298 = vpack.c.b16 %v282, %v282
  %v299 = vpack.c.b16 %v283, %v283
  %v300 = vpack.c.b16 %v284, %v284
  %v301 = vpack.c.b16 %v285, %v285
  %v302 = vpack.c.b16 %v286, %v286
  %v303 = vpack.c.b16 %v287, %v287
  %v304 = vpack.c.b16 %v288, %v288
  %v305 = vpack.c.b16 %v289, %v289
  %v306 = vpack.c.b16 %v290, %v290
  %v307 = vpack.c.b16 %v291, %v291
  %v308 = vpack.c.b16 %v292, %v292
  %v309 = vpack.c.b16 %v293, %v293
  %v310 = vpack.c.b16 %v294, %v294
  %v311 = vpack.c.b16 %v295, %v295
  %v312 = vpack.c.b16 %v296, %v296
  %v313 = vpack.c.b16 %v297, %v297
  %330 = vst [vmem:[%s4] sm:$0xf] %v298
  %331 = vst [vmem:[%s4 + $0x4] sm:$0xf] %v299
  %332 = vst [vmem:[%s4 + $0x8] sm:$0xf] %v300
  %333 = vst [vmem:[%s4 + $0xc] sm:$0xf] %v301
  %334 = vst [vmem:[%s4 + $0x10] sm:$0xf] %v302
  %335 = vst [vmem:[%s4 + $0x14] sm:$0xf] %v303
  %336 = vst [vmem:[%s4 + $0x18] sm:$0xf] %v304
  %337 = vst [vmem:[%s4 + $0x1c] sm:$0xf] %v305
  %338 = vst [vmem:[%s4 + $0x20] sm:$0xf] %v306
  %339 = vst [vmem:[%s4 + $0x24] sm:$0xf] %v307
  %340 = vst [vmem:[%s4 + $0x28] sm:$0xf] %v308
  %341 = vst [vmem:[%s4 + $0x2c] sm:$0xf] %v309
  %342 = vst [vmem:[%s4 + $0x30] sm:$0xf] %v310
  %343 = vst [vmem:[%s4 + $0x34] sm:$0xf] %v311
  %344 = vst [vmem:[%s4 + $0x38] sm:$0xf] %v312
  %345 = vst [vmem:[%s4 + $0x3c] sm:$0xf] %v313
  // Predicated region
  $region18: #{encoder_forward.8} parent=0 // pred_check
    _
  $region19: #{encoder_forward.8} parent=0 // pred_check_branch
    %347 = sbr.rel (0) target = $region21
  $region20: #{encoder_forward.8} parent=0 // pred_region
    _
  $region21: #{encoder_forward.8} parent=0 // pred_fallthru
    _
  // Predicated region
  $region22: #{encoder_forward.8} parent=0 // pred_check
    _
  $region23: #{encoder_forward.8} parent=0 // pred_check_branch
    %349 = sbr.rel (0) target = $region25
  $region24: #{encoder_forward.8} parent=0 // pred_region
    _
  $region25: #{encoder_forward.8} parent=0 // pred_fallthru
    _

// kernel: encoder_forward.9
$region0: #{encoder_forward.9}
  #allocation0 [shape = 'u32[]', space=smem, size = 0x4, offset = 0x4, fixed_abs, tag = 'smem constant byte address 0x4 - core index']
  #allocation1 [shape = 'u32[144,128]{1,0:T(1,128)}', space=vmem, size = 0x12000, scoped, tag = 'internal scratch']
  %s0 = inlined_call_operand.vmem [shape: bf16[128,288], index: 0, kind: input, shape index: {}]
  %s1 = inlined_call_operand.vmem [shape: bf16[288,128], index: 1, kind: input, shape index: {}]
  %s2 = inlined_call_operand.vmem [shape: f32[1,128], index: 2, kind: input, shape index: {}]
  %s3 = inlined_call_operand.vmem [shape: f32[1,128], index: 3, kind: input, shape index: {}]
  %s4 = inlined_call_operand.vmem [shape: bf16[128,128], index: 4, kind: output, shape index: {}]
  %s5 = sld [smem:[#allocation0]]
  $region26: #{encoder_forward.9} parent=0
    _
  %s7 = ssub.s32 1, %s5
  %s8 = scalar_select 0, %s7, %s5
  // Predicated region
  $region2: #{encoder_forward.9} parent=0 // pred_check
    _
  $region3: #{encoder_forward.9} parent=0 // pred_check_branch
    %10 = sbr.rel (0) target = $region5
  $region4: #{encoder_forward.9} parent=0 // pred_region
    _
  $region5: #{encoder_forward.9} parent=0 // pred_fallthru
    _
  // Predicated region
  $region6: #{encoder_forward.9} parent=0 // pred_check
    _
  $region7: #{encoder_forward.9} parent=0 // pred_check_branch
    %12 = sbr.rel (0) target = $region9
  $region8: #{encoder_forward.9} parent=0 // pred_region
    _
  $region9: #{encoder_forward.9} parent=0 // pred_fallthru
    _
  // Predicated region
  $region10: #{encoder_forward.9} parent=0 // pred_check
    _
  $region11: #{encoder_forward.9} parent=0 // pred_check_branch
    %14 = sbr.rel (0) target = $region13
  $region12: #{encoder_forward.9} parent=0 // pred_region
    _
  $region13: #{encoder_forward.9} parent=0 // pred_fallthru
    _
  // Predicated region
  $region14: #{encoder_forward.9} parent=0 // pred_check
    _
  $region15: #{encoder_forward.9} parent=0 // pred_check_branch
    %16 = sbr.rel (0) target = $region17
  $region16: #{encoder_forward.9} parent=0 // pred_region
    _
  $region17: #{encoder_forward.9} parent=0 // pred_fallthru
    _
  %v18 = vld [vmem:[%s0] sm:$0xff]
  %v19 = vld [vmem:[%s0 + $0x8] sm:$0xf]
  %v20 = vld [vmem:[%s0 + $0xc] sm:$0xff]
  %v21 = vld [vmem:[%s0 + $0x14] sm:$0xf]
  %v22 = vld [vmem:[%s0 + $0x18] sm:$0xff]
  %v23 = vld [vmem:[%s0 + $0x20] sm:$0xf]
  %v24 = vld [vmem:[%s0 + $0x24] sm:$0xff]
  %v25 = vld [vmem:[%s0 + $0x2c] sm:$0xf]
  %v26 = vld [vmem:[%s0 + $0x30] sm:$0xff]
  %v27 = vld [vmem:[%s0 + $0x38] sm:$0xf]
  %v28 = vld [vmem:[%s0 + $0x3c] sm:$0xff]
  %v29 = vld [vmem:[%s0 + $0x44] sm:$0xf]
  %v30 = vld [vmem:[%s0 + $0x48] sm:$0xff]
  %v31 = vld [vmem:[%s0 + $0x50] sm:$0xf]
  %v32 = vld [vmem:[%s0 + $0x54] sm:$0xff]
  %v33 = vld [vmem:[%s0 + $0x5c] sm:$0xf]
  %v34 = vld [vmem:[%s0 + $0x60] sm:$0xff]
  %v35 = vld [vmem:[%s0 + $0x68] sm:$0xf]
  %v36 = vld [vmem:[%s0 + $0x6c] sm:$0xff]
  %v37 = vld [vmem:[%s0 + $0x74] sm:$0xf]
  %v38 = vld [vmem:[%s0 + $0x78] sm:$0xff]
  %v39 = vld [vmem:[%s0 + $0x80] sm:$0xf]
  %v40 = vld [vmem:[%s0 + $0x84] sm:$0xff]
  %v41 = vld [vmem:[%s0 + $0x8c] sm:$0xf]
  %v42 = vld [vmem:[%s0 + $0x90] sm:$0xff]
  %v43 = vld [vmem:[%s0 + $0x98] sm:$0xf]
  %v44 = vld [vmem:[%s0 + $0x9c] sm:$0xff]
  %v45 = vld [vmem:[%s0 + $0xa4] sm:$0xf]
  %v46 = vld [vmem:[%s0 + $0xa8] sm:$0xff]
  %v47 = vld [vmem:[%s0 + $0xb0] sm:$0xf]
  %v48 = vld [vmem:[%s0 + $0xb4] sm:$0xff]
  %v49 = vld [vmem:[%s0 + $0xbc] sm:$0xf]
  %v50 = vld [vmem:[%s1] sm:$0xf]
  %v51 = vld [vmem:[%s1 + $0x4] sm:$0xf]
  %v52 = vld [vmem:[%s1 + $0x8] sm:$0xf]
  %v53 = vld [vmem:[%s1 + $0xc] sm:$0xf]
  %v54 = vld [vmem:[%s1 + $0x10] sm:$0xf]
  %v55 = vld [vmem:[%s1 + $0x14] sm:$0xf]
  %v56 = vld [vmem:[%s1 + $0x18] sm:$0xf]
  %v57 = vld [vmem:[%s1 + $0x1c] sm:$0xf]
  %v58 = vld [vmem:[%s1 + $0x20] sm:$0xf]
  %v59 = vld [vmem:[%s1 + $0x24] sm:$0xf]
  %v60 = vld [vmem:[%s1 + $0x28] sm:$0xf]
  %v61 = vld [vmem:[%s1 + $0x2c] sm:$0xf]
  %v62 = vld [vmem:[%s1 + $0x30] sm:$0xf]
  %v63 = vld [vmem:[%s1 + $0x34] sm:$0xf]
  %v64 = vld [vmem:[%s1 + $0x38] sm:$0xf]
  %v65 = vld [vmem:[%s1 + $0x3c] sm:$0xf]
  %v66 = vld [vmem:[%s1 + $0x40] sm:$0xf]
  %v67 = vld [vmem:[%s1 + $0x44] sm:$0xf]
  %v68 = vld [vmem:[%s1 + $0x48] sm:$0xf]
  %v69 = vld [vmem:[%s1 + $0x4c] sm:$0xf]
  %v70 = vld [vmem:[%s1 + $0x50] sm:$0xf]
  %v71 = vld [vmem:[%s1 + $0x54] sm:$0xf]
  %v72 = vld [vmem:[%s1 + $0x58] sm:$0xf]
  %v73 = vld [vmem:[%s1 + $0x5c] sm:$0xf]
  %v74 = vld [vmem:[%s1 + $0x60] sm:$0xf]
  %v75 = vld [vmem:[%s1 + $0x64] sm:$0xf]
  %v76 = vld [vmem:[%s1 + $0x68] sm:$0xf]
  %v77 = vld [vmem:[%s1 + $0x6c] sm:$0xf]
  %v78 = vld [vmem:[%s1 + $0x70] sm:$0xf]
  %v79 = vld [vmem:[%s1 + $0x74] sm:$0xf]
  %v80 = vld [vmem:[%s1 + $0x78] sm:$0xf]
  %v81 = vld [vmem:[%s1 + $0x7c] sm:$0xf]
  %v82 = vld [vmem:[%s1 + $0x80] sm:$0xf]
  %v83 = vld [vmem:[%s1 + $0x84] sm:$0xf]
  %v84 = vld [vmem:[%s1 + $0x88] sm:$0xf]
  %v85 = vld [vmem:[%s1 + $0x8c] sm:$0xf]
  %v86 = vld [vmem:[%s2] sm:$0x1]
  %v88 = vlaneseq
  %v89 = vshrl.u32 %v88, 7
  %v90 = vsub.s32 0, %v89
  %v91 = vrot.slane %v86, %v90
  %v125 = vunpack.c.l.b16 %v18
  %v126 = vunpack.c.h.b16 %v18
  %v127 = vunpack.c.l.b16 %v19
  %v128 = vunpack.c.l.b16 %v20
  %v129 = vunpack.c.h.b16 %v20
  %v130 = vunpack.c.l.b16 %v21
  %v131 = vunpack.c.l.b16 %v22
  %v132 = vunpack.c.h.b16 %v22
  %v133 = vunpack.c.l.b16 %v23
  %v134 = vunpack.c.l.b16 %v24
  %v135 = vunpack.c.h.b16 %v24
  %v136 = vunpack.c.l.b16 %v25
  %v137 = vunpack.c.l.b16 %v26
  %v138 = vunpack.c.h.b16 %v26
  %v139 = vunpack.c.l.b16 %v27
  %v140 = vunpack.c.l.b16 %v28
  %v141 = vunpack.c.h.b16 %v28
  %v142 = vunpack.c.l.b16 %v29
  %v143 = vunpack.c.l.b16 %v30
  %v144 = vunpack.c.h.b16 %v30
  %v145 = vunpack.c.l.b16 %v31
  %v146 = vunpack.c.l.b16 %v32
  %v147 = vunpack.c.h.b16 %v32
  %v148 = vunpack.c.l.b16 %v33
  %v149 = vunpack.c.l.b16 %v34
  %v150 = vunpack.c.h.b16 %v34
  %v151 = vunpack.c.l.b16 %v35
  %v152 = vunpack.c.l.b16 %v36
  %v153 = vunpack.c.h.b16 %v36
  %v154 = vunpack.c.l.b16 %v37
  %v155 = vunpack.c.l.b16 %v38
  %v156 = vunpack.c.h.b16 %v38
  %v157 = vunpack.c.l.b16 %v39
  %v158 = vunpack.c.l.b16 %v40
  %v159 = vunpack.c.h.b16 %v40
  %v160 = vunpack.c.l.b16 %v41
  %v161 = vunpack.c.l.b16 %v42
  %v162 = vunpack.c.h.b16 %v42
  %v163 = vunpack.c.l.b16 %v43
  %v164 = vunpack.c.l.b16 %v44
  %v165 = vunpack.c.h.b16 %v44
  %v166 = vunpack.c.l.b16 %v45
  %v167 = vunpack.c.l.b16 %v46
  %v168 = vunpack.c.h.b16 %v46
  %v169 = vunpack.c.l.b16 %v47
  %v170 = vunpack.c.l.b16 %v48
  %v171 = vunpack.c.h.b16 %v48
  %v172 = vunpack.c.l.b16 %v49
  %v173 = vpack.c.b16 %v128, %v125
  %v174 = vpack.c.b16 %v129, %v126
  %v175 = vpack.c.b16 %v130, %v127
  %v176 = vpack.c.b16 %v134, %v131
  %v177 = vpack.c.b16 %v135, %v132
  %v178 = vpack.c.b16 %v136, %v133
  %v179 = vpack.c.b16 %v140, %v137
  %v180 = vpack.c.b16 %v141, %v138
  %v181 = vpack.c.b16 %v142, %v139
  %v182 = vpack.c.b16 %v146, %v143
  %v183 = vpack.c.b16 %v147, %v144
  %v184 = vpack.c.b16 %v148, %v145
  %v185 = vpack.c.b16 %v152, %v149
  %v186 = vpack.c.b16 %v153, %v150
  %v187 = vpack.c.b16 %v154, %v151
  %v188 = vpack.c.b16 %v158, %v155
  %v189 = vpack.c.b16 %v159, %v156
  %v190 = vpack.c.b16 %v160, %v157
  %v191 = vpack.c.b16 %v164, %v161
  %v192 = vpack.c.b16 %v165, %v162
  %v193 = vpack.c.b16 %v166, %v163
  %v194 = vpack.c.b16 %v170, %v167
  %v195 = vpack.c.b16 %v171, %v168
  %v196 = vpack.c.b16 %v172, %v169
  %v249 = vunpack.c.l.b16 %v50
  %v250 = vunpack.c.l.b16 %v51
  %v251 = vunpack.c.l.b16 %v52
  %v252 = vunpack.c.l.b16 %v53
  %v253 = vunpack.c.l.b16 %v54
  %v254 = vunpack.c.l.b16 %v55
  %v255 = vunpack.c.l.b16 %v56
  %v256 = vunpack.c.l.b16 %v57
  %v257 = vunpack.c.l.b16 %v58
  %v258 = vunpack.c.l.b16 %v59
  %v259 = vunpack.c.l.b16 %v60
  %v260 = vunpack.c.l.b16 %v61
  %v261 = vunpack.c.l.b16 %v62
  %v262 = vunpack.c.l.b16 %v63
  %v263 = vunpack.c.l.b16 %v64
  %v264 = vunpack.c.l.b16 %v65
  %v265 = vunpack.c.l.b16 %v66
  %v266 = vunpack.c.l.b16 %v67
  %v267 = vunpack.c.l.b16 %v68
  %v268 = vunpack.c.l.b16 %v69
  %v269 = vunpack.c.l.b16 %v70
  %v270 = vunpack.c.l.b16 %v71
  %v271 = vunpack.c.l.b16 %v72
  %v272 = vunpack.c.l.b16 %v73
  %v273 = vunpack.c.l.b16 %v74
  %v274 = vunpack.c.l.b16 %v75
  %v275 = vunpack.c.l.b16 %v76
  %v276 = vunpack.c.l.b16 %v77
  %v277 = vunpack.c.l.b16 %v78
  %v278 = vunpack.c.l.b16 %v79
  %v279 = vunpack.c.l.b16 %v80
  %v280 = vunpack.c.l.b16 %v81
  %v281 = vunpack.c.l.b16 %v82
  %v282 = vunpack.c.l.b16 %v83
  %v283 = vunpack.c.l.b16 %v84
  %v284 = vunpack.c.l.b16 %v85
  %v285 = vpack.c.b16 %v250, %v249
  %v286 = vpack.c.b16 %v252, %v251
  %v287 = vpack.c.b16 %v254, %v253
  %v288 = vpack.c.b16 %v256, %v255
  %v289 = vpack.c.b16 %v258, %v257
  %v290 = vpack.c.b16 %v260, %v259
  %v291 = vpack.c.b16 %v262, %v261
  %v292 = vpack.c.b16 %v264, %v263
  %v293 = vpack.c.b16 %v266, %v265
  %v294 = vpack.c.b16 %v268, %v267
  %v295 = vpack.c.b16 %v270, %v269
  %v296 = vpack.c.b16 %v272, %v271
  %v297 = vpack.c.b16 %v274, %v273
  %v298 = vpack.c.b16 %v276, %v275
  %v299 = vpack.c.b16 %v278, %v277
  %v300 = vpack.c.b16 %v280, %v279
  %v301 = vpack.c.b16 %v282, %v281
  %v302 = vpack.c.b16 %v284, %v283
  %vm321 = vcmask 261120
  %v323 = vsel %vm321, %v175, 0
  %v326 = vsel %vm321, %v178, 0
  %v329 = vsel %vm321, %v181, 0
  %v332 = vsel %vm321, %v184, 0
  %v335 = vsel %vm321, %v187, 0
  %v338 = vsel %vm321, %v190, 0
  %v341 = vsel %vm321, %v193, 0
  %v344 = vsel %vm321, %v196, 0
  %346 = vmatprep.subr.bf16.mxu0 0
  %347 = vmatpush1.bf16.msra.mxu0 %v292
  %348 = vmatprep.subr.bf16.mxu0 0
  %349 = vmatpush1.bf16.msra.mxu0 %v291
  %350 = vmatprep.subr.bf16.mxu0 0
  %351 = vmatpush1.bf16.msra.mxu0 %v290
  %352 = vmatprep.subr.bf16.mxu0 0
  %353 = vmatpush1.bf16.msra.mxu0 %v289
  %354 = vmatprep.subr.bf16.mxu0 0
  %355 = vmatpush1.bf16.msra.mxu0 %v288
  %356 = vmatprep.subr.bf16.mxu0 0
  %357 = vmatpush1.bf16.msra.mxu0 %v287
  %358 = vmatprep.subr.bf16.mxu0 0
  %359 = vmatpush1.bf16.msra.mxu0 %v286
  %360 = vmatprep.subr.bf16.mxu0 0
  %361 = vmatpush1.bf16.msra.mxu0 %v285
  %362 = vmatprep.subr.bf16.mxu0 0
  %363 = vmatpush2.bf16.msra.mxu0 %v300
  %364 = vmatprep.subr.bf16.mxu0 0
  %365 = vmatpush2.bf16.msra.mxu0 %v299
  %366 = vmatprep.subr.bf16.mxu0 0
  %367 = vmatpush2.bf16.msra.mxu0 %v298
  %368 = vmatprep.subr.bf16.mxu0 0
  %369 = vmatpush2.bf16.msra.mxu0 %v297
  %370 = vmatprep.subr.bf16.mxu0 0
  %371 = vmatpush2.bf16.msra.mxu0 %v296
  %372 = vmatprep.subr.bf16.mxu0 0
  %373 = vmatpush2.bf16.msra.mxu0 %v295
  %374 = vmatprep.subr.bf16.mxu0 0
  %375 = vmatpush2.bf16.msra.mxu0 %v294
  %376 = vmatprep.subr.bf16.mxu0 0
  %377 = vmatpush2.bf16.msra.mxu0 %v293
  %378 = vmatprep.mubr.bf16.mxu0 %v174
  %379 = vmatmul.mubr.bf16.gmra.mxu0 %v173
  %v380 = vpop.f32.mrf.mxu0
  %v381 = vadd.f32 %v91, %v380
  %v382 = vpop.f32.mrf.mxu0
  %v383 = vpop.f32.mrf.mxu0
  %v384 = vadd.f32 %v91, %v383
  %v385 = vpop.f32.mrf.mxu0
  %386 = vmatprep.mubr.bf16.mxu0 %v177
  %387 = vmatmul.mubr.bf16.gmra.mxu0 %v176
  %v388 = vpop.f32.mrf.mxu0
  %v389 = vadd.f32 %v91, %v388
  %v390 = vpop.f32.mrf.mxu0
  %v391 = vpop.f32.mrf.mxu0
  %v392 = vadd.f32 %v91, %v391
  %v393 = vpop.f32.mrf.mxu0
  %394 = vmatprep.mubr.bf16.mxu0 %v180
  %395 = vmatmul.mubr.bf16.gmra.mxu0 %v179
  %v396 = vpop.f32.mrf.mxu0
  %v397 = vadd.f32 %v91, %v396
  %v398 = vpop.f32.mrf.mxu0
  %v399 = vpop.f32.mrf.mxu0
  %v400 = vadd.f32 %v91, %v399
  %v401 = vpop.f32.mrf.mxu0
  %402 = vmatprep.mubr.bf16.mxu0 %v183
  %403 = vmatmul.mubr.bf16.gmra.mxu0 %v182
  %v404 = vpop.f32.mrf.mxu0
  %v405 = vadd.f32 %v91, %v404
  %v406 = vpop.f32.mrf.mxu0
  %v407 = vpop.f32.mrf.mxu0
  %v408 = vadd.f32 %v91, %v407
  %v409 = vpop.f32.mrf.mxu0
  %410 = vmatprep.mubr.bf16.mxu0 %v186
  %411 = vmatmul.mubr.bf16.gmra.mxu0 %v185
  %v412 = vpop.f32.mrf.mxu0
  %v413 = vadd.f32 %v91, %v412
  %v414 = vpop.f32.mrf.mxu0
  %v415 = vpop.f32.mrf.mxu0
  %v416 = vadd.f32 %v91, %v415
  %v417 = vpop.f32.mrf.mxu0
  %418 = vmatprep.mubr.bf16.mxu0 %v189
  %419 = vmatmul.mubr.bf16.gmra.mxu0 %v188
  %v420 = vpop.f32.mrf.mxu0
  %v421 = vadd.f32 %v91, %v420
  %v422 = vpop.f32.mrf.mxu0
  %v423 = vpop.f32.mrf.mxu0
  %v424 = vadd.f32 %v91, %v423
  %v425 = vpop.f32.mrf.mxu0
  %426 = vmatprep.mubr.bf16.mxu0 %v192
  %427 = vmatmul.mubr.bf16.gmra.mxu0 %v191
  %v428 = vpop.f32.mrf.mxu0
  %v429 = vadd.f32 %v91, %v428
  %v430 = vpop.f32.mrf.mxu0
  %v431 = vpop.f32.mrf.mxu0
  %v432 = vadd.f32 %v91, %v431
  %v433 = vpop.f32.mrf.mxu0
  %434 = vmatprep.mubr.bf16.mxu0 %v195
  %435 = vmatmul.mubr.bf16.gmra.mxu0 %v194
  %v436 = vpop.f32.mrf.mxu0
  %v437 = vadd.f32 %v91, %v436
  %v438 = vpop.f32.mrf.mxu0
  %v439 = vpop.f32.mrf.mxu0
  %v440 = vadd.f32 %v91, %v439
  %v441 = vpop.f32.mrf.mxu0
  %442 = vdwg.mxu0
  %443 = vmatprep.subr.bf16.mxu0 0
  %444 = vmatpush1.bf16.msra.mxu0 0
  %445 = vmatprep.subr.bf16.mxu0 0
  %446 = vmatpush1.bf16.msra.mxu0 0
  %447 = vmatprep.subr.bf16.mxu0 0
  %448 = vmatpush1.bf16.msra.mxu0 0
  %449 = vmatprep.subr.bf16.mxu0 0
  %450 = vmatpush1.bf16.msra.mxu0 0
  %451 = vmatprep.subr.bf16.mxu0 0
  %452 = vmatpush1.bf16.msra.mxu0 0
  %453 = vmatprep.subr.bf16.mxu0 0
  %454 = vmatpush1.bf16.msra.mxu0 0
  %455 = vmatprep.subr.bf16.mxu0 0
  %456 = vmatpush1.bf16.msra.mxu0 %v302
  %457 = vmatprep.subr.bf16.mxu0 0
  %458 = vmatpush1.bf16.msra.mxu0 %v301
  %459 = vmatprep.subr.bf16.mxu0 0
  %460 = vmatpush2.bf16.msra.mxu0 0
  %461 = vmatprep.subr.bf16.mxu0 0
  %462 = vmatpush2.bf16.msra.mxu0 0
  %463 = vmatprep.subr.bf16.mxu0 0
  %464 = vmatpush2.bf16.msra.mxu0 0
  %465 = vmatprep.subr.bf16.mxu0 0
  %466 = vmatpush2.bf16.msra.mxu0 0
  %467 = vmatprep.subr.bf16.mxu0 0
  %468 = vmatpush2.bf16.msra.mxu0 0
  %469 = vmatprep.subr.bf16.mxu0 0
  %470 = vmatpush2.bf16.msra.mxu0 0
  %471 = vmatprep.subr.bf16.mxu0 0
  %472 = vmatpush2.bf16.msra.mxu0 0
  %473 = vmatprep.subr.bf16.mxu0 0
  %474 = vmatpush2.bf16.msra.mxu0 0
  %475 = vmatprep.mubr.bf16.mxu0 0
  %476 = vmatmul.mubr.bf16.gmra.mxu0 %v323
  %v477 = vpop.f32.mrf.mxu0
  %v478 = vadd.f32 %v381, %v477
  %v479 = vpop.f32.mrf.mxu0
  %v480 = vpop.f32.mrf.mxu0
  %v481 = vadd.f32 %v384, %v480
  %v482 = vpop.f32.mrf.mxu0
  %483 = vmatprep.mubr.bf16.mxu0 0
  %484 = vmatmul.mubr.bf16.gmra.mxu0 %v326
  %v485 = vpop.f32.mrf.mxu0
  %v486 = vadd.f32 %v389, %v485
  %v487 = vpop.f32.mrf.mxu0
  %v488 = vpop.f32.mrf.mxu0
  %v489 = vadd.f32 %v392, %v488
  %v490 = vpop.f32.mrf.mxu0
  %491 = vmatprep.mubr.bf16.mxu0 0
  %492 = vmatmul.mubr.bf16.gmra.mxu0 %v329
  %v493 = vpop.f32.mrf.mxu0
  %v494 = vadd.f32 %v397, %v493
  %v495 = vpop.f32.mrf.mxu0
  %v496 = vpop.f32.mrf.mxu0
  %v497 = vadd.f32 %v400, %v496
  %v498 = vpop.f32.mrf.mxu0
  %499 = vmatprep.mubr.bf16.mxu0 0
  %500 = vmatmul.mubr.bf16.gmra.mxu0 %v332
  %v501 = vpop.f32.mrf.mxu0
  %v502 = vadd.f32 %v405, %v501
  %v503 = vpop.f32.mrf.mxu0
  %v504 = vpop.f32.mrf.mxu0
  %v505 = vadd.f32 %v408, %v504
  %v506 = vpop.f32.mrf.mxu0
  %507 = vmatprep.mubr.bf16.mxu0 0
  %508 = vmatmul.mubr.bf16.gmra.mxu0 %v335
  %v509 = vpop.f32.mrf.mxu0
  %v510 = vadd.f32 %v413, %v509
  %v511 = vpop.f32.mrf.mxu0
  %v512 = vpop.f32.mrf.mxu0
  %v513 = vadd.f32 %v416, %v512
  %v514 = vpop.f32.mrf.mxu0
  %515 = vmatprep.mubr.bf16.mxu0 0
  %516 = vmatmul.mubr.bf16.gmra.mxu0 %v338
  %v517 = vpop.f32.mrf.mxu0
  %v518 = vadd.f32 %v421, %v517
  %v519 = vpop.f32.mrf.mxu0
  %v520 = vpop.f32.mrf.mxu0
  %v521 = vadd.f32 %v424, %v520
  %v522 = vpop.f32.mrf.mxu0
  %523 = vmatprep.mubr.bf16.mxu0 0
  %524 = vmatmul.mubr.bf16.gmra.mxu0 %v341
  %v525 = vpop.f32.mrf.mxu0
  %v526 = vadd.f32 %v429, %v525
  %v527 = vpop.f32.mrf.mxu0
  %v528 = vpop.f32.mrf.mxu0
  %v529 = vadd.f32 %v432, %v528
  %v530 = vpop.f32.mrf.mxu0
  %531 = vmatprep.mubr.bf16.mxu0 0
  %532 = vmatmul.mubr.bf16.gmra.mxu0 %v344
  %v533 = vpop.f32.mrf.mxu0
  %v534 = vadd.f32 %v437, %v533
  %v535 = vpop.f32.mrf.mxu0
  %v536 = vpop.f32.mrf.mxu0
  %v537 = vadd.f32 %v440, %v536
  %v538 = vpop.f32.mrf.mxu0
  %539 = vdwg.mxu0
  %vm540 = vcmp.ge.f32.partialorder %v478, 0.0
  %vm541 = vcmp.ge.f32.partialorder %v481, 0.0
  %vm542 = vcmp.ge.f32.partialorder %v486, 0.0
  %vm543 = vcmp.ge.f32.partialorder %v489, 0.0
  %vm544 = vcmp.ge.f32.partialorder %v494, 0.0
  %vm545 = vcmp.ge.f32.partialorder %v497, 0.0
  %vm546 = vcmp.ge.f32.partialorder %v502, 0.0
  %vm547 = vcmp.ge.f32.partialorder %v505, 0.0
  %vm548 = vcmp.ge.f32.partialorder %v510, 0.0
  %vm549 = vcmp.ge.f32.partialorder %v513, 0.0
  %vm550 = vcmp.ge.f32.partialorder %v518, 0.0
  %vm551 = vcmp.ge.f32.partialorder %v521, 0.0
  %vm552 = vcmp.ge.f32.partialorder %v526, 0.0
  %vm553 = vcmp.ge.f32.partialorder %v529, 0.0
  %vm554 = vcmp.ge.f32.partialorder %v534, 0.0
  %vm555 = vcmp.ge.f32.partialorder %v537, 0.0
  %v556 = vld [vmem:[%s3] sm:$0x1]
  %v558 = vlaneseq
  %v559 = vshrl.u32 %v558, 7
  %v560 = vsub.s32 0, %v559
  %v561 = vrot.slane %v556, %v560
  %v563 = vmul.f32 %v561, %v478
  %v564 = vmul.f32 %v561, %v481
  %v565 = vmul.f32 %v561, %v486
  %v566 = vmul.f32 %v561, %v489
  %v567 = vmul.f32 %v561, %v494
  %v568 = vmul.f32 %v561, %v497
  %v569 = vmul.f32 %v561, %v502
  %v570 = vmul.f32 %v561, %v505
  %v571 = vmul.f32 %v561, %v510
  %v572 = vmul.f32 %v561, %v513
  %v573 = vmul.f32 %v561, %v518
  %v574 = vmul.f32 %v561, %v521
  %v575 = vmul.f32 %v561, %v526
  %v576 = vmul.f32 %v561, %v529
  %v577 = vmul.f32 %v561, %v534
  %v578 = vmul.f32 %v561, %v537
  %v579 = vsel %vm540, %v478, %v563
  %v580 = vsel %vm541, %v481, %v564
  %v581 = vsel %vm542, %v486, %v565
  %v582 = vsel %vm543, %v489, %v566
  %v583 = vsel %vm544, %v494, %v567
  %v584 = vsel %vm545, %v497, %v568
  %v585 = vsel %vm546, %v502, %v569
  %v586 = vsel %vm547, %v505, %v570
  %v587 = vsel %vm548, %v510, %v571
  %v588 = vsel %vm549, %v513, %v572
  %v589 = vsel %vm550, %v518, %v573
  %v590 = vsel %vm551, %v521, %v574
  %v591 = vsel %vm552, %v526, %v575
  %v592 = vsel %vm553, %v529, %v576
  %v593 = vsel %vm554, %v534, %v577
  %v594 = vsel %vm555, %v537, %v578
  %v595 = vpack.c.bf16 %v580, %v579
  %v596 = vpack.c.bf16 %v582, %v581
  %v597 = vpack.c.bf16 %v584, %v583
  %v598 = vpack.c.bf16 %v586, %v585
  %v599 = vpack.c.bf16 %v588, %v587
  %v600 = vpack.c.bf16 %v590, %v589
  %v601 = vpack.c.bf16 %v592, %v591
  %v602 = vpack.c.bf16 %v594, %v593
  %v611 = vunpack.c.l.b16 %v595
  %v612 = vunpack.c.h.b16 %v595
  %v613 = vunpack.c.l.b16 %v596
  %v614 = vunpack.c.h.b16 %v596
  %v615 = vunpack.c.l.b16 %v597
  %v616 = vunpack.c.h.b16 %v597
  %v617 = vunpack.c.l.b16 %v598
  %v618 = vunpack.c.h.b16 %v598
  %v619 = vunpack.c.l.b16 %v599
  %v620 = vunpack.c.h.b16 %v599
  %v621 = vunpack.c.l.b16 %v600
  %v622 = vunpack.c.h.b16 %v600
  %v623 = vunpack.c.l.b16 %v601
  %v624 = vunpack.c.h.b16 %v601
  %v625 = vunpack.c.l.b16 %v602
  %v626 = vunpack.c.h.b16 %v602
  %v627 = vpack.c.b16 %v611, %v611
  %v628 = vpack.c.b16 %v612, %v612
  %v629 = vpack.c.b16 %v613, %v613
  %v630 = vpack.c.b16 %v614, %v614
  %v631 = vpack.c.b16 %v615, %v615
  %v632 = vpack.c.b16 %v616, %v616
  %v633 = vpack.c.b16 %v617, %v617
  %v634 = vpack.c.b16 %v618, %v618
  %v635 = vpack.c.b16 %v619, %v619
  %v636 = vpack.c.b16 %v620, %v620
  %v637 = vpack.c.b16 %v621, %v621
  %v638 = vpack.c.b16 %v622, %v622
  %v639 = vpack.c.b16 %v623, %v623
  %v640 = vpack.c.b16 %v624, %v624
  %v641 = vpack.c.b16 %v625, %v625
  %v642 = vpack.c.b16 %v626, %v626
  %659 = vst [vmem:[%s4] sm:$0xf] %v627
  %660 = vst [vmem:[%s4 + $0x4] sm:$0xf] %v628
  %661 = vst [vmem:[%s4 + $0x8] sm:$0xf] %v629
  %662 = vst [vmem:[%s4 + $0xc] sm:$0xf] %v630
  %663 = vst [vmem:[%s4 + $0x10] sm:$0xf] %v631
  %664 = vst [vmem:[%s4 + $0x14] sm:$0xf] %v632
  %665 = vst [vmem:[%s4 + $0x18] sm:$0xf] %v633
  %666 = vst [vmem:[%s4 + $0x1c] sm:$0xf] %v634
  %667 = vst [vmem:[%s4 + $0x20] sm:$0xf] %v635
  %668 = vst [vmem:[%s4 + $0x24] sm:$0xf] %v636
  %669 = vst [vmem:[%s4 + $0x28] sm:$0xf] %v637
  %670 = vst [vmem:[%s4 + $0x2c] sm:$0xf] %v638
  %671 = vst [vmem:[%s4 + $0x30] sm:$0xf] %v639
  %672 = vst [vmem:[%s4 + $0x34] sm:$0xf] %v640
  %673 = vst [vmem:[%s4 + $0x38] sm:$0xf] %v641
  %674 = vst [vmem:[%s4 + $0x3c] sm:$0xf] %v642
  // Predicated region
  $region18: #{encoder_forward.9} parent=0 // pred_check
    _
  $region19: #{encoder_forward.9} parent=0 // pred_check_branch
    %676 = sbr.rel (0) target = $region21
  $region20: #{encoder_forward.9} parent=0 // pred_region
    _
  $region21: #{encoder_forward.9} parent=0 // pred_fallthru
    _
  // Predicated region
  $region22: #{encoder_forward.9} parent=0 // pred_check
    _
  $region23: #{encoder_forward.9} parent=0 // pred_check_branch
    %678 = sbr.rel (0) target = $region25
  $region24: #{encoder_forward.9} parent=0 // pred_region
    _
  $region25: #{encoder_forward.9} parent=0 // pred_fallthru
    _

// kernel: encoder_forward.10
$region0: #{encoder_forward.10}
  #allocation0 [shape = 'u32[]', space=smem, size = 0x4, offset = 0x4, fixed_abs, tag = 'smem constant byte address 0x4 - core index']
  #allocation1 [shape = 'u32[144,128]{1,0:T(1,128)}', space=vmem, size = 0x12000, scoped, tag = 'internal scratch']
  %s0 = inlined_call_operand.vmem [shape: bf16[32,288], index: 0, kind: input, shape index: {}]
  %s1 = inlined_call_operand.vmem [shape: bf16[288,128], index: 1, kind: input, shape index: {}]
  %s2 = inlined_call_operand.vmem [shape: f32[1,128], index: 2, kind: input, shape index: {}]
  %s3 = inlined_call_operand.vmem [shape: f32[1,128], index: 3, kind: input, shape index: {}]
  %s4 = inlined_call_operand.vmem [shape: bf16[32,128], index: 4, kind: output, shape index: {}]
  %s5 = sld [smem:[#allocation0]]
  $region26: #{encoder_forward.10} parent=0
    _
  %s7 = ssub.s32 1, %s5
  %s8 = scalar_select 0, %s7, %s5
  // Predicated region
  $region2: #{encoder_forward.10} parent=0 // pred_check
    _
  $region3: #{encoder_forward.10} parent=0 // pred_check_branch
    %10 = sbr.rel (0) target = $region5
  $region4: #{encoder_forward.10} parent=0 // pred_region
    _
  $region5: #{encoder_forward.10} parent=0 // pred_fallthru
    _
  // Predicated region
  $region6: #{encoder_forward.10} parent=0 // pred_check
    _
  $region7: #{encoder_forward.10} parent=0 // pred_check_branch
    %12 = sbr.rel (0) target = $region9
  $region8: #{encoder_forward.10} parent=0 // pred_region
    _
  $region9: #{encoder_forward.10} parent=0 // pred_fallthru
    _
  // Predicated region
  $region10: #{encoder_forward.10} parent=0 // pred_check
    _
  $region11: #{encoder_forward.10} parent=0 // pred_check_branch
    %14 = sbr.rel (0) target = $region13
  $region12: #{encoder_forward.10} parent=0 // pred_region
    _
  $region13: #{encoder_forward.10} parent=0 // pred_fallthru
    _
  // Predicated region
  $region14: #{encoder_forward.10} parent=0 // pred_check
    _
  $region15: #{encoder_forward.10} parent=0 // pred_check_branch
    %16 = sbr.rel (0) target = $region17
  $region16: #{encoder_forward.10} parent=0 // pred_region
    _
  $region17: #{encoder_forward.10} parent=0 // pred_fallthru
    _
  %v18 = vld [vmem:[%s0] sm:$0xff]
  %v19 = vld [vmem:[%s0 + $0x8] sm:$0xf]
  %v20 = vld [vmem:[%s0 + $0xc] sm:$0xff]
  %v21 = vld [vmem:[%s0 + $0x14] sm:$0xf]
  %v22 = vld [vmem:[%s0 + $0x18] sm:$0xff]
  %v23 = vld [vmem:[%s0 + $0x20] sm:$0xf]
  %v24 = vld [vmem:[%s0 + $0x24] sm:$0xff]
  %v25 = vld [vmem:[%s0 + $0x2c] sm:$0xf]
  %v26 = vld [vmem:[%s1] sm:$0xf]
  %v27 = vld [vmem:[%s1 + $0x4] sm:$0xf]
  %v28 = vld [vmem:[%s1 + $0x8] sm:$0xf]
  %v29 = vld [vmem:[%s1 + $0xc] sm:$0xf]
  %v30 = vld [vmem:[%s1 + $0x10] sm:$0xf]
  %v31 = vld [vmem:[%s1 + $0x14] sm:$0xf]
  %v32 = vld [vmem:[%s1 + $0x18] sm:$0xf]
  %v33 = vld [vmem:[%s1 + $0x1c] sm:$0xf]
  %v34 = vld [vmem:[%s1 + $0x20] sm:$0xf]
  %v35 = vld [vmem:[%s1 + $0x24] sm:$0xf]
  %v36 = vld [vmem:[%s1 + $0x28] sm:$0xf]
  %v37 = vld [vmem:[%s1 + $0x2c] sm:$0xf]
  %v38 = vld [vmem:[%s1 + $0x30] sm:$0xf]
  %v39 = vld [vmem:[%s1 + $0x34] sm:$0xf]
  %v40 = vld [vmem:[%s1 + $0x38] sm:$0xf]
  %v41 = vld [vmem:[%s1 + $0x3c] sm:$0xf]
  %v42 = vld [vmem:[%s1 + $0x40] sm:$0xf]
  %v43 = vld [vmem:[%s1 + $0x44] sm:$0xf]
  %v44 = vld [vmem:[%s1 + $0x48] sm:$0xf]
  %v45 = vld [vmem:[%s1 + $0x4c] sm:$0xf]
  %v46 = vld [vmem:[%s1 + $0x50] sm:$0xf]
  %v47 = vld [vmem:[%s1 + $0x54] sm:$0xf]
  %v48 = vld [vmem:[%s1 + $0x58] sm:$0xf]
  %v49 = vld [vmem:[%s1 + $0x5c] sm:$0xf]
  %v50 = vld [vmem:[%s1 + $0x60] sm:$0xf]
  %v51 = vld [vmem:[%s1 + $0x64] sm:$0xf]
  %v52 = vld [vmem:[%s1 + $0x68] sm:$0xf]
  %v53 = vld [vmem:[%s1 + $0x6c] sm:$0xf]
  %v54 = vld [vmem:[%s1 + $0x70] sm:$0xf]
  %v55 = vld [vmem:[%s1 + $0x74] sm:$0xf]
  %v56 = vld [vmem:[%s1 + $0x78] sm:$0xf]
  %v57 = vld [vmem:[%s1 + $0x7c] sm:$0xf]
  %v58 = vld [vmem:[%s1 + $0x80] sm:$0xf]
  %v59 = vld [vmem:[%s1 + $0x84] sm:$0xf]
  %v60 = vld [vmem:[%s1 + $0x88] sm:$0xf]
  %v61 = vld [vmem:[%s1 + $0x8c] sm:$0xf]
  %v62 = vld [vmem:[%s2] sm:$0x1]
  %v64 = vlaneseq
  %v65 = vshrl.u32 %v64, 7
  %v66 = vsub.s32 0, %v65
  %v67 = vrot.slane %v62, %v66
  %v77 = vunpack.c.l.b16 %v18
  %v78 = vunpack.c.h.b16 %v18
  %v79 = vunpack.c.l.b16 %v19
  %v80 = vunpack.c.l.b16 %v20
  %v81 = vunpack.c.h.b16 %v20
  %v82 = vunpack.c.l.b16 %v21
  %v83 = vunpack.c.l.b16 %v22
  %v84 = vunpack.c.h.b16 %v22
  %v85 = vunpack.c.l.b16 %v23
  %v86 = vunpack.c.l.b16 %v24
  %v87 = vunpack.c.h.b16 %v24
  %v88 = vunpack.c.l.b16 %v25
  %v89 = vpack.c.b16 %v80, %v77
  %v90 = vpack.c.b16 %v81, %v78
  %v91 = vpack.c.b16 %v82, %v79
  %v92 = vpack.c.b16 %v86, %v83
  %v93 = vpack.c.b16 %v87, %v84
  %v94 = vpack.c.b16 %v88, %v85
  %v135 = vunpack.c.l.b16 %v26
  %v136 = vunpack.c.l.b16 %v27
  %v137 = vunpack.c.l.b16 %v28
  %v138 = vunpack.c.l.b16 %v29
  %v139 = vunpack.c.l.b16 %v30
  %v140 = vunpack.c.l.b16 %v31
  %v141 = vunpack.c.l.b16 %v32
  %v142 = vunpack.c.l.b16 %v33
  %v143 = vunpack.c.l.b16 %v34
  %v144 = vunpack.c.l.b16 %v35
  %v145 = vunpack.c.l.b16 %v36
  %v146 = vunpack.c.l.b16 %v37
  %v147 = vunpack.c.l.b16 %v38
  %v148 = vunpack.c.l.b16 %v39
  %v149 = vunpack.c.l.b16 %v40
  %v150 = vunpack.c.l.b16 %v41
  %v151 = vunpack.c.l.b16 %v42
  %v152 = vunpack.c.l.b16 %v43
  %v153 = vunpack.c.l.b16 %v44
  %v154 = vunpack.c.l.b16 %v45
  %v155 = vunpack.c.l.b16 %v46
  %v156 = vunpack.c.l.b16 %v47
  %v157 = vunpack.c.l.b16 %v48
  %v158 = vunpack.c.l.b16 %v49
  %v159 = vunpack.c.l.b16 %v50
  %v160 = vunpack.c.l.b16 %v51
  %v161 = vunpack.c.l.b16 %v52
  %v162 = vunpack.c.l.b16 %v53
  %v163 = vunpack.c.l.b16 %v54
  %v164 = vunpack.c.l.b16 %v55
  %v165 = vunpack.c.l.b16 %v56
  %v166 = vunpack.c.l.b16 %v57
  %v167 = vunpack.c.l.b16 %v58
  %v168 = vunpack.c.l.b16 %v59
  %v169 = vunpack.c.l.b16 %v60
  %v170 = vunpack.c.l.b16 %v61
  %v171 = vpack.c.b16 %v136, %v135
  %v172 = vpack.c.b16 %v138, %v137
  %v173 = vpack.c.b16 %v140, %v139
  %v174 = vpack.c.b16 %v142, %v141
  %v175 = vpack.c.b16 %v144, %v143
  %v176 = vpack.c.b16 %v146, %v145
  %v177 = vpack.c.b16 %v148, %v147
  %v178 = vpack.c.b16 %v150, %v149
  %v179 = vpack.c.b16 %v152, %v151
  %v180 = vpack.c.b16 %v154, %v153
  %v181 = vpack.c.b16 %v156, %v155
  %v182 = vpack.c.b16 %v158, %v157
  %v183 = vpack.c.b16 %v160, %v159
  %v184 = vpack.c.b16 %v162, %v161
  %v185 = vpack.c.b16 %v164, %v163
  %v186 = vpack.c.b16 %v166, %v165
  %v187 = vpack.c.b16 %v168, %v167
  %v188 = vpack.c.b16 %v170, %v169
  %vm207 = vcmask 261120
  %v209 = vsel %vm207, %v91, 0
  %v212 = vsel %vm207, %v94, 0
  %214 = vmatprep.subr.bf16.mxu0 0
  %215 = vmatpush1.bf16.msra.mxu0 %v178
  %216 = vmatprep.subr.bf16.mxu0 0
  %217 = vmatpush1.bf16.msra.mxu0 %v177
  %218 = vmatprep.subr.bf16.mxu0 0
  %219 = vmatpush1.bf16.msra.mxu0 %v176
  %220 = vmatprep.subr.bf16.mxu0 0
  %221 = vmatpush1.bf16.msra.mxu0 %v175
  %222 = vmatprep.subr.bf16.mxu0 0
  %223 = vmatpush1.bf16.msra.mxu0 %v174
  %224 = vmatprep.subr.bf16.mxu0 0
  %225 = vmatpush1.bf16.msra.mxu0 %v173
  %226 = vmatprep.subr.bf16.mxu0 0
  %227 = vmatpush1.bf16.msra.mxu0 %v172
  %228 = vmatprep.subr.bf16.mxu0 0
  %229 = vmatpush1.bf16.msra.mxu0 %v171
  %230 = vmatprep.subr.bf16.mxu0 0
  %231 = vmatpush2.bf16.msra.mxu0 %v186
  %232 = vmatprep.subr.bf16.mxu0 0
  %233 = vmatpush2.bf16.msra.mxu0 %v185
  %234 = vmatprep.subr.bf16.mxu0 0
  %235 = vmatpush2.bf16.msra.mxu0 %v184
  %236 = vmatprep.subr.bf16.mxu0 0
  %237 = vmatpush2.bf16.msra.mxu0 %v183
  %238 = vmatprep.subr.bf16.mxu0 0
  %239 = vmatpush2.bf16.msra.mxu0 %v182
  %240 = vmatprep.subr.bf16.mxu0 0
  %241 = vmatpush2.bf16.msra.mxu0 %v181
  %242 = vmatprep.subr.bf16.mxu0 0
  %243 = vmatpush2.bf16.msra.mxu0 %v180
  %244 = vmatprep.subr.bf16.mxu0 0
  %245 = vmatpush2.bf16.msra.mxu0 %v179
  %246 = vmatprep.mubr.bf16.mxu0 %v90
  %247 = vmatmul.mubr.bf16.gmra.mxu0 %v89
  %v248 = vpop.f32.mrf.mxu0
  %v249 = vadd.f32 %v67, %v248
  %v250 = vpop.f32.mrf.mxu0
  %v251 = vpop.f32.mrf.mxu0
  %v252 = vadd.f32 %v67, %v251
  %v253 = vpop.f32.mrf.mxu0
  %254 = vmatprep.mubr.bf16.mxu0 %v93
  %255 = vmatmul.mubr.bf16.gmra.mxu0 %v92
  %v256 = vpop.f32.mrf.mxu0
  %v257 = vadd.f32 %v67, %v256
  %v258 = vpop.f32.mrf.mxu0
  %v259 = vpop.f32.mrf.mxu0
  %v260 = vadd.f32 %v67, %v259
  %v261 = vpop.f32.mrf.mxu0
  %262 = vdwg.mxu0
  %263 = vmatprep.subr.bf16.mxu0 0
  %264 = vmatpush1.bf16.msra.mxu0 0
  %265 = vmatprep.subr.bf16.mxu0 0
  %266 = vmatpush1.bf16.msra.mxu0 0
  %267 = vmatprep.subr.bf16.mxu0 0
  %268 = vmatpush1.bf16.msra.mxu0 0
  %269 = vmatprep.subr.bf16.mxu0 0
  %270 = vmatpush1.bf16.msra.mxu0 0
  %271 = vmatprep.subr.bf16.mxu0 0
  %272 = vmatpush1.bf16.msra.mxu0 0
  %273 = vmatprep.subr.bf16.mxu0 0
  %274 = vmatpush1.bf16.msra.mxu0 0
  %275 = vmatprep.subr.bf16.mxu0 0
  %276 = vmatpush1.bf16.msra.mxu0 %v188
  %277 = vmatprep.subr.bf16.mxu0 0
  %278 = vmatpush1.bf16.msra.mxu0 %v187
  %279 = vmatprep.subr.bf16.mxu0 0
  %280 = vmatpush2.bf16.msra.mxu0 0
  %281 = vmatprep.subr.bf16.mxu0 0
  %282 = vmatpush2.bf16.msra.mxu0 0
  %283 = vmatprep.subr.bf16.mxu0 0
  %284 = vmatpush2.bf16.msra.mxu0 0
  %285 = vmatprep.subr.bf16.mxu0 0
  %286 = vmatpush2.bf16.msra.mxu0 0
  %287 = vmatprep.subr.bf16.mxu0 0
  %288 = vmatpush2.bf16.msra.mxu0 0
  %289 = vmatprep.subr.bf16.mxu0 0
  %290 = vmatpush2.bf16.msra.mxu0 0
  %291 = vmatprep.subr.bf16.mxu0 0
  %292 = vmatpush2.bf16.msra.mxu0 0
  %293 = vmatprep.subr.bf16.mxu0 0
  %294 = vmatpush2.bf16.msra.mxu0 0
  %295 = vmatprep.mubr.bf16.mxu0 0
  %296 = vmatmul.mubr.bf16.gmra.mxu0 %v209
  %v297 = vpop.f32.mrf.mxu0
  %v298 = vadd.f32 %v249, %v297
  %v299 = vpop.f32.mrf.mxu0
  %v300 = vpop.f32.mrf.mxu0
  %v301 = vadd.f32 %v252, %v300
  %v302 = vpop.f32.mrf.mxu0
  %303 = vmatprep.mubr.bf16.mxu0 0
  %304 = vmatmul.mubr.bf16.gmra.mxu0 %v212
  %v305 = vpop.f32.mrf.mxu0
  %v306 = vadd.f32 %v257, %v305
  %v307 = vpop.f32.mrf.mxu0
  %v308 = vpop.f32.mrf.mxu0
  %v309 = vadd.f32 %v260, %v308
  %v310 = vpop.f32.mrf.mxu0
  %311 = vdwg.mxu0
  %vm312 = vcmp.ge.f32.partialorder %v298, 0.0
  %vm313 = vcmp.ge.f32.partialorder %v301, 0.0
  %vm314 = vcmp.ge.f32.partialorder %v306, 0.0
  %vm315 = vcmp.ge.f32.partialorder %v309, 0.0
  %v316 = vld [vmem:[%s3] sm:$0x1]
  %v318 = vlaneseq
  %v319 = vshrl.u32 %v318, 7
  %v320 = vsub.s32 0, %v319
  %v321 = vrot.slane %v316, %v320
  %v323 = vmul.f32 %v321, %v298
  %v324 = vmul.f32 %v321, %v301
  %v325 = vmul.f32 %v321, %v306
  %v326 = vmul.f32 %v321, %v309
  %v327 = vsel %vm312, %v298, %v323
  %v328 = vsel %vm313, %v301, %v324
  %v329 = vsel %vm314, %v306, %v325
  %v330 = vsel %vm315, %v309, %v326
  %v331 = vpack.c.bf16 %v328, %v327
  %v332 = vpack.c.bf16 %v330, %v329
  %v335 = vunpack.c.l.b16 %v331
  %v336 = vunpack.c.h.b16 %v331
  %v337 = vunpack.c.l.b16 %v332
  %v338 = vunpack.c.h.b16 %v332
  %v339 = vpack.c.b16 %v335, %v335
  %v340 = vpack.c.b16 %v336, %v336
  %v341 = vpack.c.b16 %v337, %v337
  %v342 = vpack.c.b16 %v338, %v338
  %347 = vst [vmem:[%s4] sm:$0xf] %v339
  %348 = vst [vmem:[%s4 + $0x4] sm:$0xf] %v340
  %349 = vst [vmem:[%s4 + $0x8] sm:$0xf] %v341
  %350 = vst [vmem:[%s4 + $0xc] sm:$0xf] %v342
  // Predicated region
  $region18: #{encoder_forward.10} parent=0 // pred_check
    _
  $region19: #{encoder_forward.10} parent=0 // pred_check_branch
    %352 = sbr.rel (0) target = $region21
  $region20: #{encoder_forward.10} parent=0 // pred_region
    _
  $region21: #{encoder_forward.10} parent=0 // pred_fallthru
    _
  // Predicated region
  $region22: #{encoder_forward.10} parent=0 // pred_check
    _
  $region23: #{encoder_forward.10} parent=0 // pred_check_branch
    %354 = sbr.rel (0) target = $region25
  $region24: #{encoder_forward.10} parent=0 // pred_region
    _
  $region25: #{encoder_forward.10} parent=0 // pred_fallthru
    _

// kernel: encoder_forward.11
$region0: #{encoder_forward.11}
  #allocation0 [shape = 'u32[]', space=smem, size = 0x4, offset = 0x4, fixed_abs, tag = 'smem constant byte address 0x4 - core index']
  #allocation1 [shape = 'u32[144,128]{1,0:T(1,128)}', space=vmem, size = 0x12000, scoped, tag = 'internal scratch']
  %s0 = inlined_call_operand.vmem [shape: bf16[32,432], index: 0, kind: input, shape index: {}]
  %s1 = inlined_call_operand.vmem [shape: bf16[432,128], index: 1, kind: input, shape index: {}]
  %s2 = inlined_call_operand.vmem [shape: f32[1,128], index: 2, kind: input, shape index: {}]
  %s3 = inlined_call_operand.vmem [shape: f32[1,128], index: 3, kind: input, shape index: {}]
  %s4 = inlined_call_operand.vmem [shape: bf16[32,128], index: 4, kind: output, shape index: {}]
  %s5 = sld [smem:[#allocation0]]
  $region26: #{encoder_forward.11} parent=0
    _
  %s7 = ssub.s32 1, %s5
  %s8 = scalar_select 0, %s7, %s5
  // Predicated region
  $region2: #{encoder_forward.11} parent=0 // pred_check
    _
  $region3: #{encoder_forward.11} parent=0 // pred_check_branch
    %10 = sbr.rel (0) target = $region5
  $region4: #{encoder_forward.11} parent=0 // pred_region
    _
  $region5: #{encoder_forward.11} parent=0 // pred_fallthru
    _
  // Predicated region
  $region6: #{encoder_forward.11} parent=0 // pred_check
    _
  $region7: #{encoder_forward.11} parent=0 // pred_check_branch
    %12 = sbr.rel (0) target = $region9
  $region8: #{encoder_forward.11} parent=0 // pred_region
    _
  $region9: #{encoder_forward.11} parent=0 // pred_fallthru
    _
  // Predicated region
  $region10: #{encoder_forward.11} parent=0 // pred_check
    _
  $region11: #{encoder_forward.11} parent=0 // pred_check_branch
    %14 = sbr.rel (0) target = $region13
  $region12: #{encoder_forward.11} parent=0 // pred_region
    _
  $region13: #{encoder_forward.11} parent=0 // pred_fallthru
    _
  // Predicated region
  $region14: #{encoder_forward.11} parent=0 // pred_check
    _
  $region15: #{encoder_forward.11} parent=0 // pred_check_branch
    %16 = sbr.rel (0) target = $region17
  $region16: #{encoder_forward.11} parent=0 // pred_region
    _
  $region17: #{encoder_forward.11} parent=0 // pred_fallthru
    _
  %v18 = vld [vmem:[%s0] sm:$0xff]
  %v19 = vld [vmem:[%s0 + $0x8] sm:$0xff]
  %v20 = vld [vmem:[%s0 + $0x10] sm:$0xff]
  %v21 = vld [vmem:[%s0 + $0x18] sm:$0xff]
  %v22 = vld [vmem:[%s0 + $0x20] sm:$0xff]
  %v23 = vld [vmem:[%s0 + $0x28] sm:$0xff]
  %v24 = vld [vmem:[%s0 + $0x30] sm:$0xff]
  %v25 = vld [vmem:[%s0 + $0x38] sm:$0xff]
  %v26 = vld [vmem:[%s1] sm:$0xf]
  %v27 = vld [vmem:[%s1 + $0x4] sm:$0xf]
  %v28 = vld [vmem:[%s1 + $0x8] sm:$0xf]
  %v29 = vld [vmem:[%s1 + $0xc] sm:$0xf]
  %v30 = vld [vmem:[%s1 + $0x10] sm:$0xf]
  %v31 = vld [vmem:[%s1 + $0x14] sm:$0xf]
  %v32 = vld [vmem:[%s1 + $0x18] sm:$0xf]
  %v33 = vld [vmem:[%s1 + $0x1c] sm:$0xf]
  %v34 = vld [vmem:[%s1 + $0x20] sm:$0xf]
  %v35 = vld [vmem:[%s1 + $0x24] sm:$0xf]
  %v36 = vld [vmem:[%s1 + $0x28] sm:$0xf]
  %v37 = vld [vmem:[%s1 + $0x2c] sm:$0xf]
  %v38 = vld [vmem:[%s1 + $0x30] sm:$0xf]
  %v39 = vld [vmem:[%s1 + $0x34] sm:$0xf]
  %v40 = vld [vmem:[%s1 + $0x38] sm:$0xf]
  %v41 = vld [vmem:[%s1 + $0x3c] sm:$0xf]
  %v42 = vld [vmem:[%s1 + $0x40] sm:$0xf]
  %v43 = vld [vmem:[%s1 + $0x44] sm:$0xf]
  %v44 = vld [vmem:[%s1 + $0x48] sm:$0xf]
  %v45 = vld [vmem:[%s1 + $0x4c] sm:$0xf]
  %v46 = vld [vmem:[%s1 + $0x50] sm:$0xf]
  %v47 = vld [vmem:[%s1 + $0x54] sm:$0xf]
  %v48 = vld [vmem:[%s1 + $0x58] sm:$0xf]
  %v49 = vld [vmem:[%s1 + $0x5c] sm:$0xf]
  %v50 = vld [vmem:[%s1 + $0x60] sm:$0xf]
  %v51 = vld [vmem:[%s1 + $0x64] sm:$0xf]
  %v52 = vld [vmem:[%s1 + $0x68] sm:$0xf]
  %v53 = vld [vmem:[%s1 + $0x6c] sm:$0xf]
  %v54 = vld [vmem:[%s1 + $0x70] sm:$0xf]
  %v55 = vld [vmem:[%s1 + $0x74] sm:$0xf]
  %v56 = vld [vmem:[%s1 + $0x78] sm:$0xf]
  %v57 = vld [vmem:[%s1 + $0x7c] sm:$0xf]
  %v58 = vld [vmem:[%s1 + $0x80] sm:$0xf]
  %v59 = vld [vmem:[%s1 + $0x84] sm:$0xf]
  %v60 = vld [vmem:[%s1 + $0x88] sm:$0xf]
  %v61 = vld [vmem:[%s1 + $0x8c] sm:$0xf]
  %v62 = vld [vmem:[%s1 + $0x90] sm:$0xf]
  %v63 = vld [vmem:[%s1 + $0x94] sm:$0xf]
  %v64 = vld [vmem:[%s1 + $0x98] sm:$0xf]
  %v65 = vld [vmem:[%s1 + $0x9c] sm:$0xf]
  %v66 = vld [vmem:[%s1 + $0xa0] sm:$0xf]
  %v67 = vld [vmem:[%s1 + $0xa4] sm:$0xf]
  %v68 = vld [vmem:[%s1 + $0xa8] sm:$0xf]
  %v69 = vld [vmem:[%s1 + $0xac] sm:$0xf]
  %v70 = vld [vmem:[%s1 + $0xb0] sm:$0xf]
  %v71 = vld [vmem:[%s1 + $0xb4] sm:$0xf]
  %v72 = vld [vmem:[%s1 + $0xb8] sm:$0xf]
  %v73 = vld [vmem:[%s1 + $0xbc] sm:$0xf]
  %v74 = vld [vmem:[%s1 + $0xc0] sm:$0xf]
  %v75 = vld [vmem:[%s1 + $0xc4] sm:$0xf]
  %v76 = vld [vmem:[%s1 + $0xc8] sm:$0xf]
  %v77 = vld [vmem:[%s1 + $0xcc] sm:$0xf]
  %v78 = vld [vmem:[%s1 + $0xd0] sm:$0xf]
  %v79 = vld [vmem:[%s1 + $0xd4] sm:$0xf]
  %v80 = vld [vmem:[%s2] sm:$0x1]
  %v82 = vlaneseq
  %v83 = vshrl.u32 %v82, 7
  %v84 = vsub.s32 0, %v83
  %v85 = vrot.slane %v80, %v84
  %v95 = vunpack.c.l.b16 %v18
  %v96 = vunpack.c.h.b16 %v18
  %v97 = vunpack.c.l.b16 %v19
  %v98 = vunpack.c.h.b16 %v19
  %v99 = vunpack.c.l.b16 %v20
  %v100 = vunpack.c.h.b16 %v20
  %v101 = vunpack.c.l.b16 %v21
  %v102 = vunpack.c.h.b16 %v21
  %v103 = vunpack.c.l.b16 %v22
  %v104 = vunpack.c.h.b16 %v22
  %v105 = vunpack.c.l.b16 %v23
  %v106 = vunpack.c.h.b16 %v23
  %v107 = vunpack.c.l.b16 %v24
  %v108 = vunpack.c.h.b16 %v24
  %v109 = vunpack.c.l.b16 %v25
  %v110 = vunpack.c.h.b16 %v25
  %v111 = vpack.c.b16 %v99, %v95
  %v112 = vpack.c.b16 %v100, %v96
  %v113 = vpack.c.b16 %v101, %v97
  %v114 = vpack.c.b16 %v102, %v98
  %v115 = vpack.c.b16 %v107, %v103
  %v116 = vpack.c.b16 %v108, %v104
  %v117 = vpack.c.b16 %v109, %v105
  %v118 = vpack.c.b16 %v110, %v106
  %v179 = vunpack.c.l.b16 %v26
  %v180 = vunpack.c.l.b16 %v27
  %v181 = vunpack.c.l.b16 %v28
  %v182 = vunpack.c.l.b16 %v29
  %v183 = vunpack.c.l.b16 %v30
  %v184 = vunpack.c.l.b16 %v31
  %v185 = vunpack.c.l.b16 %v32
  %v186 = vunpack.c.l.b16 %v33
  %v187 = vunpack.c.l.b16 %v34
  %v188 = vunpack.c.l.b16 %v35
  %v189 = vunpack.c.l.b16 %v36
  %v190 = vunpack.c.l.b16 %v37
  %v191 = vunpack.c.l.b16 %v38
  %v192 = vunpack.c.l.b16 %v39
  %v193 = vunpack.c.l.b16 %v40
  %v194 = vunpack.c.l.b16 %v41
  %v195 = vunpack.c.l.b16 %v42
  %v196 = vunpack.c.l.b16 %v43
  %v197 = vunpack.c.l.b16 %v44
  %v198 = vunpack.c.l.b16 %v45
  %v199 = vunpack.c.l.b16 %v46
  %v200 = vunpack.c.l.b16 %v47
  %v201 = vunpack.c.l.b16 %v48
  %v202 = vunpack.c.l.b16 %v49
  %v203 = vunpack.c.l.b16 %v50
  %v204 = vunpack.c.l.b16 %v51
  %v205 = vunpack.c.l.b16 %v52
  %v206 = vunpack.c.l.b16 %v53
  %v207 = vunpack.c.l.b16 %v54
  %v208 = vunpack.c.l.b16 %v55
  %v209 = vunpack.c.l.b16 %v56
  %v210 = vunpack.c.l.b16 %v57
  %v211 = vunpack.c.l.b16 %v58
  %v212 = vunpack.c.l.b16 %v59
  %v213 = vunpack.c.l.b16 %v60
  %v214 = vunpack.c.l.b16 %v61
  %v215 = vunpack.c.l.b16 %v62
  %v216 = vunpack.c.l.b16 %v63
  %v217 = vunpack.c.l.b16 %v64
  %v218 = vunpack.c.l.b16 %v65
  %v219 = vunpack.c.l.b16 %v66
  %v220 = vunpack.c.l.b16 %v67
  %v221 = vunpack.c.l.b16 %v68
  %v222 = vunpack.c.l.b16 %v69
  %v223 = vunpack.c.l.b16 %v70
  %v224 = vunpack.c.l.b16 %v71
  %v225 = vunpack.c.l.b16 %v72
  %v226 = vunpack.c.l.b16 %v73
  %v227 = vunpack.c.l.b16 %v74
  %v228 = vunpack.c.l.b16 %v75
  %v229 = vunpack.c.l.b16 %v76
  %v230 = vunpack.c.l.b16 %v77
  %v231 = vunpack.c.l.b16 %v78
  %v232 = vunpack.c.l.b16 %v79
  %v233 = vpack.c.b16 %v180, %v179
  %v234 = vpack.c.b16 %v182, %v181
  %v235 = vpack.c.b16 %v184, %v183
  %v236 = vpack.c.b16 %v186, %v185
  %v237 = vpack.c.b16 %v188, %v187
  %v238 = vpack.c.b16 %v190, %v189
  %v239 = vpack.c.b16 %v192, %v191
  %v240 = vpack.c.b16 %v194, %v193
  %v241 = vpack.c.b16 %v196, %v195
  %v242 = vpack.c.b16 %v198, %v197
  %v243 = vpack.c.b16 %v200, %v199
  %v244 = vpack.c.b16 %v202, %v201
  %v245 = vpack.c.b16 %v204, %v203
  %v246 = vpack.c.b16 %v206, %v205
  %v247 = vpack.c.b16 %v208, %v207
  %v248 = vpack.c.b16 %v210, %v209
  %v249 = vpack.c.b16 %v212, %v211
  %v250 = vpack.c.b16 %v214, %v213
  %v251 = vpack.c.b16 %v216, %v215
  %v252 = vpack.c.b16 %v218, %v217
  %v253 = vpack.c.b16 %v220, %v219
  %v254 = vpack.c.b16 %v222, %v221
  %v255 = vpack.c.b16 %v224, %v223
  %v256 = vpack.c.b16 %v226, %v225
  %v257 = vpack.c.b16 %v228, %v227
  %v258 = vpack.c.b16 %v230, %v229
  %v259 = vpack.c.b16 %v232, %v231
  %vm287 = vcmask 392192
  %v289 = vsel %vm287, %v114, 0
  %v292 = vsel %vm287, %v118, 0
  %294 = vmatprep.subr.bf16.mxu0 0
  %295 = vmatpush1.bf16.msra.mxu0 %v240
  %296 = vmatprep.subr.bf16.mxu0 0
  %297 = vmatpush1.bf16.msra.mxu0 %v239
  %298 = vmatprep.subr.bf16.mxu0 0
  %299 = vmatpush1.bf16.msra.mxu0 %v238
  %300 = vmatprep.subr.bf16.mxu0 0
  %301 = vmatpush1.bf16.msra.mxu0 %v237
  %302 = vmatprep.subr.bf16.mxu0 0
  %303 = vmatpush1.bf16.msra.mxu0 %v236
  %304 = vmatprep.subr.bf16.mxu0 0
  %305 = vmatpush1.bf16.msra.mxu0 %v235
  %306 = vmatprep.subr.bf16.mxu0 0
  %307 = vmatpush1.bf16.msra.mxu0 %v234
  %308 = vmatprep.subr.bf16.mxu0 0
  %309 = vmatpush1.bf16.msra.mxu0 %v233
  %310 = vmatprep.subr.bf16.mxu0 0
  %311 = vmatpush2.bf16.msra.mxu0 %v248
  %312 = vmatprep.subr.bf16.mxu0 0
  %313 = vmatpush2.bf16.msra.mxu0 %v247
  %314 = vmatprep.subr.bf16.mxu0 0
  %315 = vmatpush2.bf16.msra.mxu0 %v246
  %316 = vmatprep.subr.bf16.mxu0 0
  %317 = vmatpush2.bf16.msra.mxu0 %v245
  %318 = vmatprep.subr.bf16.mxu0 0
  %319 = vmatpush2.bf16.msra.mxu0 %v244
  %320 = vmatprep.subr.bf16.mxu0 0
  %321 = vmatpush2.bf16.msra.mxu0 %v243
  %322 = vmatprep.subr.bf16.mxu0 0
  %323 = vmatpush2.bf16.msra.mxu0 %v242
  %324 = vmatprep.subr.bf16.mxu0 0
  %325 = vmatpush2.bf16.msra.mxu0 %v241
  %326 = vmatprep.mubr.bf16.mxu0 %v112
  %327 = vmatmul.mubr.bf16.gmra.mxu0 %v111
  %v328 = vpop.f32.mrf.mxu0
  %v329 = vadd.f32 %v85, %v328
  %v330 = vpop.f32.mrf.mxu0
  %v331 = vpop.f32.mrf.mxu0
  %v332 = vadd.f32 %v85, %v331
  %v333 = vpop.f32.mrf.mxu0
  %334 = vmatprep.mubr.bf16.mxu0 %v116
  %335 = vmatmul.mubr.bf16.gmra.mxu0 %v115
  %v336 = vpop.f32.mrf.mxu0
  %v337 = vadd.f32 %v85, %v336
  %v338 = vpop.f32.mrf.mxu0
  %v339 = vpop.f32.mrf.mxu0
  %v340 = vadd.f32 %v85, %v339
  %v341 = vpop.f32.mrf.mxu0
  %342 = vdwg.mxu0
  %343 = vmatprep.subr.bf16.mxu0 0
  %344 = vmatpush1.bf16.msra.mxu0 %v256
  %345 = vmatprep.subr.bf16.mxu0 0
  %346 = vmatpush1.bf16.msra.mxu0 %v255
  %347 = vmatprep.subr.bf16.mxu0 0
  %348 = vmatpush1.bf16.msra.mxu0 %v254
  %349 = vmatprep.subr.bf16.mxu0 0
  %350 = vmatpush1.bf16.msra.mxu0 %v253
  %351 = vmatprep.subr.bf16.mxu0 0
  %352 = vmatpush1.bf16.msra.mxu0 %v252
  %353 = vmatprep.subr.bf16.mxu0 0
  %354 = vmatpush1.bf16.msra.mxu0 %v251
  %355 = vmatprep.subr.bf16.mxu0 0
  %356 = vmatpush1.bf16.msra.mxu0 %v250
  %357 = vmatprep.subr.bf16.mxu0 0
  %358 = vmatpush1.bf16.msra.mxu0 %v249
  %359 = vmatprep.subr.bf16.mxu0 0
  %360 = vmatpush2.bf16.msra.mxu0 0
  %361 = vmatprep.subr.bf16.mxu0 0
  %362 = vmatpush2.bf16.msra.mxu0 0
  %363 = vmatprep.subr.bf16.mxu0 0
  %364 = vmatpush2.bf16.msra.mxu0 0
  %365 = vmatprep.subr.bf16.mxu0 0
  %366 = vmatpush2.bf16.msra.mxu0 0
  %367 = vmatprep.subr.bf16.mxu0 0
  %368 = vmatpush2.bf16.msra.mxu0 0
  %369 = vmatprep.subr.bf16.mxu0 0
  %370 = vmatpush2.bf16.msra.mxu0 %v259
  %371 = vmatprep.subr.bf16.mxu0 0
  %372 = vmatpush2.bf16.msra.mxu0 %v258
  %373 = vmatprep.subr.bf16.mxu0 0
  %374 = vmatpush2.bf16.msra.mxu0 %v257
  %375 = vmatprep.mubr.bf16.mxu0 %v289
  %376 = vmatmul.mubr.bf16.gmra.mxu0 %v113
  %v377 = vpop.f32.mrf.mxu0
  %v378 = vadd.f32 %v329, %v377
  %v379 = vpop.f32.mrf.mxu0
  %v380 = vpop.f32.mrf.mxu0
  %v381 = vadd.f32 %v332, %v380
  %v382 = vpop.f32.mrf.mxu0
  %383 = vmatprep.mubr.bf16.mxu0 %v292
  %384 = vmatmul.mubr.bf16.gmra.mxu0 %v117
  %v385 = vpop.f32.mrf.mxu0
  %v386 = vadd.f32 %v337, %v385
  %v387 = vpop.f32.mrf.mxu0
  %v388 = vpop.f32.mrf.mxu0
  %v389 = vadd.f32 %v340, %v388
  %v390 = vpop.f32.mrf.mxu0
  %391 = vdwg.mxu0
  %vm392 = vcmp.ge.f32.partialorder %v378, 0.0
  %vm393 = vcmp.ge.f32.partialorder %v381, 0.0
  %vm394 = vcmp.ge.f32.partialorder %v386, 0.0
  %vm395 = vcmp.ge.f32.partialorder %v389, 0.0
  %v396 = vld [vmem:[%s3] sm:$0x1]
  %v398 = vlaneseq
  %v399 = vshrl.u32 %v398, 7
  %v400 = vsub.s32 0, %v399
  %v401 = vrot.slane %v396, %v400
  %v403 = vmul.f32 %v401, %v378
  %v404 = vmul.f32 %v401, %v381
  %v405 = vmul.f32 %v401, %v386
  %v406 = vmul.f32 %v401, %v389
  %v407 = vsel %vm392, %v378, %v403
  %v408 = vsel %vm393, %v381, %v404
  %v409 = vsel %vm394, %v386, %v405
  %v410 = vsel %vm395, %v389, %v406
  %v411 = vpack.c.bf16 %v408, %v407
  %v412 = vpack.c.bf16 %v410, %v409
  %v415 = vunpack.c.l.b16 %v411
  %v416 = vunpack.c.h.b16 %v411
  %v417 = vunpack.c.l.b16 %v412
  %v418 = vunpack.c.h.b16 %v412
  %v419 = vpack.c.b16 %v415, %v415
  %v420 = vpack.c.b16 %v416, %v416
  %v421 = vpack.c.b16 %v417, %v417
  %v422 = vpack.c.b16 %v418, %v418
  %427 = vst [vmem:[%s4] sm:$0xf] %v419
  %428 = vst [vmem:[%s4 + $0x4] sm:$0xf] %v420
  %429 = vst [vmem:[%s4 + $0x8] sm:$0xf] %v421
  %430 = vst [vmem:[%s4 + $0xc] sm:$0xf] %v422
  // Predicated region
  $region18: #{encoder_forward.11} parent=0 // pred_check
    _
  $region19: #{encoder_forward.11} parent=0 // pred_check_branch
    %432 = sbr.rel (0) target = $region21
  $region20: #{encoder_forward.11} parent=0 // pred_region
    _
  $region21: #{encoder_forward.11} parent=0 // pred_fallthru
    _
  // Predicated region
  $region22: #{encoder_forward.11} parent=0 // pred_check
    _
  $region23: #{encoder_forward.11} parent=0 // pred_check_branch
    %434 = sbr.rel (0) target = $region25
  $region24: #{encoder_forward.11} parent=0 // pred_region
    _
  $region25: #{encoder_forward.11} parent=0 // pred_fallthru
    _

// kernel: encoder_forward.12
$region0: #{encoder_forward.12}
  #allocation0 [shape = 'u32[]', space=smem, size = 0x4, offset = 0x4, fixed_abs, tag = 'smem constant byte address 0x4 - core index']
  #allocation1 [shape = 'u32[144,128]{1,0:T(1,128)}', space=vmem, size = 0x12000, scoped, tag = 'internal scratch']
  %s0 = inlined_call_operand.vmem [shape: bf16[8,432], index: 0, kind: input, shape index: {}]
  %s1 = inlined_call_operand.vmem [shape: bf16[432,128], index: 1, kind: input, shape index: {}]
  %s2 = inlined_call_operand.vmem [shape: f32[1,128], index: 2, kind: input, shape index: {}]
  %s3 = inlined_call_operand.vmem [shape: f32[1,128], index: 3, kind: input, shape index: {}]
  %s4 = inlined_call_operand.vmem [shape: bf16[8,128], index: 4, kind: output, shape index: {}]
  %s5 = sld [smem:[#allocation0]]
  $region26: #{encoder_forward.12} parent=0
    _
  %s7 = ssub.s32 1, %s5
  %s8 = scalar_select 0, %s7, %s5
  // Predicated region
  $region2: #{encoder_forward.12} parent=0 // pred_check
    _
  $region3: #{encoder_forward.12} parent=0 // pred_check_branch
    %10 = sbr.rel (0) target = $region5
  $region4: #{encoder_forward.12} parent=0 // pred_region
    _
  $region5: #{encoder_forward.12} parent=0 // pred_fallthru
    _
  // Predicated region
  $region6: #{encoder_forward.12} parent=0 // pred_check
    _
  $region7: #{encoder_forward.12} parent=0 // pred_check_branch
    %12 = sbr.rel (0) target = $region9
  $region8: #{encoder_forward.12} parent=0 // pred_region
    _
  $region9: #{encoder_forward.12} parent=0 // pred_fallthru
    _
  // Predicated region
  $region10: #{encoder_forward.12} parent=0 // pred_check
    _
  $region11: #{encoder_forward.12} parent=0 // pred_check_branch
    %14 = sbr.rel (0) target = $region13
  $region12: #{encoder_forward.12} parent=0 // pred_region
    _
  $region13: #{encoder_forward.12} parent=0 // pred_fallthru
    _
  // Predicated region
  $region14: #{encoder_forward.12} parent=0 // pred_check
    _
  $region15: #{encoder_forward.12} parent=0 // pred_check_branch
    %16 = sbr.rel (0) target = $region17
  $region16: #{encoder_forward.12} parent=0 // pred_region
    _
  $region17: #{encoder_forward.12} parent=0 // pred_fallthru
    _
  %v18 = vld [vmem:[%s0] sm:$0xff]
  %v19 = vld [vmem:[%s0 + $0x8] sm:$0xff]
  %v20 = vld [vmem:[%s1] sm:$0xf]
  %v21 = vld [vmem:[%s1 + $0x4] sm:$0xf]
  %v22 = vld [vmem:[%s1 + $0x8] sm:$0xf]
  %v23 = vld [vmem:[%s1 + $0xc] sm:$0xf]
  %v24 = vld [vmem:[%s1 + $0x10] sm:$0xf]
  %v25 = vld [vmem:[%s1 + $0x14] sm:$0xf]
  %v26 = vld [vmem:[%s1 + $0x18] sm:$0xf]
  %v27 = vld [vmem:[%s1 + $0x1c] sm:$0xf]
  %v28 = vld [vmem:[%s1 + $0x20] sm:$0xf]
  %v29 = vld [vmem:[%s1 + $0x24] sm:$0xf]
  %v30 = vld [vmem:[%s1 + $0x28] sm:$0xf]
  %v31 = vld [vmem:[%s1 + $0x2c] sm:$0xf]
  %v32 = vld [vmem:[%s1 + $0x30] sm:$0xf]
  %v33 = vld [vmem:[%s1 + $0x34] sm:$0xf]
  %v34 = vld [vmem:[%s1 + $0x38] sm:$0xf]
  %v35 = vld [vmem:[%s1 + $0x3c] sm:$0xf]
  %v36 = vld [vmem:[%s1 + $0x40] sm:$0xf]
  %v37 = vld [vmem:[%s1 + $0x44] sm:$0xf]
  %v38 = vld [vmem:[%s1 + $0x48] sm:$0xf]
  %v39 = vld [vmem:[%s1 + $0x4c] sm:$0xf]
  %v40 = vld [vmem:[%s1 + $0x50] sm:$0xf]
  %v41 = vld [vmem:[%s1 + $0x54] sm:$0xf]
  %v42 = vld [vmem:[%s1 + $0x58] sm:$0xf]
  %v43 = vld [vmem:[%s1 + $0x5c] sm:$0xf]
  %v44 = vld [vmem:[%s1 + $0x60] sm:$0xf]
  %v45 = vld [vmem:[%s1 + $0x64] sm:$0xf]
  %v46 = vld [vmem:[%s1 + $0x68] sm:$0xf]
  %v47 = vld [vmem:[%s1 + $0x6c] sm:$0xf]
  %v48 = vld [vmem:[%s1 + $0x70] sm:$0xf]
  %v49 = vld [vmem:[%s1 + $0x74] sm:$0xf]
  %v50 = vld [vmem:[%s1 + $0x78] sm:$0xf]
  %v51 = vld [vmem:[%s1 + $0x7c] sm:$0xf]
  %v52 = vld [vmem:[%s1 + $0x80] sm:$0xf]
  %v53 = vld [vmem:[%s1 + $0x84] sm:$0xf]
  %v54 = vld [vmem:[%s1 + $0x88] sm:$0xf]
  %v55 = vld [vmem:[%s1 + $0x8c] sm:$0xf]
  %v56 = vld [vmem:[%s1 + $0x90] sm:$0xf]
  %v57 = vld [vmem:[%s1 + $0x94] sm:$0xf]
  %v58 = vld [vmem:[%s1 + $0x98] sm:$0xf]
  %v59 = vld [vmem:[%s1 + $0x9c] sm:$0xf]
  %v60 = vld [vmem:[%s1 + $0xa0] sm:$0xf]
  %v61 = vld [vmem:[%s1 + $0xa4] sm:$0xf]
  %v62 = vld [vmem:[%s1 + $0xa8] sm:$0xf]
  %v63 = vld [vmem:[%s1 + $0xac] sm:$0xf]
  %v64 = vld [vmem:[%s1 + $0xb0] sm:$0xf]
  %v65 = vld [vmem:[%s1 + $0xb4] sm:$0xf]
  %v66 = vld [vmem:[%s1 + $0xb8] sm:$0xf]
  %v67 = vld [vmem:[%s1 + $0xbc] sm:$0xf]
  %v68 = vld [vmem:[%s1 + $0xc0] sm:$0xf]
  %v69 = vld [vmem:[%s1 + $0xc4] sm:$0xf]
  %v70 = vld [vmem:[%s1 + $0xc8] sm:$0xf]
  %v71 = vld [vmem:[%s1 + $0xcc] sm:$0xf]
  %v72 = vld [vmem:[%s1 + $0xd0] sm:$0xf]
  %v73 = vld [vmem:[%s1 + $0xd4] sm:$0xf]
  %v74 = vld [vmem:[%s2] sm:$0x1]
  %v76 = vlaneseq
  %v77 = vshrl.u32 %v76, 7
  %v78 = vsub.s32 0, %v77
  %v79 = vrot.slane %v74, %v78
  %v83 = vunpack.c.l.b16 %v18
  %v84 = vunpack.c.h.b16 %v18
  %v85 = vunpack.c.l.b16 %v19
  %v86 = vunpack.c.h.b16 %v19
  %v87 = vpack.c.b16 %v83, %v83
  %v88 = vpack.c.b16 %v84, %v84
  %v89 = vpack.c.b16 %v85, %v85
  %v90 = vpack.c.b16 %v86, %v86
  %v148 = vunpack.c.l.b16 %v20
  %v149 = vunpack.c.l.b16 %v21
  %v150 = vunpack.c.l.b16 %v22
  %v151 = vunpack.c.l.b16 %v23
  %v152 = vunpack.c.l.b16 %v24
  %v153 = vunpack.c.l.b16 %v25
  %v154 = vunpack.c.l.b16 %v26
  %v155 = vunpack.c.l.b16 %v27
  %v156 = vunpack.c.l.b16 %v28
  %v157 = vunpack.c.l.b16 %v29
  %v158 = vunpack.c.l.b16 %v30
  %v159 = vunpack.c.l.b16 %v31
  %v160 = vunpack.c.l.b16 %v32
  %v161 = vunpack.c.l.b16 %v33
  %v162 = vunpack.c.l.b16 %v34
  %v163 = vunpack.c.l.b16 %v35
  %v164 = vunpack.c.l.b16 %v36
  %v165 = vunpack.c.l.b16 %v37
  %v166 = vunpack.c.l.b16 %v38
  %v167 = vunpack.c.l.b16 %v39
  %v168 = vunpack.c.l.b16 %v40
  %v169 = vunpack.c.l.b16 %v41
  %v170 = vunpack.c.l.b16 %v42
  %v171 = vunpack.c.l.b16 %v43
  %v172 = vunpack.c.l.b16 %v44
  %v173 = vunpack.c.l.b16 %v45
  %v174 = vunpack.c.l.b16 %v46
  %v175 = vunpack.c.l.b16 %v47
  %v176 = vunpack.c.l.b16 %v48
  %v177 = vunpack.c.l.b16 %v49
  %v178 = vunpack.c.l.b16 %v50
  %v179 = vunpack.c.l.b16 %v51
  %v180 = vunpack.c.l.b16 %v52
  %v181 = vunpack.c.l.b16 %v53
  %v182 = vunpack.c.l.b16 %v54
  %v183 = vunpack.c.l.b16 %v55
  %v184 = vunpack.c.l.b16 %v56
  %v185 = vunpack.c.l.b16 %v57
  %v186 = vunpack.c.l.b16 %v58
  %v187 = vunpack.c.l.b16 %v59
  %v188 = vunpack.c.l.b16 %v60
  %v189 = vunpack.c.l.b16 %v61
  %v190 = vunpack.c.l.b16 %v62
  %v191 = vunpack.c.l.b16 %v63
  %v192 = vunpack.c.l.b16 %v64
  %v193 = vunpack.c.l.b16 %v65
  %v194 = vunpack.c.l.b16 %v66
  %v195 = vunpack.c.l.b16 %v67
  %v196 = vunpack.c.l.b16 %v68
  %v197 = vunpack.c.l.b16 %v69
  %v198 = vunpack.c.l.b16 %v70
  %v199 = vunpack.c.l.b16 %v71
  %v200 = vunpack.c.l.b16 %v72
  %v201 = vunpack.c.l.b16 %v73
  %v202 = vpack.c.b16 %v149, %v148
  %v203 = vpack.c.b16 %v151, %v150
  %v204 = vpack.c.b16 %v153, %v152
  %v205 = vpack.c.b16 %v155, %v154
  %v206 = vpack.c.b16 %v157, %v156
  %v207 = vpack.c.b16 %v159, %v158
  %v208 = vpack.c.b16 %v161, %v160
  %v209 = vpack.c.b16 %v163, %v162
  %v210 = vpack.c.b16 %v165, %v164
  %v211 = vpack.c.b16 %v167, %v166
  %v212 = vpack.c.b16 %v169, %v168
  %v213 = vpack.c.b16 %v171, %v170
  %v214 = vpack.c.b16 %v173, %v172
  %v215 = vpack.c.b16 %v175, %v174
  %v216 = vpack.c.b16 %v177, %v176
  %v217 = vpack.c.b16 %v179, %v178
  %v218 = vpack.c.b16 %v181, %v180
  %v219 = vpack.c.b16 %v183, %v182
  %v220 = vpack.c.b16 %v185, %v184
  %v221 = vpack.c.b16 %v187, %v186
  %v222 = vpack.c.b16 %v189, %v188
  %v223 = vpack.c.b16 %v191, %v190
  %v224 = vpack.c.b16 %v193, %v192
  %v225 = vpack.c.b16 %v195, %v194
  %v226 = vpack.c.b16 %v197, %v196
  %v227 = vpack.c.b16 %v199, %v198
  %v228 = vpack.c.b16 %v201, %v200
  %vm256 = vcmask 392192
  %v258 = vsel %vm256, %v90, 0
  %260 = vmatprep.subr.bf16.mxu0 0
  %261 = vmatpush1.bf16.msra.mxu0 %v209
  %262 = vmatprep.subr.bf16.mxu0 0
  %263 = vmatpush1.bf16.msra.mxu0 %v208
  %264 = vmatprep.subr.bf16.mxu0 0
  %265 = vmatpush1.bf16.msra.mxu0 %v207
  %266 = vmatprep.subr.bf16.mxu0 0
  %267 = vmatpush1.bf16.msra.mxu0 %v206
  %268 = vmatprep.subr.bf16.mxu0 0
  %269 = vmatpush1.bf16.msra.mxu0 %v205
  %270 = vmatprep.subr.bf16.mxu0 0
  %271 = vmatpush1.bf16.msra.mxu0 %v204
  %272 = vmatprep.subr.bf16.mxu0 0
  %273 = vmatpush1.bf16.msra.mxu0 %v203
  %274 = vmatprep.subr.bf16.mxu0 0
  %275 = vmatpush1.bf16.msra.mxu0 %v202
  %276 = vmatprep.subr.bf16.mxu0 0
  %277 = vmatpush2.bf16.msra.mxu0 %v217
  %278 = vmatprep.subr.bf16.mxu0 0
  %279 = vmatpush2.bf16.msra.mxu0 %v216
  %280 = vmatprep.subr.bf16.mxu0 0
  %281 = vmatpush2.bf16.msra.mxu0 %v215
  %282 = vmatprep.subr.bf16.mxu0 0
  %283 = vmatpush2.bf16.msra.mxu0 %v214
  %284 = vmatprep.subr.bf16.mxu0 0
  %285 = vmatpush2.bf16.msra.mxu0 %v213
  %286 = vmatprep.subr.bf16.mxu0 0
  %287 = vmatpush2.bf16.msra.mxu0 %v212
  %288 = vmatprep.subr.bf16.mxu0 0
  %289 = vmatpush2.bf16.msra.mxu0 %v211
  %290 = vmatprep.subr.bf16.mxu0 0
  %291 = vmatpush2.bf16.msra.mxu0 %v210
  %292 = vmatprep.mubr.bf16.mxu0 %v88
  %293 = vmatmul.mubr.bf16.gmra.mxu0 %v87
  %v294 = vpop.f32.mrf.mxu0
  %v295 = vadd.f32 %v79, %v294
  %v296 = vpop.f32.mrf.mxu0
  %v297 = vpop.f32.mrf.mxu0
  %v298 = vpop.f32.mrf.mxu0
  %299 = vdwg.mxu0
  %300 = vmatprep.subr.bf16.mxu0 0
  %301 = vmatpush1.bf16.msra.mxu0 %v225
  %302 = vmatprep.subr.bf16.mxu0 0
  %303 = vmatpush1.bf16.msra.mxu0 %v224
  %304 = vmatprep.subr.bf16.mxu0 0
  %305 = vmatpush1.bf16.msra.mxu0 %v223
  %306 = vmatprep.subr.bf16.mxu0 0
  %307 = vmatpush1.bf16.msra.mxu0 %v222
  %308 = vmatprep.subr.bf16.mxu0 0
  %309 = vmatpush1.bf16.msra.mxu0 %v221
  %310 = vmatprep.subr.bf16.mxu0 0
  %311 = vmatpush1.bf16.msra.mxu0 %v220
  %312 = vmatprep.subr.bf16.mxu0 0
  %313 = vmatpush1.bf16.msra.mxu0 %v219
  %314 = vmatprep.subr.bf16.mxu0 0
  %315 = vmatpush1.bf16.msra.mxu0 %v218
  %316 = vmatprep.subr.bf16.mxu0 0
  %317 = vmatpush2.bf16.msra.mxu0 0
  %318 = vmatprep.subr.bf16.mxu0 0
  %319 = vmatpush2.bf16.msra.mxu0 0
  %320 = vmatprep.subr.bf16.mxu0 0
  %321 = vmatpush2.bf16.msra.mxu0 0
  %322 = vmatprep.subr.bf16.mxu0 0
  %323 = vmatpush2.bf16.msra.mxu0 0
  %324 = vmatprep.subr.bf16.mxu0 0
  %325 = vmatpush2.bf16.msra.mxu0 0
  %326 = vmatprep.subr.bf16.mxu0 0
  %327 = vmatpush2.bf16.msra.mxu0 %v228
  %328 = vmatprep.subr.bf16.mxu0 0
  %329 = vmatpush2.bf16.msra.mxu0 %v227
  %330 = vmatprep.subr.bf16.mxu0 0
  %331 = vmatpush2.bf16.msra.mxu0 %v226
  %332 = vmatprep.mubr.bf16.mxu0 %v258
  %333 = vmatmul.mubr.bf16.gmra.mxu0 %v89
  %v334 = vpop.f32.mrf.mxu0
  %v335 = vadd.f32 %v295, %v334
  %v336 = vpop.f32.mrf.mxu0
  %v337 = vpop.f32.mrf.mxu0
  %v338 = vpop.f32.mrf.mxu0
  %339 = vdwg.mxu0
  %vm340 = vcmp.ge.f32.partialorder %v335, 0.0
  %v341 = vld [vmem:[%s3] sm:$0x1]
  %v343 = vlaneseq
  %v344 = vshrl.u32 %v343, 7
  %v345 = vsub.s32 0, %v344
  %v346 = vrot.slane %v341, %v345
  %v348 = vmul.f32 %v346, %v335
  %v349 = vsel %vm340, %v335, %v348
  %v350 = vpack.c.bf16 %v349, %v349
  %351 = vst [vmem:[%s4] sm:$0xf] %v350
  // Predicated region
  $region18: #{encoder_forward.12} parent=0 // pred_check
    _
  $region19: #{encoder_forward.12} parent=0 // pred_check_branch
    %353 = sbr.rel (0) target = $region21
  $region20: #{encoder_forward.12} parent=0 // pred_region
    _
  $region21: #{encoder_forward.12} parent=0 // pred_fallthru
    _
  // Predicated region
  $region22: #{encoder_forward.12} parent=0 // pred_check
    _
  $region23: #{encoder_forward.12} parent=0 // pred_check_branch
    %355 = sbr.rel (0) target = $region25
  $region24: #{encoder_forward.12} parent=0 // pred_region
    _
  $region25: #{encoder_forward.12} parent=0 // pred_fallthru
    _

// kernel: encoder_forward.13
$region0: #{encoder_forward.13}
  #allocation0 [shape = 'u32[]', space=smem, size = 0x4, offset = 0x4, fixed_abs, tag = 'smem constant byte address 0x4 - core index']
  #allocation1 [shape = 'u32[144,128]{1,0:T(1,128)}', space=vmem, size = 0x12000, scoped, tag = 'internal scratch']
  %s0 = inlined_call_operand.vmem [shape: bf16[8,648], index: 0, kind: input, shape index: {}]
  %s1 = inlined_call_operand.vmem [shape: bf16[648,128], index: 1, kind: input, shape index: {}]
  %s2 = inlined_call_operand.vmem [shape: f32[1,128], index: 2, kind: input, shape index: {}]
  %s3 = inlined_call_operand.vmem [shape: f32[1,128], index: 3, kind: input, shape index: {}]
  %s4 = inlined_call_operand.vmem [shape: bf16[8,128], index: 4, kind: output, shape index: {}]
  %s5 = sld [smem:[#allocation0]]
  $region26: #{encoder_forward.13} parent=0
    _
  %s7 = ssub.s32 1, %s5
  %s8 = scalar_select 0, %s7, %s5
  // Predicated region
  $region2: #{encoder_forward.13} parent=0 // pred_check
    _
  $region3: #{encoder_forward.13} parent=0 // pred_check_branch
    %10 = sbr.rel (0) target = $region5
  $region4: #{encoder_forward.13} parent=0 // pred_region
    _
  $region5: #{encoder_forward.13} parent=0 // pred_fallthru
    _
  // Predicated region
  $region6: #{encoder_forward.13} parent=0 // pred_check
    _
  $region7: #{encoder_forward.13} parent=0 // pred_check_branch
    %12 = sbr.rel (0) target = $region9
  $region8: #{encoder_forward.13} parent=0 // pred_region
    _
  $region9: #{encoder_forward.13} parent=0 // pred_fallthru
    _
  // Predicated region
  $region10: #{encoder_forward.13} parent=0 // pred_check
    _
  $region11: #{encoder_forward.13} parent=0 // pred_check_branch
    %14 = sbr.rel (0) target = $region13
  $region12: #{encoder_forward.13} parent=0 // pred_region
    _
  $region13: #{encoder_forward.13} parent=0 // pred_fallthru
    _
  // Predicated region
  $region14: #{encoder_forward.13} parent=0 // pred_check
    _
  $region15: #{encoder_forward.13} parent=0 // pred_check_branch
    %16 = sbr.rel (0) target = $region17
  $region16: #{encoder_forward.13} parent=0 // pred_region
    _
  $region17: #{encoder_forward.13} parent=0 // pred_fallthru
    _
  %v18 = vld [vmem:[%s0] sm:$0xff]
  %v19 = vld [vmem:[%s0 + $0x8] sm:$0xff]
  %v20 = vld [vmem:[%s0 + $0x10] sm:$0xff]
  %v21 = vld [vmem:[%s1] sm:$0xf]
  %v22 = vld [vmem:[%s1 + $0x4] sm:$0xf]
  %v23 = vld [vmem:[%s1 + $0x8] sm:$0xf]
  %v24 = vld [vmem:[%s1 + $0xc] sm:$0xf]
  %v25 = vld [vmem:[%s1 + $0x10] sm:$0xf]
  %v26 = vld [vmem:[%s1 + $0x14] sm:$0xf]
  %v27 = vld [vmem:[%s1 + $0x18] sm:$0xf]
  %v28 = vld [vmem:[%s1 + $0x1c] sm:$0xf]
  %v29 = vld [vmem:[%s1 + $0x20] sm:$0xf]
  %v30 = vld [vmem:[%s1 + $0x24] sm:$0xf]
  %v31 = vld [vmem:[%s1 + $0x28] sm:$0xf]
  %v32 = vld [vmem:[%s1 + $0x2c] sm:$0xf]
  %v33 = vld [vmem:[%s1 + $0x30] sm:$0xf]
  %v34 = vld [vmem:[%s1 + $0x34] sm:$0xf]
  %v35 = vld [vmem:[%s1 + $0x38] sm:$0xf]
  %v36 = vld [vmem:[%s1 + $0x3c] sm:$0xf]
  %v37 = vld [vmem:[%s1 + $0x40] sm:$0xf]
  %v38 = vld [vmem:[%s1 + $0x44] sm:$0xf]
  %v39 = vld [vmem:[%s1 + $0x48] sm:$0xf]
  %v40 = vld [vmem:[%s1 + $0x4c] sm:$0xf]
  %v41 = vld [vmem:[%s1 + $0x50] sm:$0xf]
  %v42 = vld [vmem:[%s1 + $0x54] sm:$0xf]
  %v43 = vld [vmem:[%s1 + $0x58] sm:$0xf]
  %v44 = vld [vmem:[%s1 + $0x5c] sm:$0xf]
  %v45 = vld [vmem:[%s1 + $0x60] sm:$0xf]
  %v46 = vld [vmem:[%s1 + $0x64] sm:$0xf]
  %v47 = vld [vmem:[%s1 + $0x68] sm:$0xf]
  %v48 = vld [vmem:[%s1 + $0x6c] sm:$0xf]
  %v49 = vld [vmem:[%s1 + $0x70] sm:$0xf]
  %v50 = vld [vmem:[%s1 + $0x74] sm:$0xf]
  %v51 = vld [vmem:[%s1 + $0x78] sm:$0xf]
  %v52 = vld [vmem:[%s1 + $0x7c] sm:$0xf]
  %v53 = vld [vmem:[%s1 + $0x80] sm:$0xf]
  %v54 = vld [vmem:[%s1 + $0x84] sm:$0xf]
  %v55 = vld [vmem:[%s1 + $0x88] sm:$0xf]
  %v56 = vld [vmem:[%s1 + $0x8c] sm:$0xf]
  %v57 = vld [vmem:[%s1 + $0x90] sm:$0xf]
  %v58 = vld [vmem:[%s1 + $0x94] sm:$0xf]
  %v59 = vld [vmem:[%s1 + $0x98] sm:$0xf]
  %v60 = vld [vmem:[%s1 + $0x9c] sm:$0xf]
  %v61 = vld [vmem:[%s1 + $0xa0] sm:$0xf]
  %v62 = vld [vmem:[%s1 + $0xa4] sm:$0xf]
  %v63 = vld [vmem:[%s1 + $0xa8] sm:$0xf]
  %v64 = vld [vmem:[%s1 + $0xac] sm:$0xf]
  %v65 = vld [vmem:[%s1 + $0xb0] sm:$0xf]
  %v66 = vld [vmem:[%s1 + $0xb4] sm:$0xf]
  %v67 = vld [vmem:[%s1 + $0xb8] sm:$0xf]
  %v68 = vld [vmem:[%s1 + $0xbc] sm:$0xf]
  %v69 = vld [vmem:[%s1 + $0xc0] sm:$0xf]
  %v70 = vld [vmem:[%s1 + $0xc4] sm:$0xf]
  %v71 = vld [vmem:[%s1 + $0xc8] sm:$0xf]
  %v72 = vld [vmem:[%s1 + $0xcc] sm:$0xf]
  %v73 = vld [vmem:[%s1 + $0xd0] sm:$0xf]
  %v74 = vld [vmem:[%s1 + $0xd4] sm:$0xf]
  %v75 = vld [vmem:[%s1 + $0xd8] sm:$0xf]
  %v76 = vld [vmem:[%s1 + $0xdc] sm:$0xf]
  %v77 = vld [vmem:[%s1 + $0xe0] sm:$0xf]
  %v78 = vld [vmem:[%s1 + $0xe4] sm:$0xf]
  %v79 = vld [vmem:[%s1 + $0xe8] sm:$0xf]
  %v80 = vld [vmem:[%s1 + $0xec] sm:$0xf]
  %v81 = vld [vmem:[%s1 + $0xf0] sm:$0xf]
  %v82 = vld [vmem:[%s1 + $0xf4] sm:$0xf]
  %v83 = vld [vmem:[%s1 + $0xf8] sm:$0xf]
  %v84 = vld [vmem:[%s1 + $0xfc] sm:$0xf]
  %v85 = vld [vmem:[%s1 + $0x100] sm:$0xf]
  %v86 = vld [vmem:[%s1 + $0x104] sm:$0xf]
  %v87 = vld [vmem:[%s1 + $0x108] sm:$0xf]
  %v88 = vld [vmem:[%s1 + $0x10c] sm:$0xf]
  %v89 = vld [vmem:[%s1 + $0x110] sm:$0xf]
  %v90 = vld [vmem:[%s1 + $0x114] sm:$0xf]
  %v91 = vld [vmem:[%s1 + $0x118] sm:$0xf]
  %v92 = vld [vmem:[%s1 + $0x11c] sm:$0xf]
  %v93 = vld [vmem:[%s1 + $0x120] sm:$0xf]
  %v94 = vld [vmem:[%s1 + $0x124] sm:$0xf]
  %v95 = vld [vmem:[%s1 + $0x128] sm:$0xf]
  %v96 = vld [vmem:[%s1 + $0x12c] sm:$0xf]
  %v97 = vld [vmem:[%s1 + $0x130] sm:$0xf]
  %v98 = vld [vmem:[%s1 + $0x134] sm:$0xf]
  %v99 = vld [vmem:[%s1 + $0x138] sm:$0xf]
  %v100 = vld [vmem:[%s1 + $0x13c] sm:$0xf]
  %v101 = vld [vmem:[%s1 + $0x140] sm:$0xf]
  %v102 = vld [vmem:[%s2] sm:$0x1]
  %v104 = vlaneseq
  %v105 = vshrl.u32 %v104, 7
  %v106 = vsub.s32 0, %v105
  %v107 = vrot.slane %v102, %v106
  %v112 = vunpack.c.l.b16 %v18
  %v113 = vunpack.c.h.b16 %v18
  %v114 = vunpack.c.l.b16 %v19
  %v115 = vunpack.c.h.b16 %v19
  %v116 = vunpack.c.l.b16 %v20
  %v117 = vunpack.c.h.b16 %v20
  %v118 = vpack.c.b16 %v112, %v112
  %v119 = vpack.c.b16 %v113, %v113
  %v120 = vpack.c.b16 %v114, %v114
  %v121 = vpack.c.b16 %v115, %v115
  %v122 = vpack.c.b16 %v116, %v116
  %v123 = vpack.c.b16 %v117, %v117
  %v210 = vunpack.c.l.b16 %v21
  %v211 = vunpack.c.l.b16 %v22
  %v212 = vunpack.c.l.b16 %v23
  %v213 = vunpack.c.l.b16 %v24
  %v214 = vunpack.c.l.b16 %v25
  %v215 = vunpack.c.l.b16 %v26
  %v216 = vunpack.c.l.b16 %v27
  %v217 = vunpack.c.l.b16 %v28
  %v218 = vunpack.c.l.b16 %v29
  %v219 = vunpack.c.l.b16 %v30
  %v220 = vunpack.c.l.b16 %v31
  %v221 = vunpack.c.l.b16 %v32
  %v222 = vunpack.c.l.b16 %v33
  %v223 = vunpack.c.l.b16 %v34
  %v224 = vunpack.c.l.b16 %v35
  %v225 = vunpack.c.l.b16 %v36
  %v226 = vunpack.c.l.b16 %v37
  %v227 = vunpack.c.l.b16 %v38
  %v228 = vunpack.c.l.b16 %v39
  %v229 = vunpack.c.l.b16 %v40
  %v230 = vunpack.c.l.b16 %v41
  %v231 = vunpack.c.l.b16 %v42
  %v232 = vunpack.c.l.b16 %v43
  %v233 = vunpack.c.l.b16 %v44
  %v234 = vunpack.c.l.b16 %v45
  %v235 = vunpack.c.l.b16 %v46
  %v236 = vunpack.c.l.b16 %v47
  %v237 = vunpack.c.l.b16 %v48
  %v238 = vunpack.c.l.b16 %v49
  %v239 = vunpack.c.l.b16 %v50
  %v240 = vunpack.c.l.b16 %v51
  %v241 = vunpack.c.l.b16 %v52
  %v242 = vunpack.c.l.b16 %v53
  %v243 = vunpack.c.l.b16 %v54
  %v244 = vunpack.c.l.b16 %v55
  %v245 = vunpack.c.l.b16 %v56
  %v246 = vunpack.c.l.b16 %v57
  %v247 = vunpack.c.l.b16 %v58
  %v248 = vunpack.c.l.b16 %v59
  %v249 = vunpack.c.l.b16 %v60
  %v250 = vunpack.c.l.b16 %v61
  %v251 = vunpack.c.l.b16 %v62
  %v252 = vunpack.c.l.b16 %v63
  %v253 = vunpack.c.l.b16 %v64
  %v254 = vunpack.c.l.b16 %v65
  %v255 = vunpack.c.l.b16 %v66
  %v256 = vunpack.c.l.b16 %v67
  %v257 = vunpack.c.l.b16 %v68
  %v258 = vunpack.c.l.b16 %v69
  %v259 = vunpack.c.l.b16 %v70
  %v260 = vunpack.c.l.b16 %v71
  %v261 = vunpack.c.l.b16 %v72
  %v262 = vunpack.c.l.b16 %v73
  %v263 = vunpack.c.l.b16 %v74
  %v264 = vunpack.c.l.b16 %v75
  %v265 = vunpack.c.l.b16 %v76
  %v266 = vunpack.c.l.b16 %v77
  %v267 = vunpack.c.l.b16 %v78
  %v268 = vunpack.c.l.b16 %v79
  %v269 = vunpack.c.l.b16 %v80
  %v270 = vunpack.c.l.b16 %v81
  %v271 = vunpack.c.l.b16 %v82
  %v272 = vunpack.c.l.b16 %v83
  %v273 = vunpack.c.l.b16 %v84
  %v274 = vunpack.c.l.b16 %v85
  %v275 = vunpack.c.l.b16 %v86
  %v276 = vunpack.c.l.b16 %v87
  %v277 = vunpack.c.l.b16 %v88
  %v278 = vunpack.c.l.b16 %v89
  %v279 = vunpack.c.l.b16 %v90
  %v280 = vunpack.c.l.b16 %v91
  %v281 = vunpack.c.l.b16 %v92
  %v282 = vunpack.c.l.b16 %v93
  %v283 = vunpack.c.l.b16 %v94
  %v284 = vunpack.c.l.b16 %v95
  %v285 = vunpack.c.l.b16 %v96
  %v286 = vunpack.c.l.b16 %v97
  %v287 = vunpack.c.l.b16 %v98
  %v288 = vunpack.c.l.b16 %v99
  %v289 = vunpack.c.l.b16 %v100
  %v290 = vunpack.c.l.b16 %v101
  %v291 = vpack.c.b16 %v211, %v210
  %v292 = vpack.c.b16 %v213, %v212
  %v293 = vpack.c.b16 %v215, %v214
  %v294 = vpack.c.b16 %v217, %v216
  %v295 = vpack.c.b16 %v219, %v218
  %v296 = vpack.c.b16 %v221, %v220
  %v297 = vpack.c.b16 %v223, %v222
  %v298 = vpack.c.b16 %v225, %v224
  %v299 = vpack.c.b16 %v227, %v226
  %v300 = vpack.c.b16 %v229, %v228
  %v301 = vpack.c.b16 %v231, %v230
  %v302 = vpack.c.b16 %v233, %v232
  %v303 = vpack.c.b16 %v235, %v234
  %v304 = vpack.c.b16 %v237, %v236
  %v305 = vpack.c.b16 %v239, %v238
  %v306 = vpack.c.b16 %v241, %v240
  %v307 = vpack.c.b16 %v243, %v242
  %v308 = vpack.c.b16 %v245, %v244
  %v309 = vpack.c.b16 %v247, %v246
  %v310 = vpack.c.b16 %v249, %v248
  %v311 = vpack.c.b16 %v251, %v250
  %v312 = vpack.c.b16 %v253, %v252
  %v313 = vpack.c.b16 %v255, %v254
  %v314 = vpack.c.b16 %v257, %v256
  %v315 = vpack.c.b16 %v259, %v258
  %v316 = vpack.c.b16 %v261, %v260
  %v317 = vpack.c.b16 %v263, %v262
  %v318 = vpack.c.b16 %v265, %v264
  %v319 = vpack.c.b16 %v267, %v266
  %v320 = vpack.c.b16 %v269, %v268
  %v321 = vpack.c.b16 %v271, %v270
  %v322 = vpack.c.b16 %v273, %v272
  %v323 = vpack.c.b16 %v275, %v274
  %v324 = vpack.c.b16 %v277, %v276
  %v325 = vpack.c.b16 %v279, %v278
  %v326 = vpack.c.b16 %v281, %v280
  %v327 = vpack.c.b16 %v283, %v282
  %v328 = vpack.c.b16 %v285, %v284
  %v329 = vpack.c.b16 %v287, %v286
  %v330 = vpack.c.b16 %v289, %v288
  %v331 = vpack.c.b16 %v290, %v290
  %vm372 = vcmask 64512
  %v374 = vsel %vm372, %v123, 0
  %vm376 = vcmask 1043456
  %v378 = vsel %vm376, %v331, 0
  %380 = vmatprep.subr.bf16.mxu0 0
  %381 = vmatpush1.bf16.msra.mxu0 %v298
  %382 = vmatprep.subr.bf16.mxu0 0
  %383 = vmatpush1.bf16.msra.mxu0 %v297
  %384 = vmatprep.subr.bf16.mxu0 0
  %385 = vmatpush1.bf16.msra.mxu0 %v296
  %386 = vmatprep.subr.bf16.mxu0 0
  %387 = vmatpush1.bf16.msra.mxu0 %v295
  %388 = vmatprep.subr.bf16.mxu0 0
  %389 = vmatpush1.bf16.msra.mxu0 %v294
  %390 = vmatprep.subr.bf16.mxu0 0
  %391 = vmatpush1.bf16.msra.mxu0 %v293
  %392 = vmatprep.subr.bf16.mxu0 0
  %393 = vmatpush1.bf16.msra.mxu0 %v292
  %394 = vmatprep.subr.bf16.mxu0 0
  %395 = vmatpush1.bf16.msra.mxu0 %v291
  %396 = vmatprep.subr.bf16.mxu0 0
  %397 = vmatpush2.bf16.msra.mxu0 %v306
  %398 = vmatprep.subr.bf16.mxu0 0
  %399 = vmatpush2.bf16.msra.mxu0 %v305
  %400 = vmatprep.subr.bf16.mxu0 0
  %401 = vmatpush2.bf16.msra.mxu0 %v304
  %402 = vmatprep.subr.bf16.mxu0 0
  %403 = vmatpush2.bf16.msra.mxu0 %v303
  %404 = vmatprep.subr.bf16.mxu0 0
  %405 = vmatpush2.bf16.msra.mxu0 %v302
  %406 = vmatprep.subr.bf16.mxu0 0
  %407 = vmatpush2.bf16.msra.mxu0 %v301
  %408 = vmatprep.subr.bf16.mxu0 0
  %409 = vmatpush2.bf16.msra.mxu0 %v300
  %410 = vmatprep.subr.bf16.mxu0 0
  %411 = vmatpush2.bf16.msra.mxu0 %v299
  %412 = vmatprep.mubr.bf16.mxu0 %v119
  %413 = vmatmul.mubr.bf16.gmra.mxu0 %v118
  %v414 = vpop.f32.mrf.mxu0
  %v415 = vadd.f32 %v107, %v414
  %v416 = vpop.f32.mrf.mxu0
  %v417 = vpop.f32.mrf.mxu0
  %v418 = vpop.f32.mrf.mxu0
  %419 = vdwg.mxu0
  %420 = vmatprep.subr.bf16.mxu0 0
  %421 = vmatpush1.bf16.msra.mxu0 %v314
  %422 = vmatprep.subr.bf16.mxu0 0
  %423 = vmatpush1.bf16.msra.mxu0 %v313
  %424 = vmatprep.subr.bf16.mxu0 0
  %425 = vmatpush1.bf16.msra.mxu0 %v312
  %426 = vmatprep.subr.bf16.mxu0 0
  %427 = vmatpush1.bf16.msra.mxu0 %v311
  %428 = vmatprep.subr.bf16.mxu0 0
  %429 = vmatpush1.bf16.msra.mxu0 %v310
  %430 = vmatprep.subr.bf16.mxu0 0
  %431 = vmatpush1.bf16.msra.mxu0 %v309
  %432 = vmatprep.subr.bf16.mxu0 0
  %433 = vmatpush1.bf16.msra.mxu0 %v308
  %434 = vmatprep.subr.bf16.mxu0 0
  %435 = vmatpush1.bf16.msra.mxu0 %v307
  %436 = vmatprep.subr.bf16.mxu0 0
  %437 = vmatpush2.bf16.msra.mxu0 %v322
  %438 = vmatprep.subr.bf16.mxu0 0
  %439 = vmatpush2.bf16.msra.mxu0 %v321
  %440 = vmatprep.subr.bf16.mxu0 0
  %441 = vmatpush2.bf16.msra.mxu0 %v320
  %442 = vmatprep.subr.bf16.mxu0 0
  %443 = vmatpush2.bf16.msra.mxu0 %v319
  %444 = vmatprep.subr.bf16.mxu0 0
  %445 = vmatpush2.bf16.msra.mxu0 %v318
  %446 = vmatprep.subr.bf16.mxu0 0
  %447 = vmatpush2.bf16.msra.mxu0 %v317
  %448 = vmatprep.subr.bf16.mxu0 0
  %449 = vmatpush2.bf16.msra.mxu0 %v316
  %450 = vmatprep.subr.bf16.mxu0 0
  %451 = vmatpush2.bf16.msra.mxu0 %v315
  %452 = vmatprep.mubr.bf16.mxu0 %v121
  %453 = vmatmul.mubr.bf16.gmra.mxu0 %v120
  %v454 = vpop.f32.mrf.mxu0
  %v455 = vadd.f32 %v415, %v454
  %v456 = vpop.f32.mrf.mxu0
  %v457 = vpop.f32.mrf.mxu0
  %v458 = vpop.f32.mrf.mxu0
  %459 = vdwg.mxu0
  %460 = vmatprep.subr.bf16.mxu0 0
  %461 = vmatpush1.bf16.msra.mxu0 %v330
  %462 = vmatprep.subr.bf16.mxu0 0
  %463 = vmatpush1.bf16.msra.mxu0 %v329
  %464 = vmatprep.subr.bf16.mxu0 0
  %465 = vmatpush1.bf16.msra.mxu0 %v328
  %466 = vmatprep.subr.bf16.mxu0 0
  %467 = vmatpush1.bf16.msra.mxu0 %v327
  %468 = vmatprep.subr.bf16.mxu0 0
  %469 = vmatpush1.bf16.msra.mxu0 %v326
  %470 = vmatprep.subr.bf16.mxu0 0
  %471 = vmatpush1.bf16.msra.mxu0 %v325
  %472 = vmatprep.subr.bf16.mxu0 0
  %473 = vmatpush1.bf16.msra.mxu0 %v324
  %474 = vmatprep.subr.bf16.mxu0 0
  %475 = vmatpush1.bf16.msra.mxu0 %v323
  %476 = vmatprep.subr.bf16.mxu0 0
  %477 = vmatpush2.bf16.msra.mxu0 0
  %478 = vmatprep.subr.bf16.mxu0 0
  %479 = vmatpush2.bf16.msra.mxu0 0
  %480 = vmatprep.subr.bf16.mxu0 0
  %481 = vmatpush2.bf16.msra.mxu0 0
  %482 = vmatprep.subr.bf16.mxu0 0
  %483 = vmatpush2.bf16.msra.mxu0 0
  %484 = vmatprep.subr.bf16.mxu0 0
  %485 = vmatpush2.bf16.msra.mxu0 0
  %486 = vmatprep.subr.bf16.mxu0 0
  %487 = vmatpush2.bf16.msra.mxu0 0
  %488 = vmatprep.subr.bf16.mxu0 0
  %489 = vmatpush2.bf16.msra.mxu0 0
  %490 = vmatprep.subr.bf16.mxu0 0
  %491 = vmatpush2.bf16.msra.mxu0 %v378
  %492 = vmatprep.mubr.bf16.mxu0 %v374
  %493 = vmatmul.mubr.bf16.gmra.mxu0 %v122
  %v494 = vpop.f32.mrf.mxu0
  %v495 = vadd.f32 %v455, %v494
  %v496 = vpop.f32.mrf.mxu0
  %v497 = vpop.f32.mrf.mxu0
  %v498 = vpop.f32.mrf.mxu0
  %499 = vdwg.mxu0
  %vm500 = vcmp.ge.f32.partialorder %v495, 0.0
  %v501 = vld [vmem:[%s3] sm:$0x1]
  %v503 = vlaneseq
  %v504 = vshrl.u32 %v503, 7
  %v505 = vsub.s32 0, %v504
  %v506 = vrot.slane %v501, %v505
  %v508 = vmul.f32 %v506, %v495
  %v509 = vsel %vm500, %v495, %v508
  %v510 = vpack.c.bf16 %v509, %v509
  %511 = vst [vmem:[%s4] sm:$0xf] %v510
  // Predicated region
  $region18: #{encoder_forward.13} parent=0 // pred_check
    _
  $region19: #{encoder_forward.13} parent=0 // pred_check_branch
    %513 = sbr.rel (0) target = $region21
  $region20: #{encoder_forward.13} parent=0 // pred_region
    _
  $region21: #{encoder_forward.13} parent=0 // pred_fallthru
    _
  // Predicated region
  $region22: #{encoder_forward.13} parent=0 // pred_check
    _
  $region23: #{encoder_forward.13} parent=0 // pred_check_branch
    %515 = sbr.rel (0) target = $region25
  $region24: #{encoder_forward.13} parent=0 // pred_region
    _
  $region25: #{encoder_forward.13} parent=0 // pred_fallthru
    _

// kernel: encoder_forward.14
$region0: #{encoder_forward.14}
  #allocation0 [shape = 'u32[]', space=smem, size = 0x4, offset = 0x4, fixed_abs, tag = 'smem constant byte address 0x4 - core index']
  #allocation1 [shape = 'u32[144,128]{1,0:T(1,128)}', space=vmem, size = 0x12000, scoped, tag = 'internal scratch']
  %s0 = inlined_call_operand.vmem [shape: bf16[2,648], index: 0, kind: input, shape index: {}]
  %s1 = inlined_call_operand.vmem [shape: bf16[648,128], index: 1, kind: input, shape index: {}]
  %s2 = inlined_call_operand.vmem [shape: f32[1,128], index: 2, kind: input, shape index: {}]
  %s3 = inlined_call_operand.vmem [shape: f32[1,128], index: 3, kind: input, shape index: {}]
  %s4 = inlined_call_operand.vmem [shape: bf16[2,128], index: 4, kind: output, shape index: {}]
  %s5 = sld [smem:[#allocation0]]
  $region26: #{encoder_forward.14} parent=0
    _
  %s7 = ssub.s32 1, %s5
  %s8 = scalar_select 0, %s7, %s5
  // Predicated region
  $region2: #{encoder_forward.14} parent=0 // pred_check
    _
  $region3: #{encoder_forward.14} parent=0 // pred_check_branch
    %10 = sbr.rel (0) target = $region5
  $region4: #{encoder_forward.14} parent=0 // pred_region
    _
  $region5: #{encoder_forward.14} parent=0 // pred_fallthru
    _
  // Predicated region
  $region6: #{encoder_forward.14} parent=0 // pred_check
    _
  $region7: #{encoder_forward.14} parent=0 // pred_check_branch
    %12 = sbr.rel (0) target = $region9
  $region8: #{encoder_forward.14} parent=0 // pred_region
    _
  $region9: #{encoder_forward.14} parent=0 // pred_fallthru
    _
  // Predicated region
  $region10: #{encoder_forward.14} parent=0 // pred_check
    _
  $region11: #{encoder_forward.14} parent=0 // pred_check_branch
    %14 = sbr.rel (0) target = $region13
  $region12: #{encoder_forward.14} parent=0 // pred_region
    _
  $region13: #{encoder_forward.14} parent=0 // pred_fallthru
    _
  // Predicated region
  $region14: #{encoder_forward.14} parent=0 // pred_check
    _
  $region15: #{encoder_forward.14} parent=0 // pred_check_branch
    %16 = sbr.rel (0) target = $region17
  $region16: #{encoder_forward.14} parent=0 // pred_region
    _
  $region17: #{encoder_forward.14} parent=0 // pred_fallthru
    _
  %v18 = vld [vmem:[%s0] sm:$0x3f]
  %v19 = vld [vmem:[%s1] sm:$0xf]
  %v20 = vld [vmem:[%s1 + $0x4] sm:$0xf]
  %v21 = vld [vmem:[%s1 + $0x8] sm:$0xf]
  %v22 = vld [vmem:[%s1 + $0xc] sm:$0xf]
  %v23 = vld [vmem:[%s1 + $0x10] sm:$0xf]
  %v24 = vld [vmem:[%s1 + $0x14] sm:$0xf]
  %v25 = vld [vmem:[%s1 + $0x18] sm:$0xf]
  %v26 = vld [vmem:[%s1 + $0x1c] sm:$0xf]
  %v27 = vld [vmem:[%s1 + $0x20] sm:$0xf]
  %v28 = vld [vmem:[%s1 + $0x24] sm:$0xf]
  %v29 = vld [vmem:[%s1 + $0x28] sm:$0xf]
  %v30 = vld [vmem:[%s1 + $0x2c] sm:$0xf]
  %v31 = vld [vmem:[%s1 + $0x30] sm:$0xf]
  %v32 = vld [vmem:[%s1 + $0x34] sm:$0xf]
  %v33 = vld [vmem:[%s1 + $0x38] sm:$0xf]
  %v34 = vld [vmem:[%s1 + $0x3c] sm:$0xf]
  %v35 = vld [vmem:[%s1 + $0x40] sm:$0xf]
  %v36 = vld [vmem:[%s1 + $0x44] sm:$0xf]
  %v37 = vld [vmem:[%s1 + $0x48] sm:$0xf]
  %v38 = vld [vmem:[%s1 + $0x4c] sm:$0xf]
  %v39 = vld [vmem:[%s1 + $0x50] sm:$0xf]
  %v40 = vld [vmem:[%s1 + $0x54] sm:$0xf]
  %v41 = vld [vmem:[%s1 + $0x58] sm:$0xf]
  %v42 = vld [vmem:[%s1 + $0x5c] sm:$0xf]
  %v43 = vld [vmem:[%s1 + $0x60] sm:$0xf]
  %v44 = vld [vmem:[%s1 + $0x64] sm:$0xf]
  %v45 = vld [vmem:[%s1 + $0x68] sm:$0xf]
  %v46 = vld [vmem:[%s1 + $0x6c] sm:$0xf]
  %v47 = vld [vmem:[%s1 + $0x70] sm:$0xf]
  %v48 = vld [vmem:[%s1 + $0x74] sm:$0xf]
  %v49 = vld [vmem:[%s1 + $0x78] sm:$0xf]
  %v50 = vld [vmem:[%s1 + $0x7c] sm:$0xf]
  %v51 = vld [vmem:[%s1 + $0x80] sm:$0xf]
  %v52 = vld [vmem:[%s1 + $0x84] sm:$0xf]
  %v53 = vld [vmem:[%s1 + $0x88] sm:$0xf]
  %v54 = vld [vmem:[%s1 + $0x8c] sm:$0xf]
  %v55 = vld [vmem:[%s1 + $0x90] sm:$0xf]
  %v56 = vld [vmem:[%s1 + $0x94] sm:$0xf]
  %v57 = vld [vmem:[%s1 + $0x98] sm:$0xf]
  %v58 = vld [vmem:[%s1 + $0x9c] sm:$0xf]
  %v59 = vld [vmem:[%s1 + $0xa0] sm:$0xf]
  %v60 = vld [vmem:[%s1 + $0xa4] sm:$0xf]
  %v61 = vld [vmem:[%s1 + $0xa8] sm:$0xf]
  %v62 = vld [vmem:[%s1 + $0xac] sm:$0xf]
  %v63 = vld [vmem:[%s1 + $0xb0] sm:$0xf]
  %v64 = vld [vmem:[%s1 + $0xb4] sm:$0xf]
  %v65 = vld [vmem:[%s1 + $0xb8] sm:$0xf]
  %v66 = vld [vmem:[%s1 + $0xbc] sm:$0xf]
  %v67 = vld [vmem:[%s1 + $0xc0] sm:$0xf]
  %v68 = vld [vmem:[%s1 + $0xc4] sm:$0xf]
  %v69 = vld [vmem:[%s1 + $0xc8] sm:$0xf]
  %v70 = vld [vmem:[%s1 + $0xcc] sm:$0xf]
  %v71 = vld [vmem:[%s1 + $0xd0] sm:$0xf]
  %v72 = vld [vmem:[%s1 + $0xd4] sm:$0xf]
  %v73 = vld [vmem:[%s1 + $0xd8] sm:$0xf]
  %v74 = vld [vmem:[%s1 + $0xdc] sm:$0xf]
  %v75 = vld [vmem:[%s1 + $0xe0] sm:$0xf]
  %v76 = vld [vmem:[%s1 + $0xe4] sm:$0xf]
  %v77 = vld [vmem:[%s1 + $0xe8] sm:$0xf]
  %v78 = vld [vmem:[%s1 + $0xec] sm:$0xf]
  %v79 = vld [vmem:[%s1 + $0xf0] sm:$0xf]
  %v80 = vld [vmem:[%s1 + $0xf4] sm:$0xf]
  %v81 = vld [vmem:[%s1 + $0xf8] sm:$0xf]
  %v82 = vld [vmem:[%s1 + $0xfc] sm:$0xf]
  %v83 = vld [vmem:[%s1 + $0x100] sm:$0xf]
  %v84 = vld [vmem:[%s1 + $0x104] sm:$0xf]
  %v85 = vld [vmem:[%s1 + $0x108] sm:$0xf]
  %v86 = vld [vmem:[%s1 + $0x10c] sm:$0xf]
  %v87 = vld [vmem:[%s1 + $0x110] sm:$0xf]
  %v88 = vld [vmem:[%s1 + $0x114] sm:$0xf]
  %v89 = vld [vmem:[%s1 + $0x118] sm:$0xf]
  %v90 = vld [vmem:[%s1 + $0x11c] sm:$0xf]
  %v91 = vld [vmem:[%s1 + $0x120] sm:$0xf]
  %v92 = vld [vmem:[%s1 + $0x124] sm:$0xf]
  %v93 = vld [vmem:[%s1 + $0x128] sm:$0xf]
  %v94 = vld [vmem:[%s1 + $0x12c] sm:$0xf]
  %v95 = vld [vmem:[%s1 + $0x130] sm:$0xf]
  %v96 = vld [vmem:[%s1 + $0x134] sm:$0xf]
  %v97 = vld [vmem:[%s1 + $0x138] sm:$0xf]
  %v98 = vld [vmem:[%s1 + $0x13c] sm:$0xf]
  %v99 = vld [vmem:[%s1 + $0x140] sm:$0xf]
  %v100 = vld [vmem:[%s2] sm:$0x1]
  %v102 = vlaneseq
  %v103 = vshrl.u32 %v102, 7
  %v104 = vsub.s32 0, %v103
  %v105 = vrot.slane %v100, %v104
  %v108 = vcombine.high %v18, %v18
  %v110 = vunpack.c.l.s4 1966171168
  %v111 = vunpack.c.0.s8 %v110
  %v112 = vlaneseq
  %v113 = vshrl.u32 %v112, 7
  %v114 = vsub.s32 %v111, %v113
  %v115 = vrot.slane %v18, %v114
  %v117 = vunpack.c.l.s4 1966171168
  %v118 = vunpack.c.0.s8 %v117
  %v119 = vlaneseq
  %v120 = vshrl.u32 %v119, 7
  %v121 = vsub.s32 %v118, %v120
  %v122 = vrot.slane %v108, %v121
  %v123 = vcombine.high %v115, %v115
  %v124 = vcombine.high %v122, %v122
  %v126 = vunpack.c.l.s4 1966171168
  %v127 = vunpack.c.0.s8 %v126
  %v128 = vlaneseq
  %v129 = vshrl.u32 %v128, 7
  %v130 = vsub.s32 %v127, %v129
  %v131 = vrot.slane %v115, %v130
  %v133 = vunpack.c.l.s4 1966171168
  %v134 = vunpack.c.0.s8 %v133
  %v135 = vlaneseq
  %v136 = vshrl.u32 %v135, 7
  %v137 = vsub.s32 %v134, %v136
  %v138 = vrot.slane %v122, %v137
  %v140 = vunpack.c.l.s4 1966171168
  %v141 = vunpack.c.0.s8 %v140
  %v142 = vlaneseq
  %v143 = vshrl.u32 %v142, 7
  %v144 = vsub.s32 %v141, %v143
  %v145 = vrot.slane %v123, %v144
  %v147 = vunpack.c.l.s4 1966171168
  %v148 = vunpack.c.0.s8 %v147
  %v149 = vlaneseq
  %v150 = vshrl.u32 %v149, 7
  %v151 = vsub.s32 %v148, %v150
  %v152 = vrot.slane %v124, %v151
  %v153 = vcombine.high %v131, %v131
  %v154 = vcombine.high %v145, %v145
  %v241 = vunpack.c.l.b16 %v19
  %v242 = vunpack.c.l.b16 %v20
  %v243 = vunpack.c.l.b16 %v21
  %v244 = vunpack.c.l.b16 %v22
  %v245 = vunpack.c.l.b16 %v23
  %v246 = vunpack.c.l.b16 %v24
  %v247 = vunpack.c.l.b16 %v25
  %v248 = vunpack.c.l.b16 %v26
  %v249 = vunpack.c.l.b16 %v27
  %v250 = vunpack.c.l.b16 %v28
  %v251 = vunpack.c.l.b16 %v29
  %v252 = vunpack.c.l.b16 %v30
  %v253 = vunpack.c.l.b16 %v31
  %v254 = vunpack.c.l.b16 %v32
  %v255 = vunpack.c.l.b16 %v33
  %v256 = vunpack.c.l.b16 %v34
  %v257 = vunpack.c.l.b16 %v35
  %v258 = vunpack.c.l.b16 %v36
  %v259 = vunpack.c.l.b16 %v37
  %v260 = vunpack.c.l.b16 %v38
  %v261 = vunpack.c.l.b16 %v39
  %v262 = vunpack.c.l.b16 %v40
  %v263 = vunpack.c.l.b16 %v41
  %v264 = vunpack.c.l.b16 %v42
  %v265 = vunpack.c.l.b16 %v43
  %v266 = vunpack.c.l.b16 %v44
  %v267 = vunpack.c.l.b16 %v45
  %v268 = vunpack.c.l.b16 %v46
  %v269 = vunpack.c.l.b16 %v47
  %v270 = vunpack.c.l.b16 %v48
  %v271 = vunpack.c.l.b16 %v49
  %v272 = vunpack.c.l.b16 %v50
  %v273 = vunpack.c.l.b16 %v51
  %v274 = vunpack.c.l.b16 %v52
  %v275 = vunpack.c.l.b16 %v53
  %v276 = vunpack.c.l.b16 %v54
  %v277 = vunpack.c.l.b16 %v55
  %v278 = vunpack.c.l.b16 %v56
  %v279 = vunpack.c.l.b16 %v57
  %v280 = vunpack.c.l.b16 %v58
  %v281 = vunpack.c.l.b16 %v59
  %v282 = vunpack.c.l.b16 %v60
  %v283 = vunpack.c.l.b16 %v61
  %v284 = vunpack.c.l.b16 %v62
  %v285 = vunpack.c.l.b16 %v63
  %v286 = vunpack.c.l.b16 %v64
  %v287 = vunpack.c.l.b16 %v65
  %v288 = vunpack.c.l.b16 %v66
  %v289 = vunpack.c.l.b16 %v67
  %v290 = vunpack.c.l.b16 %v68
  %v291 = vunpack.c.l.b16 %v69
  %v292 = vunpack.c.l.b16 %v70
  %v293 = vunpack.c.l.b16 %v71
  %v294 = vunpack.c.l.b16 %v72
  %v295 = vunpack.c.l.b16 %v73
  %v296 = vunpack.c.l.b16 %v74
  %v297 = vunpack.c.l.b16 %v75
  %v298 = vunpack.c.l.b16 %v76
  %v299 = vunpack.c.l.b16 %v77
  %v300 = vunpack.c.l.b16 %v78
  %v301 = vunpack.c.l.b16 %v79
  %v302 = vunpack.c.l.b16 %v80
  %v303 = vunpack.c.l.b16 %v81
  %v304 = vunpack.c.l.b16 %v82
  %v305 = vunpack.c.l.b16 %v83
  %v306 = vunpack.c.l.b16 %v84
  %v307 = vunpack.c.l.b16 %v85
  %v308 = vunpack.c.l.b16 %v86
  %v309 = vunpack.c.l.b16 %v87
  %v310 = vunpack.c.l.b16 %v88
  %v311 = vunpack.c.l.b16 %v89
  %v312 = vunpack.c.l.b16 %v90
  %v313 = vunpack.c.l.b16 %v91
  %v314 = vunpack.c.l.b16 %v92
  %v315 = vunpack.c.l.b16 %v93
  %v316 = vunpack.c.l.b16 %v94
  %v317 = vunpack.c.l.b16 %v95
  %v318 = vunpack.c.l.b16 %v96
  %v319 = vunpack.c.l.b16 %v97
  %v320 = vunpack.c.l.b16 %v98
  %v321 = vunpack.c.l.b16 %v99
  %v322 = vpack.c.b16 %v242, %v241
  %v323 = vpack.c.b16 %v244, %v243
  %v324 = vpack.c.b16 %v246, %v245
  %v325 = vpack.c.b16 %v248, %v247
  %v326 = vpack.c.b16 %v250, %v249
  %v327 = vpack.c.b16 %v252, %v251
  %v328 = vpack.c.b16 %v254, %v253
  %v329 = vpack.c.b16 %v256, %v255
  %v330 = vpack.c.b16 %v258, %v257
  %v331 = vpack.c.b16 %v260, %v259
  %v332 = vpack.c.b16 %v262, %v261
  %v333 = vpack.c.b16 %v264, %v263
  %v334 = vpack.c.b16 %v266, %v265
  %v335 = vpack.c.b16 %v268, %v267
  %v336 = vpack.c.b16 %v270, %v269
  %v337 = vpack.c.b16 %v272, %v271
  %v338 = vpack.c.b16 %v274, %v273
  %v339 = vpack.c.b16 %v276, %v275
  %v340 = vpack.c.b16 %v278, %v277
  %v341 = vpack.c.b16 %v280, %v279
  %v342 = vpack.c.b16 %v282, %v281
  %v343 = vpack.c.b16 %v284, %v283
  %v344 = vpack.c.b16 %v286, %v285
  %v345 = vpack.c.b16 %v288, %v287
  %v346 = vpack.c.b16 %v290, %v289
  %v347 = vpack.c.b16 %v292, %v291
  %v348 = vpack.c.b16 %v294, %v293
  %v349 = vpack.c.b16 %v296, %v295
  %v350 = vpack.c.b16 %v298, %v297
  %v351 = vpack.c.b16 %v300, %v299
  %v352 = vpack.c.b16 %v302, %v301
  %v353 = vpack.c.b16 %v304, %v303
  %v354 = vpack.c.b16 %v306, %v305
  %v355 = vpack.c.b16 %v308, %v307
  %v356 = vpack.c.b16 %v310, %v309
  %v357 = vpack.c.b16 %v312, %v311
  %v358 = vpack.c.b16 %v314, %v313
  %v359 = vpack.c.b16 %v316, %v315
  %v360 = vpack.c.b16 %v318, %v317
  %v361 = vpack.c.b16 %v320, %v319
  %v362 = vpack.c.b16 %v321, %v321
  %vm403 = vcmask 64512
  %v405 = vsel %vm403, %v152, 0
  %vm407 = vcmask 1043456
  %v409 = vsel %vm407, %v362, 0
  %411 = vmatprep.subr.bf16.mxu0 0
  %412 = vmatpush1.bf16.msra.mxu0 %v329
  %413 = vmatprep.subr.bf16.mxu0 0
  %414 = vmatpush1.bf16.msra.mxu0 %v328
  %415 = vmatprep.subr.bf16.mxu0 0
  %416 = vmatpush1.bf16.msra.mxu0 %v327
  %417 = vmatprep.subr.bf16.mxu0 0
  %418 = vmatpush1.bf16.msra.mxu0 %v326
  %419 = vmatprep.subr.bf16.mxu0 0
  %420 = vmatpush1.bf16.msra.mxu0 %v325
  %421 = vmatprep.subr.bf16.mxu0 0
  %422 = vmatpush1.bf16.msra.mxu0 %v324
  %423 = vmatprep.subr.bf16.mxu0 0
  %424 = vmatpush1.bf16.msra.mxu0 %v323
  %425 = vmatprep.subr.bf16.mxu0 0
  %426 = vmatpush1.bf16.msra.mxu0 %v322
  %427 = vmatprep.subr.bf16.mxu0 0
  %428 = vmatpush2.bf16.msra.mxu0 %v337
  %429 = vmatprep.subr.bf16.mxu0 0
  %430 = vmatpush2.bf16.msra.mxu0 %v336
  %431 = vmatprep.subr.bf16.mxu0 0
  %432 = vmatpush2.bf16.msra.mxu0 %v335
  %433 = vmatprep.subr.bf16.mxu0 0
  %434 = vmatpush2.bf16.msra.mxu0 %v334
  %435 = vmatprep.subr.bf16.mxu0 0
  %436 = vmatpush2.bf16.msra.mxu0 %v333
  %437 = vmatprep.subr.bf16.mxu0 0
  %438 = vmatpush2.bf16.msra.mxu0 %v332
  %439 = vmatprep.subr.bf16.mxu0 0
  %440 = vmatpush2.bf16.msra.mxu0 %v331
  %441 = vmatprep.subr.bf16.mxu0 0
  %442 = vmatpush2.bf16.msra.mxu0 %v330
  %443 = vmatprep.mubr.bf16.mxu0 %v145
  %444 = vmatmul.mubr.bf16.gmra.mxu0 %v131
  %v445 = vpop.f32.mrf.mxu0
  %v446 = vadd.f32 %v105, %v445
  %v447 = vpop.f32.mrf.mxu0
  %v448 = vpop.f32.mrf.mxu0
  %v449 = vpop.f32.mrf.mxu0
  %450 = vdwg.mxu0
  %451 = vmatprep.subr.bf16.mxu0 0
  %452 = vmatpush1.bf16.msra.mxu0 %v345
  %453 = vmatprep.subr.bf16.mxu0 0
  %454 = vmatpush1.bf16.msra.mxu0 %v344
  %455 = vmatprep.subr.bf16.mxu0 0
  %456 = vmatpush1.bf16.msra.mxu0 %v343
  %457 = vmatprep.subr.bf16.mxu0 0
  %458 = vmatpush1.bf16.msra.mxu0 %v342
  %459 = vmatprep.subr.bf16.mxu0 0
  %460 = vmatpush1.bf16.msra.mxu0 %v341
  %461 = vmatprep.subr.bf16.mxu0 0
  %462 = vmatpush1.bf16.msra.mxu0 %v340
  %463 = vmatprep.subr.bf16.mxu0 0
  %464 = vmatpush1.bf16.msra.mxu0 %v339
  %465 = vmatprep.subr.bf16.mxu0 0
  %466 = vmatpush1.bf16.msra.mxu0 %v338
  %467 = vmatprep.subr.bf16.mxu0 0
  %468 = vmatpush2.bf16.msra.mxu0 %v353
  %469 = vmatprep.subr.bf16.mxu0 0
  %470 = vmatpush2.bf16.msra.mxu0 %v352
  %471 = vmatprep.subr.bf16.mxu0 0
  %472 = vmatpush2.bf16.msra.mxu0 %v351
  %473 = vmatprep.subr.bf16.mxu0 0
  %474 = vmatpush2.bf16.msra.mxu0 %v350
  %475 = vmatprep.subr.bf16.mxu0 0
  %476 = vmatpush2.bf16.msra.mxu0 %v349
  %477 = vmatprep.subr.bf16.mxu0 0
  %478 = vmatpush2.bf16.msra.mxu0 %v348
  %479 = vmatprep.subr.bf16.mxu0 0
  %480 = vmatpush2.bf16.msra.mxu0 %v347
  %481 = vmatprep.subr.bf16.mxu0 0
  %482 = vmatpush2.bf16.msra.mxu0 %v346
  %483 = vmatprep.mubr.bf16.mxu0 %v154
  %484 = vmatmul.mubr.bf16.gmra.mxu0 %v153
  %v485 = vpop.f32.mrf.mxu0
  %v486 = vadd.f32 %v446, %v485
  %v487 = vpop.f32.mrf.mxu0
  %v488 = vpop.f32.mrf.mxu0
  %v489 = vpop.f32.mrf.mxu0
  %490 = vdwg.mxu0
  %491 = vmatprep.subr.bf16.mxu0 0
  %492 = vmatpush1.bf16.msra.mxu0 %v361
  %493 = vmatprep.subr.bf16.mxu0 0
  %494 = vmatpush1.bf16.msra.mxu0 %v360
  %495 = vmatprep.subr.bf16.mxu0 0
  %496 = vmatpush1.bf16.msra.mxu0 %v359
  %497 = vmatprep.subr.bf16.mxu0 0
  %498 = vmatpush1.bf16.msra.mxu0 %v358
  %499 = vmatprep.subr.bf16.mxu0 0
  %500 = vmatpush1.bf16.msra.mxu0 %v357
  %501 = vmatprep.subr.bf16.mxu0 0
  %502 = vmatpush1.bf16.msra.mxu0 %v356
  %503 = vmatprep.subr.bf16.mxu0 0
  %504 = vmatpush1.bf16.msra.mxu0 %v355
  %505 = vmatprep.subr.bf16.mxu0 0
  %506 = vmatpush1.bf16.msra.mxu0 %v354
  %507 = vmatprep.subr.bf16.mxu0 0
  %508 = vmatpush2.bf16.msra.mxu0 0
  %509 = vmatprep.subr.bf16.mxu0 0
  %510 = vmatpush2.bf16.msra.mxu0 0
  %511 = vmatprep.subr.bf16.mxu0 0
  %512 = vmatpush2.bf16.msra.mxu0 0
  %513 = vmatprep.subr.bf16.mxu0 0
  %514 = vmatpush2.bf16.msra.mxu0 0
  %515 = vmatprep.subr.bf16.mxu0 0
  %516 = vmatpush2.bf16.msra.mxu0 0
  %517 = vmatprep.subr.bf16.mxu0 0
  %518 = vmatpush2.bf16.msra.mxu0 0
  %519 = vmatprep.subr.bf16.mxu0 0
  %520 = vmatpush2.bf16.msra.mxu0 0
  %521 = vmatprep.subr.bf16.mxu0 0
  %522 = vmatpush2.bf16.msra.mxu0 %v409
  %523 = vmatprep.mubr.bf16.mxu0 %v405
  %524 = vmatmul.mubr.bf16.gmra.mxu0 %v138
  %v525 = vpop.f32.mrf.mxu0
  %v526 = vadd.f32 %v486, %v525
  %v527 = vpop.f32.mrf.mxu0
  %v528 = vpop.f32.mrf.mxu0
  %v529 = vpop.f32.mrf.mxu0
  %530 = vdwg.mxu0
  %vm531 = vcmp.ge.f32.partialorder %v526, 0.0
  %v532 = vld [vmem:[%s3] sm:$0x1]
  %v534 = vlaneseq
  %v535 = vshrl.u32 %v534, 7
  %v536 = vsub.s32 0, %v535
  %v537 = vrot.slane %v532, %v536
  %v539 = vmul.f32 %v537, %v526
  %v540 = vsel %vm531, %v526, %v539
  %v541 = vpack.c.bf16 %v540, %v540
  %542 = vst [vmem:[%s4] sm:$0x1] %v541
  // Predicated region
  $region18: #{encoder_forward.14} parent=0 // pred_check
    _
  $region19: #{encoder_forward.14} parent=0 // pred_check_branch
    %544 = sbr.rel (0) target = $region21
  $region20: #{encoder_forward.14} parent=0 // pred_region
    _
  $region21: #{encoder_forward.14} parent=0 // pred_fallthru
    _
  // Predicated region
  $region22: #{encoder_forward.14} parent=0 // pred_check
    _
  $region23: #{encoder_forward.14} parent=0 // pred_check_branch
    %546 = sbr.rel (0) target = $region25
  $region24: #{encoder_forward.14} parent=0 // pred_region
    _
  $region25: #{encoder_forward.14} parent=0 // pred_fallthru
    _

// kernel: encoder_forward.15
$region0: #{encoder_forward.15}
  #allocation0 [shape = 'u32[]', space=smem, size = 0x4, offset = 0x4, fixed_abs, tag = 'smem constant byte address 0x4 - core index']
  #allocation1 [shape = 'u32[144,128]{1,0:T(1,128)}', space=vmem, size = 0x12000, scoped, tag = 'internal scratch']
  %s0 = inlined_call_operand.vmem [shape: bf16[2,864], index: 0, kind: input, shape index: {}]
  %s1 = inlined_call_operand.vmem [shape: bf16[864,128], index: 1, kind: input, shape index: {}]
  %s2 = inlined_call_operand.vmem [shape: f32[1,128], index: 2, kind: input, shape index: {}]
  %s3 = inlined_call_operand.vmem [shape: f32[1,128], index: 3, kind: input, shape index: {}]
  %s4 = inlined_call_operand.vmem [shape: bf16[2,128], index: 4, kind: output, shape index: {}]
  %s5 = sld [smem:[#allocation0]]
  $region26: #{encoder_forward.15} parent=0
    _
  %s7 = ssub.s32 1, %s5
  %s8 = scalar_select 0, %s7, %s5
  // Predicated region
  $region2: #{encoder_forward.15} parent=0 // pred_check
    _
  $region3: #{encoder_forward.15} parent=0 // pred_check_branch
    %10 = sbr.rel (0) target = $region5
  $region4: #{encoder_forward.15} parent=0 // pred_region
    _
  $region5: #{encoder_forward.15} parent=0 // pred_fallthru
    _
  // Predicated region
  $region6: #{encoder_forward.15} parent=0 // pred_check
    _
  $region7: #{encoder_forward.15} parent=0 // pred_check_branch
    %12 = sbr.rel (0) target = $region9
  $region8: #{encoder_forward.15} parent=0 // pred_region
    _
  $region9: #{encoder_forward.15} parent=0 // pred_fallthru
    _
  // Predicated region
  $region10: #{encoder_forward.15} parent=0 // pred_check
    _
  $region11: #{encoder_forward.15} parent=0 // pred_check_branch
    %14 = sbr.rel (0) target = $region13
  $region12: #{encoder_forward.15} parent=0 // pred_region
    _
  $region13: #{encoder_forward.15} parent=0 // pred_fallthru
    _
  // Predicated region
  $region14: #{encoder_forward.15} parent=0 // pred_check
    _
  $region15: #{encoder_forward.15} parent=0 // pred_check_branch
    %16 = sbr.rel (0) target = $region17
  $region16: #{encoder_forward.15} parent=0 // pred_region
    _
  $region17: #{encoder_forward.15} parent=0 // pred_fallthru
    _
  %v18 = vld [vmem:[%s0] sm:$0x7f]
  %v19 = vld [vmem:[%s1] sm:$0xf]
  %v20 = vld [vmem:[%s1 + $0x4] sm:$0xf]
  %v21 = vld [vmem:[%s1 + $0x8] sm:$0xf]
  %v22 = vld [vmem:[%s1 + $0xc] sm:$0xf]
  %v23 = vld [vmem:[%s1 + $0x10] sm:$0xf]
  %v24 = vld [vmem:[%s1 + $0x14] sm:$0xf]
  %v25 = vld [vmem:[%s1 + $0x18] sm:$0xf]
  %v26 = vld [vmem:[%s1 + $0x1c] sm:$0xf]
  %v27 = vld [vmem:[%s1 + $0x20] sm:$0xf]
  %v28 = vld [vmem:[%s1 + $0x24] sm:$0xf]
  %v29 = vld [vmem:[%s1 + $0x28] sm:$0xf]
  %v30 = vld [vmem:[%s1 + $0x2c] sm:$0xf]
  %v31 = vld [vmem:[%s1 + $0x30] sm:$0xf]
  %v32 = vld [vmem:[%s1 + $0x34] sm:$0xf]
  %v33 = vld [vmem:[%s1 + $0x38] sm:$0xf]
  %v34 = vld [vmem:[%s1 + $0x3c] sm:$0xf]
  %v35 = vld [vmem:[%s1 + $0x40] sm:$0xf]
  %v36 = vld [vmem:[%s1 + $0x44] sm:$0xf]
  %v37 = vld [vmem:[%s1 + $0x48] sm:$0xf]
  %v38 = vld [vmem:[%s1 + $0x4c] sm:$0xf]
  %v39 = vld [vmem:[%s1 + $0x50] sm:$0xf]
  %v40 = vld [vmem:[%s1 + $0x54] sm:$0xf]
  %v41 = vld [vmem:[%s1 + $0x58] sm:$0xf]
  %v42 = vld [vmem:[%s1 + $0x5c] sm:$0xf]
  %v43 = vld [vmem:[%s1 + $0x60] sm:$0xf]
  %v44 = vld [vmem:[%s1 + $0x64] sm:$0xf]
  %v45 = vld [vmem:[%s1 + $0x68] sm:$0xf]
  %v46 = vld [vmem:[%s1 + $0x6c] sm:$0xf]
  %v47 = vld [vmem:[%s1 + $0x70] sm:$0xf]
  %v48 = vld [vmem:[%s1 + $0x74] sm:$0xf]
  %v49 = vld [vmem:[%s1 + $0x78] sm:$0xf]
  %v50 = vld [vmem:[%s1 + $0x7c] sm:$0xf]
  %v51 = vld [vmem:[%s1 + $0x80] sm:$0xf]
  %v52 = vld [vmem:[%s1 + $0x84] sm:$0xf]
  %v53 = vld [vmem:[%s1 + $0x88] sm:$0xf]
  %v54 = vld [vmem:[%s1 + $0x8c] sm:$0xf]
  %v55 = vld [vmem:[%s1 + $0x90] sm:$0xf]
  %v56 = vld [vmem:[%s1 + $0x94] sm:$0xf]
  %v57 = vld [vmem:[%s1 + $0x98] sm:$0xf]
  %v58 = vld [vmem:[%s1 + $0x9c] sm:$0xf]
  %v59 = vld [vmem:[%s1 + $0xa0] sm:$0xf]
  %v60 = vld [vmem:[%s1 + $0xa4] sm:$0xf]
  %v61 = vld [vmem:[%s1 + $0xa8] sm:$0xf]
  %v62 = vld [vmem:[%s1 + $0xac] sm:$0xf]
  %v63 = vld [vmem:[%s1 + $0xb0] sm:$0xf]
  %v64 = vld [vmem:[%s1 + $0xb4] sm:$0xf]
  %v65 = vld [vmem:[%s1 + $0xb8] sm:$0xf]
  %v66 = vld [vmem:[%s1 + $0xbc] sm:$0xf]
  %v67 = vld [vmem:[%s1 + $0xc0] sm:$0xf]
  %v68 = vld [vmem:[%s1 + $0xc4] sm:$0xf]
  %v69 = vld [vmem:[%s1 + $0xc8] sm:$0xf]
  %v70 = vld [vmem:[%s1 + $0xcc] sm:$0xf]
  %v71 = vld [vmem:[%s1 + $0xd0] sm:$0xf]
  %v72 = vld [vmem:[%s1 + $0xd4] sm:$0xf]
  %v73 = vld [vmem:[%s1 + $0xd8] sm:$0xf]
  %v74 = vld [vmem:[%s1 + $0xdc] sm:$0xf]
  %v75 = vld [vmem:[%s1 + $0xe0] sm:$0xf]
  %v76 = vld [vmem:[%s1 + $0xe4] sm:$0xf]
  %v77 = vld [vmem:[%s1 + $0xe8] sm:$0xf]
  %v78 = vld [vmem:[%s1 + $0xec] sm:$0xf]
  %v79 = vld [vmem:[%s1 + $0xf0] sm:$0xf]
  %v80 = vld [vmem:[%s1 + $0xf4] sm:$0xf]
  %v81 = vld [vmem:[%s1 + $0xf8] sm:$0xf]
  %v82 = vld [vmem:[%s1 + $0xfc] sm:$0xf]
  %v83 = vld [vmem:[%s1 + $0x100] sm:$0xf]
  %v84 = vld [vmem:[%s1 + $0x104] sm:$0xf]
  %v85 = vld [vmem:[%s1 + $0x108] sm:$0xf]
  %v86 = vld [vmem:[%s1 + $0x10c] sm:$0xf]
  %v87 = vld [vmem:[%s1 + $0x110] sm:$0xf]
  %v88 = vld [vmem:[%s1 + $0x114] sm:$0xf]
  %v89 = vld [vmem:[%s1 + $0x118] sm:$0xf]
  %v90 = vld [vmem:[%s1 + $0x11c] sm:$0xf]
  %v91 = vld [vmem:[%s1 + $0x120] sm:$0xf]
  %v92 = vld [vmem:[%s1 + $0x124] sm:$0xf]
  %v93 = vld [vmem:[%s1 + $0x128] sm:$0xf]
  %v94 = vld [vmem:[%s1 + $0x12c] sm:$0xf]
  %v95 = vld [vmem:[%s1 + $0x130] sm:$0xf]
  %v96 = vld [vmem:[%s1 + $0x134] sm:$0xf]
  %v97 = vld [vmem:[%s1 + $0x138] sm:$0xf]
  %v98 = vld [vmem:[%s1 + $0x13c] sm:$0xf]
  %v99 = vld [vmem:[%s1 + $0x140] sm:$0xf]
  %v100 = vld [vmem:[%s1 + $0x144] sm:$0xf]
  %v101 = vld [vmem:[%s1 + $0x148] sm:$0xf]
  %v102 = vld [vmem:[%s1 + $0x14c] sm:$0xf]
  %v103 = vld [vmem:[%s1 + $0x150] sm:$0xf]
  %v104 = vld [vmem:[%s1 + $0x154] sm:$0xf]
  %v105 = vld [vmem:[%s1 + $0x158] sm:$0xf]
  %v106 = vld [vmem:[%s1 + $0x15c] sm:$0xf]
  %v107 = vld [vmem:[%s1 + $0x160] sm:$0xf]
  %v108 = vld [vmem:[%s1 + $0x164] sm:$0xf]
  %v109 = vld [vmem:[%s1 + $0x168] sm:$0xf]
  %v110 = vld [vmem:[%s1 + $0x16c] sm:$0xf]
  %v111 = vld [vmem:[%s1 + $0x170] sm:$0xf]
  %v112 = vld [vmem:[%s1 + $0x174] sm:$0xf]
  %v113 = vld [vmem:[%s1 + $0x178] sm:$0xf]
  %v114 = vld [vmem:[%s1 + $0x17c] sm:$0xf]
  %v115 = vld [vmem:[%s1 + $0x180] sm:$0xf]
  %v116 = vld [vmem:[%s1 + $0x184] sm:$0xf]
  %v117 = vld [vmem:[%s1 + $0x188] sm:$0xf]
  %v118 = vld [vmem:[%s1 + $0x18c] sm:$0xf]
  %v119 = vld [vmem:[%s1 + $0x190] sm:$0xf]
  %v120 = vld [vmem:[%s1 + $0x194] sm:$0xf]
  %v121 = vld [vmem:[%s1 + $0x198] sm:$0xf]
  %v122 = vld [vmem:[%s1 + $0x19c] sm:$0xf]
  %v123 = vld [vmem:[%s1 + $0x1a0] sm:$0xf]
  %v124 = vld [vmem:[%s1 + $0x1a4] sm:$0xf]
  %v125 = vld [vmem:[%s1 + $0x1a8] sm:$0xf]
  %v126 = vld [vmem:[%s1 + $0x1ac] sm:$0xf]
  %v127 = vld [vmem:[%s2] sm:$0x1]
  %v129 = vlaneseq
  %v130 = vshrl.u32 %v129, 7
  %v131 = vsub.s32 0, %v130
  %v132 = vrot.slane %v127, %v131
  %v135 = vcombine.high %v18, %v18
  %v137 = vunpack.c.l.s4 1966171168
  %v138 = vunpack.c.0.s8 %v137
  %v139 = vlaneseq
  %v140 = vshrl.u32 %v139, 7
  %v141 = vsub.s32 %v138, %v140
  %v142 = vrot.slane %v18, %v141
  %v144 = vunpack.c.l.s4 1966171168
  %v145 = vunpack.c.0.s8 %v144
  %v146 = vlaneseq
  %v147 = vshrl.u32 %v146, 7
  %v148 = vsub.s32 %v145, %v147
  %v149 = vrot.slane %v135, %v148
  %v150 = vcombine.high %v142, %v142
  %v151 = vcombine.high %v149, %v149
  %v153 = vunpack.c.l.s4 1966171168
  %v154 = vunpack.c.0.s8 %v153
  %v155 = vlaneseq
  %v156 = vshrl.u32 %v155, 7
  %v157 = vsub.s32 %v154, %v156
  %v158 = vrot.slane %v142, %v157
  %v160 = vunpack.c.l.s4 1966171168
  %v161 = vunpack.c.0.s8 %v160
  %v162 = vlaneseq
  %v163 = vshrl.u32 %v162, 7
  %v164 = vsub.s32 %v161, %v163
  %v165 = vrot.slane %v149, %v164
  %v167 = vunpack.c.l.s4 1966171168
  %v168 = vunpack.c.0.s8 %v167
  %v169 = vlaneseq
  %v170 = vshrl.u32 %v169, 7
  %v171 = vsub.s32 %v168, %v170
  %v172 = vrot.slane %v150, %v171
  %v174 = vunpack.c.l.s4 1966171168
  %v175 = vunpack.c.0.s8 %v174
  %v176 = vlaneseq
  %v177 = vshrl.u32 %v176, 7
  %v178 = vsub.s32 %v175, %v177
  %v179 = vrot.slane %v151, %v178
  %v180 = vcombine.high %v158, %v158
  %v181 = vcombine.high %v165, %v165
  %v182 = vcombine.high %v172, %v172
  %v297 = vunpack.c.l.b16 %v19
  %v298 = vunpack.c.l.b16 %v20
  %v299 = vunpack.c.l.b16 %v21
  %v300 = vunpack.c.l.b16 %v22
  %v301 = vunpack.c.l.b16 %v23
  %v302 = vunpack.c.l.b16 %v24
  %v303 = vunpack.c.l.b16 %v25
  %v304 = vunpack.c.l.b16 %v26
  %v305 = vunpack.c.l.b16 %v27
  %v306 = vunpack.c.l.b16 %v28
  %v307 = vunpack.c.l.b16 %v29
  %v308 = vunpack.c.l.b16 %v30
  %v309 = vunpack.c.l.b16 %v31
  %v310 = vunpack.c.l.b16 %v32
  %v311 = vunpack.c.l.b16 %v33
  %v312 = vunpack.c.l.b16 %v34
  %v313 = vunpack.c.l.b16 %v35
  %v314 = vunpack.c.l.b16 %v36
  %v315 = vunpack.c.l.b16 %v37
  %v316 = vunpack.c.l.b16 %v38
  %v317 = vunpack.c.l.b16 %v39
  %v318 = vunpack.c.l.b16 %v40
  %v319 = vunpack.c.l.b16 %v41
  %v320 = vunpack.c.l.b16 %v42
  %v321 = vunpack.c.l.b16 %v43
  %v322 = vunpack.c.l.b16 %v44
  %v323 = vunpack.c.l.b16 %v45
  %v324 = vunpack.c.l.b16 %v46
  %v325 = vunpack.c.l.b16 %v47
  %v326 = vunpack.c.l.b16 %v48
  %v327 = vunpack.c.l.b16 %v49
  %v328 = vunpack.c.l.b16 %v50
  %v329 = vunpack.c.l.b16 %v51
  %v330 = vunpack.c.l.b16 %v52
  %v331 = vunpack.c.l.b16 %v53
  %v332 = vunpack.c.l.b16 %v54
  %v333 = vunpack.c.l.b16 %v55
  %v334 = vunpack.c.l.b16 %v56
  %v335 = vunpack.c.l.b16 %v57
  %v336 = vunpack.c.l.b16 %v58
  %v337 = vunpack.c.l.b16 %v59
  %v338 = vunpack.c.l.b16 %v60
  %v339 = vunpack.c.l.b16 %v61
  %v340 = vunpack.c.l.b16 %v62
  %v341 = vunpack.c.l.b16 %v63
  %v342 = vunpack.c.l.b16 %v64
  %v343 = vunpack.c.l.b16 %v65
  %v344 = vunpack.c.l.b16 %v66
  %v345 = vunpack.c.l.b16 %v67
  %v346 = vunpack.c.l.b16 %v68
  %v347 = vunpack.c.l.b16 %v69
  %v348 = vunpack.c.l.b16 %v70
  %v349 = vunpack.c.l.b16 %v71
  %v350 = vunpack.c.l.b16 %v72
  %v351 = vunpack.c.l.b16 %v73
  %v352 = vunpack.c.l.b16 %v74
  %v353 = vunpack.c.l.b16 %v75
  %v354 = vunpack.c.l.b16 %v76
  %v355 = vunpack.c.l.b16 %v77
  %v356 = vunpack.c.l.b16 %v78
  %v357 = vunpack.c.l.b16 %v79
  %v358 = vunpack.c.l.b16 %v80
  %v359 = vunpack.c.l.b16 %v81
  %v360 = vunpack.c.l.b16 %v82
  %v361 = vunpack.c.l.b16 %v83
  %v362 = vunpack.c.l.b16 %v84
  %v363 = vunpack.c.l.b16 %v85
  %v364 = vunpack.c.l.b16 %v86
  %v365 = vunpack.c.l.b16 %v87
  %v366 = vunpack.c.l.b16 %v88
  %v367 = vunpack.c.l.b16 %v89
  %v368 = vunpack.c.l.b16 %v90
  %v369 = vunpack.c.l.b16 %v91
  %v370 = vunpack.c.l.b16 %v92
  %v371 = vunpack.c.l.b16 %v93
  %v372 = vunpack.c.l.b16 %v94
  %v373 = vunpack.c.l.b16 %v95
  %v374 = vunpack.c.l.b16 %v96
  %v375 = vunpack.c.l.b16 %v97
  %v376 = vunpack.c.l.b16 %v98
  %v377 = vunpack.c.l.b16 %v99
  %v378 = vunpack.c.l.b16 %v100
  %v379 = vunpack.c.l.b16 %v101
  %v380 = vunpack.c.l.b16 %v102
  %v381 = vunpack.c.l.b16 %v103
  %v382 = vunpack.c.l.b16 %v104
  %v383 = vunpack.c.l.b16 %v105
  %v384 = vunpack.c.l.b16 %v106
  %v385 = vunpack.c.l.b16 %v107
  %v386 = vunpack.c.l.b16 %v108
  %v387 = vunpack.c.l.b16 %v109
  %v388 = vunpack.c.l.b16 %v110
  %v389 = vunpack.c.l.b16 %v111
  %v390 = vunpack.c.l.b16 %v112
  %v391 = vunpack.c.l.b16 %v113
  %v392 = vunpack.c.l.b16 %v114
  %v393 = vunpack.c.l.b16 %v115
  %v394 = vunpack.c.l.b16 %v116
  %v395 = vunpack.c.l.b16 %v117
  %v396 = vunpack.c.l.b16 %v118
  %v397 = vunpack.c.l.b16 %v119
  %v398 = vunpack.c.l.b16 %v120
  %v399 = vunpack.c.l.b16 %v121
  %v400 = vunpack.c.l.b16 %v122
  %v401 = vunpack.c.l.b16 %v123
  %v402 = vunpack.c.l.b16 %v124
  %v403 = vunpack.c.l.b16 %v125
  %v404 = vunpack.c.l.b16 %v126
  %v405 = vpack.c.b16 %v298, %v297
  %v406 = vpack.c.b16 %v300, %v299
  %v407 = vpack.c.b16 %v302, %v301
  %v408 = vpack.c.b16 %v304, %v303
  %v409 = vpack.c.b16 %v306, %v305
  %v410 = vpack.c.b16 %v308, %v307
  %v411 = vpack.c.b16 %v310, %v309
  %v412 = vpack.c.b16 %v312, %v311
  %v413 = vpack.c.b16 %v314, %v313
  %v414 = vpack.c.b16 %v316, %v315
  %v415 = vpack.c.b16 %v318, %v317
  %v416 = vpack.c.b16 %v320, %v319
  %v417 = vpack.c.b16 %v322, %v321
  %v418 = vpack.c.b16 %v324, %v323
  %v419 = vpack.c.b16 %v326, %v325
  %v420 = vpack.c.b16 %v328, %v327
  %v421 = vpack.c.b16 %v330, %v329
  %v422 = vpack.c.b16 %v332, %v331
  %v423 = vpack.c.b16 %v334, %v333
  %v424 = vpack.c.b16 %v336, %v335
  %v425 = vpack.c.b16 %v338, %v337
  %v426 = vpack.c.b16 %v340, %v339
  %v427 = vpack.c.b16 %v342, %v341
  %v428 = vpack.c.b16 %v344, %v343
  %v429 = vpack.c.b16 %v346, %v345
  %v430 = vpack.c.b16 %v348, %v347
  %v431 = vpack.c.b16 %v350, %v349
  %v432 = vpack.c.b16 %v352, %v351
  %v433 = vpack.c.b16 %v354, %v353
  %v434 = vpack.c.b16 %v356, %v355
  %v435 = vpack.c.b16 %v358, %v357
  %v436 = vpack.c.b16 %v360, %v359
  %v437 = vpack.c.b16 %v362, %v361
  %v438 = vpack.c.b16 %v364, %v363
  %v439 = vpack.c.b16 %v366, %v365
  %v440 = vpack.c.b16 %v368, %v367
  %v441 = vpack.c.b16 %v370, %v369
  %v442 = vpack.c.b16 %v372, %v371
  %v443 = vpack.c.b16 %v374, %v373
  %v444 = vpack.c.b16 %v376, %v375
  %v445 = vpack.c.b16 %v378, %v377
  %v446 = vpack.c.b16 %v380, %v379
  %v447 = vpack.c.b16 %v382, %v381
  %v448 = vpack.c.b16 %v384, %v383
  %v449 = vpack.c.b16 %v386, %v385
  %v450 = vpack.c.b16 %v388, %v387
  %v451 = vpack.c.b16 %v390, %v389
  %v452 = vpack.c.b16 %v392, %v391
  %v453 = vpack.c.b16 %v394, %v393
  %v454 = vpack.c.b16 %v396, %v395
  %v455 = vpack.c.b16 %v398, %v397
  %v456 = vpack.c.b16 %v400, %v399
  %v457 = vpack.c.b16 %v402, %v401
  %v458 = vpack.c.b16 %v404, %v403
  %vm513 = vcmask 785408
  %v515 = vsel %vm513, %v181, 0
  %517 = vmatprep.subr.bf16.mxu0 0
  %518 = vmatpush1.bf16.msra.mxu0 %v412
  %519 = vmatprep.subr.bf16.mxu0 0
  %520 = vmatpush1.bf16.msra.mxu0 %v411
  %521 = vmatprep.subr.bf16.mxu0 0
  %522 = vmatpush1.bf16.msra.mxu0 %v410
  %523 = vmatprep.subr.bf16.mxu0 0
  %524 = vmatpush1.bf16.msra.mxu0 %v409
  %525 = vmatprep.subr.bf16.mxu0 0
  %526 = vmatpush1.bf16.msra.mxu0 %v408
  %527 = vmatprep.subr.bf16.mxu0 0
  %528 = vmatpush1.bf16.msra.mxu0 %v407
  %529 = vmatprep.subr.bf16.mxu0 0
  %530 = vmatpush1.bf16.msra.mxu0 %v406
  %531 = vmatprep.subr.bf16.mxu0 0
  %532 = vmatpush1.bf16.msra.mxu0 %v405
  %533 = vmatprep.subr.bf16.mxu0 0
  %534 = vmatpush2.bf16.msra.mxu0 %v420
  %535 = vmatprep.subr.bf16.mxu0 0
  %536 = vmatpush2.bf16.msra.mxu0 %v419
  %537 = vmatprep.subr.bf16.mxu0 0
  %538 = vmatpush2.bf16.msra.mxu0 %v418
  %539 = vmatprep.subr.bf16.mxu0 0
  %540 = vmatpush2.bf16.msra.mxu0 %v417
  %541 = vmatprep.subr.bf16.mxu0 0
  %542 = vmatpush2.bf16.msra.mxu0 %v416
  %543 = vmatprep.subr.bf16.mxu0 0
  %544 = vmatpush2.bf16.msra.mxu0 %v415
  %545 = vmatprep.subr.bf16.mxu0 0
  %546 = vmatpush2.bf16.msra.mxu0 %v414
  %547 = vmatprep.subr.bf16.mxu0 0
  %548 = vmatpush2.bf16.msra.mxu0 %v413
  %549 = vmatprep.mubr.bf16.mxu0 %v172
  %550 = vmatmul.mubr.bf16.gmra.mxu0 %v158
  %v551 = vpop.f32.mrf.mxu0
  %v552 = vadd.f32 %v132, %v551
  %v553 = vpop.f32.mrf.mxu0
  %v554 = vpop.f32.mrf.mxu0
  %v555 = vpop.f32.mrf.mxu0
  %556 = vdwg.mxu0
  %557 = vmatprep.subr.bf16.mxu0 0
  %558 = vmatpush1.bf16.msra.mxu0 %v428
  %559 = vmatprep.subr.bf16.mxu0 0
  %560 = vmatpush1.bf16.msra.mxu0 %v427
  %561 = vmatprep.subr.bf16.mxu0 0
  %562 = vmatpush1.bf16.msra.mxu0 %v426
  %563 = vmatprep.subr.bf16.mxu0 0
  %564 = vmatpush1.bf16.msra.mxu0 %v425
  %565 = vmatprep.subr.bf16.mxu0 0
  %566 = vmatpush1.bf16.msra.mxu0 %v424
  %567 = vmatprep.subr.bf16.mxu0 0
  %568 = vmatpush1.bf16.msra.mxu0 %v423
  %569 = vmatprep.subr.bf16.mxu0 0
  %570 = vmatpush1.bf16.msra.mxu0 %v422
  %571 = vmatprep.subr.bf16.mxu0 0
  %572 = vmatpush1.bf16.msra.mxu0 %v421
  %573 = vmatprep.subr.bf16.mxu0 0
  %574 = vmatpush2.bf16.msra.mxu0 %v436
  %575 = vmatprep.subr.bf16.mxu0 0
  %576 = vmatpush2.bf16.msra.mxu0 %v435
  %577 = vmatprep.subr.bf16.mxu0 0
  %578 = vmatpush2.bf16.msra.mxu0 %v434
  %579 = vmatprep.subr.bf16.mxu0 0
  %580 = vmatpush2.bf16.msra.mxu0 %v433
  %581 = vmatprep.subr.bf16.mxu0 0
  %582 = vmatpush2.bf16.msra.mxu0 %v432
  %583 = vmatprep.subr.bf16.mxu0 0
  %584 = vmatpush2.bf16.msra.mxu0 %v431
  %585 = vmatprep.subr.bf16.mxu0 0
  %586 = vmatpush2.bf16.msra.mxu0 %v430
  %587 = vmatprep.subr.bf16.mxu0 0
  %588 = vmatpush2.bf16.msra.mxu0 %v429
  %589 = vmatprep.mubr.bf16.mxu0 %v182
  %590 = vmatmul.mubr.bf16.gmra.mxu0 %v180
  %v591 = vpop.f32.mrf.mxu0
  %v592 = vadd.f32 %v552, %v591
  %v593 = vpop.f32.mrf.mxu0
  %v594 = vpop.f32.mrf.mxu0
  %v595 = vpop.f32.mrf.mxu0
  %596 = vdwg.mxu0
  %597 = vmatprep.subr.bf16.mxu0 0
  %598 = vmatpush1.bf16.msra.mxu0 %v444
  %599 = vmatprep.subr.bf16.mxu0 0
  %600 = vmatpush1.bf16.msra.mxu0 %v443
  %601 = vmatprep.subr.bf16.mxu0 0
  %602 = vmatpush1.bf16.msra.mxu0 %v442
  %603 = vmatprep.subr.bf16.mxu0 0
  %604 = vmatpush1.bf16.msra.mxu0 %v441
  %605 = vmatprep.subr.bf16.mxu0 0
  %606 = vmatpush1.bf16.msra.mxu0 %v440
  %607 = vmatprep.subr.bf16.mxu0 0
  %608 = vmatpush1.bf16.msra.mxu0 %v439
  %609 = vmatprep.subr.bf16.mxu0 0
  %610 = vmatpush1.bf16.msra.mxu0 %v438
  %611 = vmatprep.subr.bf16.mxu0 0
  %612 = vmatpush1.bf16.msra.mxu0 %v437
  %613 = vmatprep.subr.bf16.mxu0 0
  %614 = vmatpush2.bf16.msra.mxu0 %v452
  %615 = vmatprep.subr.bf16.mxu0 0
  %616 = vmatpush2.bf16.msra.mxu0 %v451
  %617 = vmatprep.subr.bf16.mxu0 0
  %618 = vmatpush2.bf16.msra.mxu0 %v450
  %619 = vmatprep.subr.bf16.mxu0 0
  %620 = vmatpush2.bf16.msra.mxu0 %v449
  %621 = vmatprep.subr.bf16.mxu0 0
  %622 = vmatpush2.bf16.msra.mxu0 %v448
  %623 = vmatprep.subr.bf16.mxu0 0
  %624 = vmatpush2.bf16.msra.mxu0 %v447
  %625 = vmatprep.subr.bf16.mxu0 0
  %626 = vmatpush2.bf16.msra.mxu0 %v446
  %627 = vmatprep.subr.bf16.mxu0 0
  %628 = vmatpush2.bf16.msra.mxu0 %v445
  %629 = vmatprep.mubr.bf16.mxu0 %v179
  %630 = vmatmul.mubr.bf16.gmra.mxu0 %v165
  %v631 = vpop.f32.mrf.mxu0
  %v632 = vadd.f32 %v592, %v631
  %v633 = vpop.f32.mrf.mxu0
  %v634 = vpop.f32.mrf.mxu0
  %v635 = vpop.f32.mrf.mxu0
  %636 = vdwg.mxu0
  %637 = vmatprep.subr.bf16.mxu0 0
  %638 = vmatpush1.bf16.msra.mxu0 0
  %639 = vmatprep.subr.bf16.mxu0 0
  %640 = vmatpush1.bf16.msra.mxu0 0
  %641 = vmatprep.subr.bf16.mxu0 0
  %642 = vmatpush1.bf16.msra.mxu0 %v458
  %643 = vmatprep.subr.bf16.mxu0 0
  %644 = vmatpush1.bf16.msra.mxu0 %v457
  %645 = vmatprep.subr.bf16.mxu0 0
  %646 = vmatpush1.bf16.msra.mxu0 %v456
  %647 = vmatprep.subr.bf16.mxu0 0
  %648 = vmatpush1.bf16.msra.mxu0 %v455
  %649 = vmatprep.subr.bf16.mxu0 0
  %650 = vmatpush1.bf16.msra.mxu0 %v454
  %651 = vmatprep.subr.bf16.mxu0 0
  %652 = vmatpush1.bf16.msra.mxu0 %v453
  %653 = vmatprep.subr.bf16.mxu0 0
  %654 = vmatpush2.bf16.msra.mxu0 0
  %655 = vmatprep.subr.bf16.mxu0 0
  %656 = vmatpush2.bf16.msra.mxu0 0
  %657 = vmatprep.subr.bf16.mxu0 0
  %658 = vmatpush2.bf16.msra.mxu0 0
  %659 = vmatprep.subr.bf16.mxu0 0
  %660 = vmatpush2.bf16.msra.mxu0 0
  %661 = vmatprep.subr.bf16.mxu0 0
  %662 = vmatpush2.bf16.msra.mxu0 0
  %663 = vmatprep.subr.bf16.mxu0 0
  %664 = vmatpush2.bf16.msra.mxu0 0
  %665 = vmatprep.subr.bf16.mxu0 0
  %666 = vmatpush2.bf16.msra.mxu0 0
  %667 = vmatprep.subr.bf16.mxu0 0
  %668 = vmatpush2.bf16.msra.mxu0 0
  %669 = vmatprep.mubr.bf16.mxu0 0
  %670 = vmatmul.mubr.bf16.gmra.mxu0 %v515
  %v671 = vpop.f32.mrf.mxu0
  %v672 = vadd.f32 %v632, %v671
  %v673 = vpop.f32.mrf.mxu0
  %v674 = vpop.f32.mrf.mxu0
  %v675 = vpop.f32.mrf.mxu0
  %676 = vdwg.mxu0
  %vm677 = vcmp.ge.f32.partialorder %v672, 0.0
  %v678 = vld [vmem:[%s3] sm:$0x1]
  %v680 = vlaneseq
  %v681 = vshrl.u32 %v680, 7
  %v682 = vsub.s32 0, %v681
  %v683 = vrot.slane %v678, %v682
  %v685 = vmul.f32 %v683, %v672
  %v686 = vsel %vm677, %v672, %v685
  %v687 = vpack.c.bf16 %v686, %v686
  %688 = vst [vmem:[%s4] sm:$0x1] %v687
  // Predicated region
  $region18: #{encoder_forward.15} parent=0 // pred_check
    _
  $region19: #{encoder_forward.15} parent=0 // pred_check_branch
    %690 = sbr.rel (0) target = $region21
  $region20: #{encoder_forward.15} parent=0 // pred_region
    _
  $region21: #{encoder_forward.15} parent=0 // pred_fallthru
    _
  // Predicated region
  $region22: #{encoder_forward.15} parent=0 // pred_check
    _
  $region23: #{encoder_forward.15} parent=0 // pred_check_branch
    %692 = sbr.rel (0) target = $region25
  $region24: #{encoder_forward.15} parent=0 // pred_region
    _
  $region25: #{encoder_forward.15} parent=0 // pred_fallthru
    _

</llo_original>
